<compile_context>
chip_gen: v6e
topology: v6e:2x2x1
jax: 0.10.0
libtpu: 0.0.40
codegen_flags: <defaults>
</compile_context>

<pallas_src>
import jax
import jax.numpy as jnp
from jax.experimental import pallas as pl
from jax.experimental.pallas import tpu as pltpu

KSIZE = 7
PAD = 3
C_CHUNK = 8  # channels reduced per step of the (unrolled) channel loop


def _spatial_attention_kernel(x_ref, wb_ref, o_ref, pad_ref, col_ref):
    # x_ref  : (TN, C, H, W)          VMEM input block
    # wb_ref : (2*49 + 1,) f32        SMEM taps [ci*49 + di*7 + dj], bias last
    # o_ref  : (TN, H, W)             VMEM output block
    # pad_ref: (2, TN, H+6, W+6) f32  VMEM scratch: reflect-padded avg/max maps
    # col_ref: (2, 7, TN, H+6, W) f32 VMEM scratch: column(lane)-shifted copies
    tn, c, h, w = x_ref.shape

    # ---- channel mean & max, chunked over C (bounded vreg live set) --------
    cc0 = min(C_CHUNK, c)
    first = x_ref[:, 0:cc0].astype(jnp.float32)              # (tn, cc0, h, w)
    x_sum = jnp.sum(first, axis=1)                           # (tn, h, w) f32
    x_max = jnp.max(first, axis=1)                           # (tn, h, w) f32
    for c0 in range(cc0, c, C_CHUNK):
        cc = min(C_CHUNK, c - c0)
        chunk = x_ref[:, c0:c0 + cc].astype(jnp.float32)
        x_sum = x_sum + jnp.sum(chunk, axis=1)
        x_max = jnp.maximum(x_max, jnp.max(chunk, axis=1))
    x_avg = x_sum * (1.0 / c)

    # ---- reflect pad (PyTorch 'reflect') into VMEM scratch ------------------
    for ci, red in ((0, x_avg), (1, x_max)):
        # centre
        pad_ref[ci, :, PAD:PAD + h, PAD:PAD + w] = red
        # rows (vertical reflection); sources are already-written centre rows
        for k in range(1, PAD + 1):
            pad_ref[ci, :, PAD - k:PAD - k + 1, PAD:PAD + w] = \
                pad_ref[ci, :, PAD + k:PAD + k + 1, PAD:PAD + w]
            pad_ref[ci, :, PAD + h - 1 + k:PAD + h + k, PAD:PAD + w] = \
                pad_ref[ci, :, PAD + h - 1 - k:PAD + h - k, PAD:PAD + w]
        # columns (horizontal reflection) over all padded rows -> corners ok
        for k in range(1, PAD + 1):
            pad_ref[ci, :, :, PAD - k:PAD - k + 1] = \
                pad_ref[ci, :, :, PAD + k:PAD + k + 1]
            pad_ref[ci, :, :, PAD + w - 1 + k:PAD + w + k] = \
                pad_ref[ci, :, :, PAD + w - 1 - k:PAD + w - k]

    # ---- hoist the 14 lane (column) realignments once -----------------------
    for ci in range(2):
        for dj in range(KSIZE):
            col_ref[ci, dj] = pad_ref[ci, :, :, dj:dj + w]

    # ---- 7x7 conv: 98 scalar-broadcast MACs, 4 independent accumulators -----
    accs = [jnp.zeros((tn, h, w), jnp.float32) for _ in range(4)]
    for ci in range(2):
        for dj in range(KSIZE):
            a = ci * 2 + (dj % 2)
            for di in range(KSIZE):
                wk = wb_ref[ci * KSIZE * KSIZE + di * KSIZE + dj]
                # pure sublane-offset load from the pre-shifted scratch
                accs[a] = accs[a] + wk * col_ref[ci, dj, :, di:di + h, :]
    out = (accs[0] + accs[1]) + (accs[2] + accs[3]) + wb_ref[2 * KSIZE * KSIZE]
    o_ref[...] = out.astype(o_ref.dtype)


def _round_up(a, b):
    return -(-a // b) * b


def _pick_tn(n, c, h, w, itemsize):
    """Samples per grid step from a VMEM budget (accounts for (8,128) padding)."""
    hp, wp = h + 2 * PAD, w + 2 * PAD
    h8, hp8 = _round_up(h, 8), _round_up(hp, 8)
    wl, wpl = _round_up(w, 128), _round_up(wp, 128)
    per_sample = (
        2 * c * h8 * wl * itemsize          # input block, double-buffered
        + 2 * hp8 * wpl * 4                 # pad_ref scratch
        + 2 * KSIZE * hp8 * wl * 4          # col_ref scratch
        + 10 * h8 * wl * 4                  # live accumulators / reduction slabs
    )
    budget = 16 * 1024 * 1024               # conservative: fits v5e / v6e / v7x
    tn = max(1, int(budget // per_sample))
    if n >= 2:
        tn = min(tn, n // 2)                # >= 2 grid steps -> v7x uses both TCs
    tn = max(1, min(tn, n))
    while n % tn:                           # must divide N
        tn -= 1
    return tn


def spatial_attention(x, weight, bias, *, tn=None, out_dtype=None):
    """x: (N, C, H, W); weight: (1, 2, 7, 7); bias: (1,). Returns (N, 1, H, W)."""
    N, C, H, W = x.shape
    assert weight.shape == (1, 2, KSIZE, KSIZE) and bias.shape == (1,)
    assert H > PAD and W > PAD, "reflect padding needs spatial dims > pad"
    if out_dtype is None:
        out_dtype = x.dtype
    if tn is None:
        tn = _pick_tn(N, C, H, W, x.dtype.itemsize)

    # Flatten conv weights + bias into one small SMEM scalar table (f32).
    wb = jnp.concatenate([
        jnp.asarray(weight, jnp.float32).reshape(-1),
        jnp.asarray(bias, jnp.float32).reshape(-1),
    ])

    HP, WP = H + 2 * PAD, W + 2 * PAD
    out = pl.pallas_call(
        _spatial_attention_kernel,
        out_shape=jax.ShapeDtypeStruct((N, H, W), out_dtype),
        grid_spec=pltpu.PrefetchScalarGridSpec(
            num_scalar_prefetch=0,
            grid=(N // tn,),
            in_specs=[
                pl.BlockSpec((tn, C, H, W), lambda i: (i, 0, 0, 0)),
                pl.BlockSpec(memory_space=pltpu.MemorySpace.SMEM),
            ],
            out_specs=pl.BlockSpec((tn, H, W), lambda i: (i, 0, 0)),
            scratch_shapes=[
                pltpu.VMEM((2, tn, HP, WP), jnp.float32),
                pltpu.VMEM((2, KSIZE, tn, HP, W), jnp.float32),
            ],
        ),
        compiler_params=pltpu.CompilerParams(
            dimension_semantics=("parallel",),
            vmem_limit_bytes=32 * 1024 * 1024,
        ),
    )(x, wb)

    return out.reshape(N, 1, H, W)


def spatial_attention_ref(x, weight, bias):
    """Pure-JAX reference (explicit taps, deterministic f32 math)."""
    N, _, H, W = x.shape
    xf = x.astype(jnp.float32)
    x_avg = jnp.mean(xf, axis=1, keepdims=True)
    x_max = jnp.max(xf, axis=1, keepdims=True)
    x2 = jnp.concatenate([x_avg, x_max], axis=1)              # (N, 2, H, W)
    x2p = jnp.pad(x2, ((0, 0), (0, 0), (PAD, PAD), (PAD, PAD)), mode="reflect")
    out = jnp.zeros((N, 1, H, W), jnp.float32) + bias.reshape(1, 1, 1, 1)
    for c in range(2):
        for di in range(KSIZE):
            for dj in range(KSIZE):
                out = out + weight[0, c, di, dj] * x2p[:, c:c + 1, di:di + H, dj:dj + W]
    return out


if __name__ == "__main__":
    key = jax.random.PRNGKey(0)
    kx, kw, kb = jax.random.split(key, 3)

    weight = jax.random.normal(kw, (1, 2, KSIZE, KSIZE), dtype=jnp.float32) * 0.1
    bias = jax.random.normal(kb, (1,), dtype=jnp.float32) * 0.1

    # (N, C, H, W): base case from the spec + one that exercises tn=2 and the
    # chunked channel reduction (C > C_CHUNK).
    cases = [(2, 4, 16, 16), (4, 12, 16, 16)]
    for (N, C, H, W) in cases:
        kx, sub = jax.random.split(kx)
        x = jax.random.normal(sub, (N, C, H, W), dtype=jnp.float32)

        out = jax.block_until_ready(spatial_attention(x, weight, bias))
        ref = spatial_attention_ref(x, weight, bias)

        assert out.shape == (N, 1, H, W)
        err = float(jnp.max(jnp.abs(out.astype(jnp.float32) - ref)))
        assert err < 1e-4, ((N, C, H, W), err)

    print("KERNEL_OK")
</pallas_src>

<mosaic_0001>
module attributes {stable_mosaic.version = 11 : i64} {
  func.func @_spatial_attention_kernel(%arg0: i32, %arg1: memref<1x4x16x16xf32, #tpu.memory_space<vmem>>, %arg2: memref<99xf32, #tpu.memory_space<smem>>, %arg3: memref<1x16x16xf32, #tpu.memory_space<vmem>>, %arg4: memref<2x1x22x22xf32, #tpu.memory_space<vmem>>, %arg5: memref<2x7x1x22x16xf32, #tpu.memory_space<vmem>>) attributes {dimension_semantics = [#tpu.dimension_semantics<parallel>], iteration_bounds = array<i64: 2>, scalar_prefetch = 0 : i64, scratch_operands = 2 : i64, tpu.core_type = #tpu.core_type<tc>, window_params = [{transform_indices = @transform_0, window_bounds = array<i64: 1, 4, 16, 16>}, {transform_indices = @transform_1, window_bounds = array<i64: 99>}, {transform_indices = @transform_2, window_bounds = array<i64: 1, 16, 16>}]} {
    %c0 = arith.constant 0 : index
    %c0_0 = arith.constant 0 : index
    %c0_1 = arith.constant 0 : index
    %c0_2 = arith.constant 0 : index
    %0 = vector.load %arg1[%c0, %c0_0, %c0_1, %c0_2] : memref<1x4x16x16xf32, #tpu.memory_space<vmem>>, vector<1x4x16x16xf32>
    %cst = arith.constant dense<0.000000e+00> : vector<1x16x16xf32>
    %1 = vector.multi_reduction <add>, %0, %cst [1] : vector<1x4x16x16xf32> to vector<1x16x16xf32>
    %cst_3 = arith.constant dense<0xFF800000> : vector<1x16x16xf32>
    %2 = vector.multi_reduction <maximumf>, %0, %cst_3 [1] : vector<1x4x16x16xf32> to vector<1x16x16xf32>
    %cst_4 = arith.constant 2.500000e-01 : f32
    %3 = vector.broadcast %cst_4 : f32 to vector<1x16x16xf32>
    %4 = arith.mulf %1, %3 : vector<1x16x16xf32>
    %c0_5 = arith.constant 0 : index
    %c0_6 = arith.constant 0 : index
    %c3 = arith.constant 3 : index
    %c3_7 = arith.constant 3 : index
    %5 = vector.load %arg4[%c0_5, %c0_6, %c3, %c3_7] : memref<2x1x22x22xf32, #tpu.memory_space<vmem>>, vector<1x1x16x16xf32>
    %6 = vector.shape_cast %5 : vector<1x1x16x16xf32> to vector<1x16x16xf32>
    %7 = vector.shape_cast %4 : vector<1x16x16xf32> to vector<1x1x16x16xf32>
    tpu.vector_store %arg4[%c0_5, %c0_6, %c3, %c3_7], %7 {strides = array<i32>} : memref<2x1x22x22xf32, #tpu.memory_space<vmem>>, vector<1x1x16x16xf32>,
    %c0_8 = arith.constant 0 : index
    %c0_9 = arith.constant 0 : index
    %c4 = arith.constant 4 : index
    %c3_10 = arith.constant 3 : index
    %8 = vector.load %arg4[%c0_8, %c0_9, %c4, %c3_10] : memref<2x1x22x22xf32, #tpu.memory_space<vmem>>, vector<1x1x1x16xf32>
    %9 = vector.shape_cast %8 : vector<1x1x1x16xf32> to vector<1x1x16xf32>
    %c0_11 = arith.constant 0 : index
    %c0_12 = arith.constant 0 : index
    %c2 = arith.constant 2 : index
    %c3_13 = arith.constant 3 : index
    %10 = vector.load %arg4[%c0_11, %c0_12, %c2, %c3_13] : memref<2x1x22x22xf32, #tpu.memory_space<vmem>>, vector<1x1x1x16xf32>
    %11 = vector.shape_cast %10 : vector<1x1x1x16xf32> to vector<1x1x16xf32>
    %12 = vector.shape_cast %9 : vector<1x1x16xf32> to vector<1x1x1x16xf32>
    tpu.vector_store %arg4[%c0_11, %c0_12, %c2, %c3_13], %12 {strides = array<i32>} : memref<2x1x22x22xf32, #tpu.memory_space<vmem>>, vector<1x1x1x16xf32>,
    %c0_14 = arith.constant 0 : index
    %c0_15 = arith.constant 0 : index
    %c17 = arith.constant 17 : index
    %c3_16 = arith.constant 3 : index
    %13 = vector.load %arg4[%c0_14, %c0_15, %c17, %c3_16] : memref<2x1x22x22xf32, #tpu.memory_space<vmem>>, vector<1x1x1x16xf32>
    %14 = vector.shape_cast %13 : vector<1x1x1x16xf32> to vector<1x1x16xf32>
    %c0_17 = arith.constant 0 : index
    %c0_18 = arith.constant 0 : index
    %c19 = arith.constant 19 : index
    %c3_19 = arith.constant 3 : index
    %15 = vector.load %arg4[%c0_17, %c0_18, %c19, %c3_19] : memref<2x1x22x22xf32, #tpu.memory_space<vmem>>, vector<1x1x1x16xf32>
    %16 = vector.shape_cast %15 : vector<1x1x1x16xf32> to vector<1x1x16xf32>
    %17 = vector.shape_cast %14 : vector<1x1x16xf32> to vector<1x1x1x16xf32>
    tpu.vector_store %arg4[%c0_17, %c0_18, %c19, %c3_19], %17 {strides = array<i32>} : memref<2x1x22x22xf32, #tpu.memory_space<vmem>>, vector<1x1x1x16xf32>,
    %c0_20 = arith.constant 0 : index
    %c0_21 = arith.constant 0 : index
    %c5 = arith.constant 5 : index
    %c3_22 = arith.constant 3 : index
    %18 = vector.load %arg4[%c0_20, %c0_21, %c5, %c3_22] : memref<2x1x22x22xf32, #tpu.memory_space<vmem>>, vector<1x1x1x16xf32>
    %19 = vector.shape_cast %18 : vector<1x1x1x16xf32> to vector<1x1x16xf32>
    %c0_23 = arith.constant 0 : index
    %c0_24 = arith.constant 0 : index
    %c1 = arith.constant 1 : index
    %c3_25 = arith.constant 3 : index
    %20 = vector.load %arg4[%c0_23, %c0_24, %c1, %c3_25] : memref<2x1x22x22xf32, #tpu.memory_space<vmem>>, vector<1x1x1x16xf32>
    %21 = vector.shape_cast %20 : vector<1x1x1x16xf32> to vector<1x1x16xf32>
    %22 = vector.shape_cast %19 : vector<1x1x16xf32> to vector<1x1x1x16xf32>
    tpu.vector_store %arg4[%c0_23, %c0_24, %c1, %c3_25], %22 {strides = array<i32>} : memref<2x1x22x22xf32, #tpu.memory_space<vmem>>, vector<1x1x1x16xf32>,
    %c0_26 = arith.constant 0 : index
    %c0_27 = arith.constant 0 : index
    %c16 = arith.constant 16 : index
    %c3_28 = arith.constant 3 : index
    %23 = vector.load %arg4[%c0_26, %c0_27, %c16, %c3_28] : memref<2x1x22x22xf32, #tpu.memory_space<vmem>>, vector<1x1x1x16xf32>
    %24 = vector.shape_cast %23 : vector<1x1x1x16xf32> to vector<1x1x16xf32>
    %c0_29 = arith.constant 0 : index
    %c0_30 = arith.constant 0 : index
    %c20 = arith.constant 20 : index
    %c3_31 = arith.constant 3 : index
    %25 = vector.load %arg4[%c0_29, %c0_30, %c20, %c3_31] : memref<2x1x22x22xf32, #tpu.memory_space<vmem>>, vector<1x1x1x16xf32>
    %26 = vector.shape_cast %25 : vector<1x1x1x16xf32> to vector<1x1x16xf32>
    %27 = vector.shape_cast %24 : vector<1x1x16xf32> to vector<1x1x1x16xf32>
    tpu.vector_store %arg4[%c0_29, %c0_30, %c20, %c3_31], %27 {strides = array<i32>} : memref<2x1x22x22xf32, #tpu.memory_space<vmem>>, vector<1x1x1x16xf32>,
    %c0_32 = arith.constant 0 : index
    %c0_33 = arith.constant 0 : index
    %c6 = arith.constant 6 : index
    %c3_34 = arith.constant 3 : index
    %28 = vector.load %arg4[%c0_32, %c0_33, %c6, %c3_34] : memref<2x1x22x22xf32, #tpu.memory_space<vmem>>, vector<1x1x1x16xf32>
    %29 = vector.shape_cast %28 : vector<1x1x1x16xf32> to vector<1x1x16xf32>
    %c0_35 = arith.constant 0 : index
    %c0_36 = arith.constant 0 : index
    %c0_37 = arith.constant 0 : index
    %c3_38 = arith.constant 3 : index
    %30 = vector.load %arg4[%c0_35, %c0_36, %c0_37, %c3_38] : memref<2x1x22x22xf32, #tpu.memory_space<vmem>>, vector<1x1x1x16xf32>
    %31 = vector.shape_cast %30 : vector<1x1x1x16xf32> to vector<1x1x16xf32>
    %32 = vector.shape_cast %29 : vector<1x1x16xf32> to vector<1x1x1x16xf32>
    tpu.vector_store %arg4[%c0_35, %c0_36, %c0_37, %c3_38], %32 {strides = array<i32>} : memref<2x1x22x22xf32, #tpu.memory_space<vmem>>, vector<1x1x1x16xf32>,
    %c0_39 = arith.constant 0 : index
    %c0_40 = arith.constant 0 : index
    %c15 = arith.constant 15 : index
    %c3_41 = arith.constant 3 : index
    %33 = vector.load %arg4[%c0_39, %c0_40, %c15, %c3_41] : memref<2x1x22x22xf32, #tpu.memory_space<vmem>>, vector<1x1x1x16xf32>
    %34 = vector.shape_cast %33 : vector<1x1x1x16xf32> to vector<1x1x16xf32>
    %c0_42 = arith.constant 0 : index
    %c0_43 = arith.constant 0 : index
    %c21 = arith.constant 21 : index
    %c3_44 = arith.constant 3 : index
    %35 = vector.load %arg4[%c0_42, %c0_43, %c21, %c3_44] : memref<2x1x22x22xf32, #tpu.memory_space<vmem>>, vector<1x1x1x16xf32>
    %36 = vector.shape_cast %35 : vector<1x1x1x16xf32> to vector<1x1x16xf32>
    %37 = vector.shape_cast %34 : vector<1x1x16xf32> to vector<1x1x1x16xf32>
    tpu.vector_store %arg4[%c0_42, %c0_43, %c21, %c3_44], %37 {strides = array<i32>} : memref<2x1x22x22xf32, #tpu.memory_space<vmem>>, vector<1x1x1x16xf32>,
    %c0_45 = arith.constant 0 : index
    %c0_46 = arith.constant 0 : index
    %c0_47 = arith.constant 0 : index
    %c4_48 = arith.constant 4 : index
    %38 = vector.load %arg4[%c0_45, %c0_46, %c0_47, %c4_48] : memref<2x1x22x22xf32, #tpu.memory_space<vmem>>, vector<1x1x22x1xf32>
    %39 = vector.shape_cast %38 : vector<1x1x22x1xf32> to vector<1x22x1xf32>
    %c0_49 = arith.constant 0 : index
    %c0_50 = arith.constant 0 : index
    %c0_51 = arith.constant 0 : index
    %c2_52 = arith.constant 2 : index
    %40 = vector.load %arg4[%c0_49, %c0_50, %c0_51, %c2_52] : memref<2x1x22x22xf32, #tpu.memory_space<vmem>>, vector<1x1x22x1xf32>
    %41 = vector.shape_cast %40 : vector<1x1x22x1xf32> to vector<1x22x1xf32>
    %42 = vector.shape_cast %39 : vector<1x22x1xf32> to vector<1x1x22x1xf32>
    tpu.vector_store %arg4[%c0_49, %c0_50, %c0_51, %c2_52], %42 {strides = array<i32>} : memref<2x1x22x22xf32, #tpu.memory_space<vmem>>, vector<1x1x22x1xf32>,
    %c0_53 = arith.constant 0 : index
    %c0_54 = arith.constant 0 : index
    %c0_55 = arith.constant 0 : index
    %c17_56 = arith.constant 17 : index
    %43 = vector.load %arg4[%c0_53, %c0_54, %c0_55, %c17_56] : memref<2x1x22x22xf32, #tpu.memory_space<vmem>>, vector<1x1x22x1xf32>
    %44 = vector.shape_cast %43 : vector<1x1x22x1xf32> to vector<1x22x1xf32>
    %c0_57 = arith.constant 0 : index
    %c0_58 = arith.constant 0 : index
    %c0_59 = arith.constant 0 : index
    %c19_60 = arith.constant 19 : index
    %45 = vector.load %arg4[%c0_57, %c0_58, %c0_59, %c19_60] : memref<2x1x22x22xf32, #tpu.memory_space<vmem>>, vector<1x1x22x1xf32>
    %46 = vector.shape_cast %45 : vector<1x1x22x1xf32> to vector<1x22x1xf32>
    %47 = vector.shape_cast %44 : vector<1x22x1xf32> to vector<1x1x22x1xf32>
    tpu.vector_store %arg4[%c0_57, %c0_58, %c0_59, %c19_60], %47 {strides = array<i32>} : memref<2x1x22x22xf32, #tpu.memory_space<vmem>>, vector<1x1x22x1xf32>,
    %c0_61 = arith.constant 0 : index
    %c0_62 = arith.constant 0 : index
    %c0_63 = arith.constant 0 : index
    %c5_64 = arith.constant 5 : index
    %48 = vector.load %arg4[%c0_61, %c0_62, %c0_63, %c5_64] : memref<2x1x22x22xf32, #tpu.memory_space<vmem>>, vector<1x1x22x1xf32>
    %49 = vector.shape_cast %48 : vector<1x1x22x1xf32> to vector<1x22x1xf32>
    %c0_65 = arith.constant 0 : index
    %c0_66 = arith.constant 0 : index
    %c0_67 = arith.constant 0 : index
    %c1_68 = arith.constant 1 : index
    %50 = vector.load %arg4[%c0_65, %c0_66, %c0_67, %c1_68] : memref<2x1x22x22xf32, #tpu.memory_space<vmem>>, vector<1x1x22x1xf32>
    %51 = vector.shape_cast %50 : vector<1x1x22x1xf32> to vector<1x22x1xf32>
    %52 = vector.shape_cast %49 : vector<1x22x1xf32> to vector<1x1x22x1xf32>
    tpu.vector_store %arg4[%c0_65, %c0_66, %c0_67, %c1_68], %52 {strides = array<i32>} : memref<2x1x22x22xf32, #tpu.memory_space<vmem>>, vector<1x1x22x1xf32>,
    %c0_69 = arith.constant 0 : index
    %c0_70 = arith.constant 0 : index
    %c0_71 = arith.constant 0 : index
    %c16_72 = arith.constant 16 : index
    %53 = vector.load %arg4[%c0_69, %c0_70, %c0_71, %c16_72] : memref<2x1x22x22xf32, #tpu.memory_space<vmem>>, vector<1x1x22x1xf32>
    %54 = vector.shape_cast %53 : vector<1x1x22x1xf32> to vector<1x22x1xf32>
    %c0_73 = arith.constant 0 : index
    %c0_74 = arith.constant 0 : index
    %c0_75 = arith.constant 0 : index
    %c20_76 = arith.constant 20 : index
    %55 = vector.load %arg4[%c0_73, %c0_74, %c0_75, %c20_76] : memref<2x1x22x22xf32, #tpu.memory_space<vmem>>, vector<1x1x22x1xf32>
    %56 = vector.shape_cast %55 : vector<1x1x22x1xf32> to vector<1x22x1xf32>
    %57 = vector.shape_cast %54 : vector<1x22x1xf32> to vector<1x1x22x1xf32>
    tpu.vector_store %arg4[%c0_73, %c0_74, %c0_75, %c20_76], %57 {strides = array<i32>} : memref<2x1x22x22xf32, #tpu.memory_space<vmem>>, vector<1x1x22x1xf32>,
    %c0_77 = arith.constant 0 : index
    %c0_78 = arith.constant 0 : index
    %c0_79 = arith.constant 0 : index
    %c6_80 = arith.constant 6 : index
    %58 = vector.load %arg4[%c0_77, %c0_78, %c0_79, %c6_80] : memref<2x1x22x22xf32, #tpu.memory_space<vmem>>, vector<1x1x22x1xf32>
    %59 = vector.shape_cast %58 : vector<1x1x22x1xf32> to vector<1x22x1xf32>
    %c0_81 = arith.constant 0 : index
    %c0_82 = arith.constant 0 : index
    %c0_83 = arith.constant 0 : index
    %c0_84 = arith.constant 0 : index
    %60 = vector.load %arg4[%c0_81, %c0_82, %c0_83, %c0_84] : memref<2x1x22x22xf32, #tpu.memory_space<vmem>>, vector<1x1x22x1xf32>
    %61 = vector.shape_cast %60 : vector<1x1x22x1xf32> to vector<1x22x1xf32>
    %62 = vector.shape_cast %59 : vector<1x22x1xf32> to vector<1x1x22x1xf32>
    tpu.vector_store %arg4[%c0_81, %c0_82, %c0_83, %c0_84], %62 {strides = array<i32>} : memref<2x1x22x22xf32, #tpu.memory_space<vmem>>, vector<1x1x22x1xf32>,
    %c0_85 = arith.constant 0 : index
    %c0_86 = arith.constant 0 : index
    %c0_87 = arith.constant 0 : index
    %c15_88 = arith.constant 15 : index
    %63 = vector.load %arg4[%c0_85, %c0_86, %c0_87, %c15_88] : memref<2x1x22x22xf32, #tpu.memory_space<vmem>>, vector<1x1x22x1xf32>
    %64 = vector.shape_cast %63 : vector<1x1x22x1xf32> to vector<1x22x1xf32>
    %c0_89 = arith.constant 0 : index
    %c0_90 = arith.constant 0 : index
    %c0_91 = arith.constant 0 : index
    %c21_92 = arith.constant 21 : index
    %65 = vector.load %arg4[%c0_89, %c0_90, %c0_91, %c21_92] : memref<2x1x22x22xf32, #tpu.memory_space<vmem>>, vector<1x1x22x1xf32>
    %66 = vector.shape_cast %65 : vector<1x1x22x1xf32> to vector<1x22x1xf32>
    %67 = vector.shape_cast %64 : vector<1x22x1xf32> to vector<1x1x22x1xf32>
    tpu.vector_store %arg4[%c0_89, %c0_90, %c0_91, %c21_92], %67 {strides = array<i32>} : memref<2x1x22x22xf32, #tpu.memory_space<vmem>>, vector<1x1x22x1xf32>,
    %c1_93 = arith.constant 1 : index
    %c0_94 = arith.constant 0 : index
    %c3_95 = arith.constant 3 : index
    %c3_96 = arith.constant 3 : index
    %68 = vector.load %arg4[%c1_93, %c0_94, %c3_95, %c3_96] : memref<2x1x22x22xf32, #tpu.memory_space<vmem>>, vector<1x1x16x16xf32>
    %69 = vector.shape_cast %68 : vector<1x1x16x16xf32> to vector<1x16x16xf32>
    %70 = vector.shape_cast %2 : vector<1x16x16xf32> to vector<1x1x16x16xf32>
    tpu.vector_store %arg4[%c1_93, %c0_94, %c3_95, %c3_96], %70 {strides = array<i32>} : memref<2x1x22x22xf32, #tpu.memory_space<vmem>>, vector<1x1x16x16xf32>,
    %c1_97 = arith.constant 1 : index
    %c0_98 = arith.constant 0 : index
    %c4_99 = arith.constant 4 : index
    %c3_100 = arith.constant 3 : index
    %71 = vector.load %arg4[%c1_97, %c0_98, %c4_99, %c3_100] : memref<2x1x22x22xf32, #tpu.memory_space<vmem>>, vector<1x1x1x16xf32>
    %72 = vector.shape_cast %71 : vector<1x1x1x16xf32> to vector<1x1x16xf32>
    %c1_101 = arith.constant 1 : index
    %c0_102 = arith.constant 0 : index
    %c2_103 = arith.constant 2 : index
    %c3_104 = arith.constant 3 : index
    %73 = vector.load %arg4[%c1_101, %c0_102, %c2_103, %c3_104] : memref<2x1x22x22xf32, #tpu.memory_space<vmem>>, vector<1x1x1x16xf32>
    %74 = vector.shape_cast %73 : vector<1x1x1x16xf32> to vector<1x1x16xf32>
    %75 = vector.shape_cast %72 : vector<1x1x16xf32> to vector<1x1x1x16xf32>
    tpu.vector_store %arg4[%c1_101, %c0_102, %c2_103, %c3_104], %75 {strides = array<i32>} : memref<2x1x22x22xf32, #tpu.memory_space<vmem>>, vector<1x1x1x16xf32>,
    %c1_105 = arith.constant 1 : index
    %c0_106 = arith.constant 0 : index
    %c17_107 = arith.constant 17 : index
    %c3_108 = arith.constant 3 : index
    %76 = vector.load %arg4[%c1_105, %c0_106, %c17_107, %c3_108] : memref<2x1x22x22xf32, #tpu.memory_space<vmem>>, vector<1x1x1x16xf32>
    %77 = vector.shape_cast %76 : vector<1x1x1x16xf32> to vector<1x1x16xf32>
    %c1_109 = arith.constant 1 : index
    %c0_110 = arith.constant 0 : index
    %c19_111 = arith.constant 19 : index
    %c3_112 = arith.constant 3 : index
    %78 = vector.load %arg4[%c1_109, %c0_110, %c19_111, %c3_112] : memref<2x1x22x22xf32, #tpu.memory_space<vmem>>, vector<1x1x1x16xf32>
    %79 = vector.shape_cast %78 : vector<1x1x1x16xf32> to vector<1x1x16xf32>
    %80 = vector.shape_cast %77 : vector<1x1x16xf32> to vector<1x1x1x16xf32>
    tpu.vector_store %arg4[%c1_109, %c0_110, %c19_111, %c3_112], %80 {strides = array<i32>} : memref<2x1x22x22xf32, #tpu.memory_space<vmem>>, vector<1x1x1x16xf32>,
    %c1_113 = arith.constant 1 : index
    %c0_114 = arith.constant 0 : index
    %c5_115 = arith.constant 5 : index
    %c3_116 = arith.constant 3 : index
    %81 = vector.load %arg4[%c1_113, %c0_114, %c5_115, %c3_116] : memref<2x1x22x22xf32, #tpu.memory_space<vmem>>, vector<1x1x1x16xf32>
    %82 = vector.shape_cast %81 : vector<1x1x1x16xf32> to vector<1x1x16xf32>
    %c1_117 = arith.constant 1 : index
    %c0_118 = arith.constant 0 : index
    %c1_119 = arith.constant 1 : index
    %c3_120 = arith.constant 3 : index
    %83 = vector.load %arg4[%c1_117, %c0_118, %c1_119, %c3_120] : memref<2x1x22x22xf32, #tpu.memory_space<vmem>>, vector<1x1x1x16xf32>
    %84 = vector.shape_cast %83 : vector<1x1x1x16xf32> to vector<1x1x16xf32>
    %85 = vector.shape_cast %82 : vector<1x1x16xf32> to vector<1x1x1x16xf32>
    tpu.vector_store %arg4[%c1_117, %c0_118, %c1_119, %c3_120], %85 {strides = array<i32>} : memref<2x1x22x22xf32, #tpu.memory_space<vmem>>, vector<1x1x1x16xf32>,
    %c1_121 = arith.constant 1 : index
    %c0_122 = arith.constant 0 : index
    %c16_123 = arith.constant 16 : index
    %c3_124 = arith.constant 3 : index
    %86 = vector.load %arg4[%c1_121, %c0_122, %c16_123, %c3_124] : memref<2x1x22x22xf32, #tpu.memory_space<vmem>>, vector<1x1x1x16xf32>
    %87 = vector.shape_cast %86 : vector<1x1x1x16xf32> to vector<1x1x16xf32>
    %c1_125 = arith.constant 1 : index
    %c0_126 = arith.constant 0 : index
    %c20_127 = arith.constant 20 : index
    %c3_128 = arith.constant 3 : index
    %88 = vector.load %arg4[%c1_125, %c0_126, %c20_127, %c3_128] : memref<2x1x22x22xf32, #tpu.memory_space<vmem>>, vector<1x1x1x16xf32>
    %89 = vector.shape_cast %88 : vector<1x1x1x16xf32> to vector<1x1x16xf32>
    %90 = vector.shape_cast %87 : vector<1x1x16xf32> to vector<1x1x1x16xf32>
    tpu.vector_store %arg4[%c1_125, %c0_126, %c20_127, %c3_128], %90 {strides = array<i32>} : memref<2x1x22x22xf32, #tpu.memory_space<vmem>>, vector<1x1x1x16xf32>,
    %c1_129 = arith.constant 1 : index
    %c0_130 = arith.constant 0 : index
    %c6_131 = arith.constant 6 : index
    %c3_132 = arith.constant 3 : index
    %91 = vector.load %arg4[%c1_129, %c0_130, %c6_131, %c3_132] : memref<2x1x22x22xf32, #tpu.memory_space<vmem>>, vector<1x1x1x16xf32>
    %92 = vector.shape_cast %91 : vector<1x1x1x16xf32> to vector<1x1x16xf32>
    %c1_133 = arith.constant 1 : index
    %c0_134 = arith.constant 0 : index
    %c0_135 = arith.constant 0 : index
    %c3_136 = arith.constant 3 : index
    %93 = vector.load %arg4[%c1_133, %c0_134, %c0_135, %c3_136] : memref<2x1x22x22xf32, #tpu.memory_space<vmem>>, vector<1x1x1x16xf32>
    %94 = vector.shape_cast %93 : vector<1x1x1x16xf32> to vector<1x1x16xf32>
    %95 = vector.shape_cast %92 : vector<1x1x16xf32> to vector<1x1x1x16xf32>
    tpu.vector_store %arg4[%c1_133, %c0_134, %c0_135, %c3_136], %95 {strides = array<i32>} : memref<2x1x22x22xf32, #tpu.memory_space<vmem>>, vector<1x1x1x16xf32>,
    %c1_137 = arith.constant 1 : index
    %c0_138 = arith.constant 0 : index
    %c15_139 = arith.constant 15 : index
    %c3_140 = arith.constant 3 : index
    %96 = vector.load %arg4[%c1_137, %c0_138, %c15_139, %c3_140] : memref<2x1x22x22xf32, #tpu.memory_space<vmem>>, vector<1x1x1x16xf32>
    %97 = vector.shape_cast %96 : vector<1x1x1x16xf32> to vector<1x1x16xf32>
    %c1_141 = arith.constant 1 : index
    %c0_142 = arith.constant 0 : index
    %c21_143 = arith.constant 21 : index
    %c3_144 = arith.constant 3 : index
    %98 = vector.load %arg4[%c1_141, %c0_142, %c21_143, %c3_144] : memref<2x1x22x22xf32, #tpu.memory_space<vmem>>, vector<1x1x1x16xf32>
    %99 = vector.shape_cast %98 : vector<1x1x1x16xf32> to vector<1x1x16xf32>
    %100 = vector.shape_cast %97 : vector<1x1x16xf32> to vector<1x1x1x16xf32>
    tpu.vector_store %arg4[%c1_141, %c0_142, %c21_143, %c3_144], %100 {strides = array<i32>} : memref<2x1x22x22xf32, #tpu.memory_space<vmem>>, vector<1x1x1x16xf32>,
    %c1_145 = arith.constant 1 : index
    %c0_146 = arith.constant 0 : index
    %c0_147 = arith.constant 0 : index
    %c4_148 = arith.constant 4 : index
    %101 = vector.load %arg4[%c1_145, %c0_146, %c0_147, %c4_148] : memref<2x1x22x22xf32, #tpu.memory_space<vmem>>, vector<1x1x22x1xf32>
    %102 = vector.shape_cast %101 : vector<1x1x22x1xf32> to vector<1x22x1xf32>
    %c1_149 = arith.constant 1 : index
    %c0_150 = arith.constant 0 : index
    %c0_151 = arith.constant 0 : index
    %c2_152 = arith.constant 2 : index
    %103 = vector.load %arg4[%c1_149, %c0_150, %c0_151, %c2_152] : memref<2x1x22x22xf32, #tpu.memory_space<vmem>>, vector<1x1x22x1xf32>
    %104 = vector.shape_cast %103 : vector<1x1x22x1xf32> to vector<1x22x1xf32>
    %105 = vector.shape_cast %102 : vector<1x22x1xf32> to vector<1x1x22x1xf32>
    tpu.vector_store %arg4[%c1_149, %c0_150, %c0_151, %c2_152], %105 {strides = array<i32>} : memref<2x1x22x22xf32, #tpu.memory_space<vmem>>, vector<1x1x22x1xf32>,
    %c1_153 = arith.constant 1 : index
    %c0_154 = arith.constant 0 : index
    %c0_155 = arith.constant 0 : index
    %c17_156 = arith.constant 17 : index
    %106 = vector.load %arg4[%c1_153, %c0_154, %c0_155, %c17_156] : memref<2x1x22x22xf32, #tpu.memory_space<vmem>>, vector<1x1x22x1xf32>
    %107 = vector.shape_cast %106 : vector<1x1x22x1xf32> to vector<1x22x1xf32>
    %c1_157 = arith.constant 1 : index
    %c0_158 = arith.constant 0 : index
    %c0_159 = arith.constant 0 : index
    %c19_160 = arith.constant 19 : index
    %108 = vector.load %arg4[%c1_157, %c0_158, %c0_159, %c19_160] : memref<2x1x22x22xf32, #tpu.memory_space<vmem>>, vector<1x1x22x1xf32>
    %109 = vector.shape_cast %108 : vector<1x1x22x1xf32> to vector<1x22x1xf32>
    %110 = vector.shape_cast %107 : vector<1x22x1xf32> to vector<1x1x22x1xf32>
    tpu.vector_store %arg4[%c1_157, %c0_158, %c0_159, %c19_160], %110 {strides = array<i32>} : memref<2x1x22x22xf32, #tpu.memory_space<vmem>>, vector<1x1x22x1xf32>,
    %c1_161 = arith.constant 1 : index
    %c0_162 = arith.constant 0 : index
    %c0_163 = arith.constant 0 : index
    %c5_164 = arith.constant 5 : index
    %111 = vector.load %arg4[%c1_161, %c0_162, %c0_163, %c5_164] : memref<2x1x22x22xf32, #tpu.memory_space<vmem>>, vector<1x1x22x1xf32>
    %112 = vector.shape_cast %111 : vector<1x1x22x1xf32> to vector<1x22x1xf32>
    %c1_165 = arith.constant 1 : index
    %c0_166 = arith.constant 0 : index
    %c0_167 = arith.constant 0 : index
    %c1_168 = arith.constant 1 : index
    %113 = vector.load %arg4[%c1_165, %c0_166, %c0_167, %c1_168] : memref<2x1x22x22xf32, #tpu.memory_space<vmem>>, vector<1x1x22x1xf32>
    %114 = vector.shape_cast %113 : vector<1x1x22x1xf32> to vector<1x22x1xf32>
    %115 = vector.shape_cast %112 : vector<1x22x1xf32> to vector<1x1x22x1xf32>
    tpu.vector_store %arg4[%c1_165, %c0_166, %c0_167, %c1_168], %115 {strides = array<i32>} : memref<2x1x22x22xf32, #tpu.memory_space<vmem>>, vector<1x1x22x1xf32>,
    %c1_169 = arith.constant 1 : index
    %c0_170 = arith.constant 0 : index
    %c0_171 = arith.constant 0 : index
    %c16_172 = arith.constant 16 : index
    %116 = vector.load %arg4[%c1_169, %c0_170, %c0_171, %c16_172] : memref<2x1x22x22xf32, #tpu.memory_space<vmem>>, vector<1x1x22x1xf32>
    %117 = vector.shape_cast %116 : vector<1x1x22x1xf32> to vector<1x22x1xf32>
    %c1_173 = arith.constant 1 : index
    %c0_174 = arith.constant 0 : index
    %c0_175 = arith.constant 0 : index
    %c20_176 = arith.constant 20 : index
    %118 = vector.load %arg4[%c1_173, %c0_174, %c0_175, %c20_176] : memref<2x1x22x22xf32, #tpu.memory_space<vmem>>, vector<1x1x22x1xf32>
    %119 = vector.shape_cast %118 : vector<1x1x22x1xf32> to vector<1x22x1xf32>
    %120 = vector.shape_cast %117 : vector<1x22x1xf32> to vector<1x1x22x1xf32>
    tpu.vector_store %arg4[%c1_173, %c0_174, %c0_175, %c20_176], %120 {strides = array<i32>} : memref<2x1x22x22xf32, #tpu.memory_space<vmem>>, vector<1x1x22x1xf32>,
    %c1_177 = arith.constant 1 : index
    %c0_178 = arith.constant 0 : index
    %c0_179 = arith.constant 0 : index
    %c6_180 = arith.constant 6 : index
    %121 = vector.load %arg4[%c1_177, %c0_178, %c0_179, %c6_180] : memref<2x1x22x22xf32, #tpu.memory_space<vmem>>, vector<1x1x22x1xf32>
    %122 = vector.shape_cast %121 : vector<1x1x22x1xf32> to vector<1x22x1xf32>
    %c1_181 = arith.constant 1 : index
    %c0_182 = arith.constant 0 : index
    %c0_183 = arith.constant 0 : index
    %c0_184 = arith.constant 0 : index
    %123 = vector.load %arg4[%c1_181, %c0_182, %c0_183, %c0_184] : memref<2x1x22x22xf32, #tpu.memory_space<vmem>>, vector<1x1x22x1xf32>
    %124 = vector.shape_cast %123 : vector<1x1x22x1xf32> to vector<1x22x1xf32>
    %125 = vector.shape_cast %122 : vector<1x22x1xf32> to vector<1x1x22x1xf32>
    tpu.vector_store %arg4[%c1_181, %c0_182, %c0_183, %c0_184], %125 {strides = array<i32>} : memref<2x1x22x22xf32, #tpu.memory_space<vmem>>, vector<1x1x22x1xf32>,
    %c1_185 = arith.constant 1 : index
    %c0_186 = arith.constant 0 : index
    %c0_187 = arith.constant 0 : index
    %c15_188 = arith.constant 15 : index
    %126 = vector.load %arg4[%c1_185, %c0_186, %c0_187, %c15_188] : memref<2x1x22x22xf32, #tpu.memory_space<vmem>>, vector<1x1x22x1xf32>
    %127 = vector.shape_cast %126 : vector<1x1x22x1xf32> to vector<1x22x1xf32>
    %c1_189 = arith.constant 1 : index
    %c0_190 = arith.constant 0 : index
    %c0_191 = arith.constant 0 : index
    %c21_192 = arith.constant 21 : index
    %128 = vector.load %arg4[%c1_189, %c0_190, %c0_191, %c21_192] : memref<2x1x22x22xf32, #tpu.memory_space<vmem>>, vector<1x1x22x1xf32>
    %129 = vector.shape_cast %128 : vector<1x1x22x1xf32> to vector<1x22x1xf32>
    %130 = vector.shape_cast %127 : vector<1x22x1xf32> to vector<1x1x22x1xf32>
    tpu.vector_store %arg4[%c1_189, %c0_190, %c0_191, %c21_192], %130 {strides = array<i32>} : memref<2x1x22x22xf32, #tpu.memory_space<vmem>>, vector<1x1x22x1xf32>,
    %c0_193 = arith.constant 0 : index
    %c0_194 = arith.constant 0 : index
    %c0_195 = arith.constant 0 : index
    %c0_196 = arith.constant 0 : index
    %131 = vector.load %arg4[%c0_193, %c0_194, %c0_195, %c0_196] : memref<2x1x22x22xf32, #tpu.memory_space<vmem>>, vector<1x1x22x16xf32>
    %132 = vector.shape_cast %131 : vector<1x1x22x16xf32> to vector<1x22x16xf32>
    %c0_197 = arith.constant 0 : index
    %c0_198 = arith.constant 0 : index
    %c0_199 = arith.constant 0 : index
    %c0_200 = arith.constant 0 : index
    %c0_201 = arith.constant 0 : index
    %133 = vector.load %arg5[%c0_197, %c0_198, %c0_199, %c0_200, %c0_201] : memref<2x7x1x22x16xf32, #tpu.memory_space<vmem>>, vector<1x1x1x22x16xf32>
    %134 = vector.shape_cast %133 : vector<1x1x1x22x16xf32> to vector<1x22x16xf32>
    %135 = vector.shape_cast %132 : vector<1x22x16xf32> to vector<1x1x1x22x16xf32>
    tpu.vector_store %arg5[%c0_197, %c0_198, %c0_199, %c0_200, %c0_201], %135 {strides = array<i32>} : memref<2x7x1x22x16xf32, #tpu.memory_space<vmem>>, vector<1x1x1x22x16xf32>,
    %c0_202 = arith.constant 0 : index
    %c0_203 = arith.constant 0 : index
    %c0_204 = arith.constant 0 : index
    %c1_205 = arith.constant 1 : index
    %136 = vector.load %arg4[%c0_202, %c0_203, %c0_204, %c1_205] : memref<2x1x22x22xf32, #tpu.memory_space<vmem>>, vector<1x1x22x16xf32>
    %137 = vector.shape_cast %136 : vector<1x1x22x16xf32> to vector<1x22x16xf32>
    %c0_206 = arith.constant 0 : index
    %c1_207 = arith.constant 1 : index
    %c0_208 = arith.constant 0 : index
    %c0_209 = arith.constant 0 : index
    %c0_210 = arith.constant 0 : index
    %138 = vector.load %arg5[%c0_206, %c1_207, %c0_208, %c0_209, %c0_210] : memref<2x7x1x22x16xf32, #tpu.memory_space<vmem>>, vector<1x1x1x22x16xf32>
    %139 = vector.shape_cast %138 : vector<1x1x1x22x16xf32> to vector<1x22x16xf32>
    %140 = vector.shape_cast %137 : vector<1x22x16xf32> to vector<1x1x1x22x16xf32>
    tpu.vector_store %arg5[%c0_206, %c1_207, %c0_208, %c0_209, %c0_210], %140 {strides = array<i32>} : memref<2x7x1x22x16xf32, #tpu.memory_space<vmem>>, vector<1x1x1x22x16xf32>,
    %c0_211 = arith.constant 0 : index
    %c0_212 = arith.constant 0 : index
    %c0_213 = arith.constant 0 : index
    %c2_214 = arith.constant 2 : index
    %141 = vector.load %arg4[%c0_211, %c0_212, %c0_213, %c2_214] : memref<2x1x22x22xf32, #tpu.memory_space<vmem>>, vector<1x1x22x16xf32>
    %142 = vector.shape_cast %141 : vector<1x1x22x16xf32> to vector<1x22x16xf32>
    %c0_215 = arith.constant 0 : index
    %c2_216 = arith.constant 2 : index
    %c0_217 = arith.constant 0 : index
    %c0_218 = arith.constant 0 : index
    %c0_219 = arith.constant 0 : index
    %143 = vector.load %arg5[%c0_215, %c2_216, %c0_217, %c0_218, %c0_219] : memref<2x7x1x22x16xf32, #tpu.memory_space<vmem>>, vector<1x1x1x22x16xf32>
    %144 = vector.shape_cast %143 : vector<1x1x1x22x16xf32> to vector<1x22x16xf32>
    %145 = vector.shape_cast %142 : vector<1x22x16xf32> to vector<1x1x1x22x16xf32>
    tpu.vector_store %arg5[%c0_215, %c2_216, %c0_217, %c0_218, %c0_219], %145 {strides = array<i32>} : memref<2x7x1x22x16xf32, #tpu.memory_space<vmem>>, vector<1x1x1x22x16xf32>,
    %c0_220 = arith.constant 0 : index
    %c0_221 = arith.constant 0 : index
    %c0_222 = arith.constant 0 : index
    %c3_223 = arith.constant 3 : index
    %146 = vector.load %arg4[%c0_220, %c0_221, %c0_222, %c3_223] : memref<2x1x22x22xf32, #tpu.memory_space<vmem>>, vector<1x1x22x16xf32>
    %147 = vector.shape_cast %146 : vector<1x1x22x16xf32> to vector<1x22x16xf32>
    %c0_224 = arith.constant 0 : index
    %c3_225 = arith.constant 3 : index
    %c0_226 = arith.constant 0 : index
    %c0_227 = arith.constant 0 : index
    %c0_228 = arith.constant 0 : index
    %148 = vector.load %arg5[%c0_224, %c3_225, %c0_226, %c0_227, %c0_228] : memref<2x7x1x22x16xf32, #tpu.memory_space<vmem>>, vector<1x1x1x22x16xf32>
    %149 = vector.shape_cast %148 : vector<1x1x1x22x16xf32> to vector<1x22x16xf32>
    %150 = vector.shape_cast %147 : vector<1x22x16xf32> to vector<1x1x1x22x16xf32>
    tpu.vector_store %arg5[%c0_224, %c3_225, %c0_226, %c0_227, %c0_228], %150 {strides = array<i32>} : memref<2x7x1x22x16xf32, #tpu.memory_space<vmem>>, vector<1x1x1x22x16xf32>,
    %c0_229 = arith.constant 0 : index
    %c0_230 = arith.constant 0 : index
    %c0_231 = arith.constant 0 : index
    %c4_232 = arith.constant 4 : index
    %151 = vector.load %arg4[%c0_229, %c0_230, %c0_231, %c4_232] : memref<2x1x22x22xf32, #tpu.memory_space<vmem>>, vector<1x1x22x16xf32>
    %152 = vector.shape_cast %151 : vector<1x1x22x16xf32> to vector<1x22x16xf32>
    %c0_233 = arith.constant 0 : index
    %c4_234 = arith.constant 4 : index
    %c0_235 = arith.constant 0 : index
    %c0_236 = arith.constant 0 : index
    %c0_237 = arith.constant 0 : index
    %153 = vector.load %arg5[%c0_233, %c4_234, %c0_235, %c0_236, %c0_237] : memref<2x7x1x22x16xf32, #tpu.memory_space<vmem>>, vector<1x1x1x22x16xf32>
    %154 = vector.shape_cast %153 : vector<1x1x1x22x16xf32> to vector<1x22x16xf32>
    %155 = vector.shape_cast %152 : vector<1x22x16xf32> to vector<1x1x1x22x16xf32>
    tpu.vector_store %arg5[%c0_233, %c4_234, %c0_235, %c0_236, %c0_237], %155 {strides = array<i32>} : memref<2x7x1x22x16xf32, #tpu.memory_space<vmem>>, vector<1x1x1x22x16xf32>,
    %c0_238 = arith.constant 0 : index
    %c0_239 = arith.constant 0 : index
    %c0_240 = arith.constant 0 : index
    %c5_241 = arith.constant 5 : index
    %156 = vector.load %arg4[%c0_238, %c0_239, %c0_240, %c5_241] : memref<2x1x22x22xf32, #tpu.memory_space<vmem>>, vector<1x1x22x16xf32>
    %157 = vector.shape_cast %156 : vector<1x1x22x16xf32> to vector<1x22x16xf32>
    %c0_242 = arith.constant 0 : index
    %c5_243 = arith.constant 5 : index
    %c0_244 = arith.constant 0 : index
    %c0_245 = arith.constant 0 : index
    %c0_246 = arith.constant 0 : index
    %158 = vector.load %arg5[%c0_242, %c5_243, %c0_244, %c0_245, %c0_246] : memref<2x7x1x22x16xf32, #tpu.memory_space<vmem>>, vector<1x1x1x22x16xf32>
    %159 = vector.shape_cast %158 : vector<1x1x1x22x16xf32> to vector<1x22x16xf32>
    %160 = vector.shape_cast %157 : vector<1x22x16xf32> to vector<1x1x1x22x16xf32>
    tpu.vector_store %arg5[%c0_242, %c5_243, %c0_244, %c0_245, %c0_246], %160 {strides = array<i32>} : memref<2x7x1x22x16xf32, #tpu.memory_space<vmem>>, vector<1x1x1x22x16xf32>,
    %c0_247 = arith.constant 0 : index
    %c0_248 = arith.constant 0 : index
    %c0_249 = arith.constant 0 : index
    %c6_250 = arith.constant 6 : index
    %161 = vector.load %arg4[%c0_247, %c0_248, %c0_249, %c6_250] : memref<2x1x22x22xf32, #tpu.memory_space<vmem>>, vector<1x1x22x16xf32>
    %162 = vector.shape_cast %161 : vector<1x1x22x16xf32> to vector<1x22x16xf32>
    %c0_251 = arith.constant 0 : index
    %c6_252 = arith.constant 6 : index
    %c0_253 = arith.constant 0 : index
    %c0_254 = arith.constant 0 : index
    %c0_255 = arith.constant 0 : index
    %163 = vector.load %arg5[%c0_251, %c6_252, %c0_253, %c0_254, %c0_255] : memref<2x7x1x22x16xf32, #tpu.memory_space<vmem>>, vector<1x1x1x22x16xf32>
    %164 = vector.shape_cast %163 : vector<1x1x1x22x16xf32> to vector<1x22x16xf32>
    %165 = vector.shape_cast %162 : vector<1x22x16xf32> to vector<1x1x1x22x16xf32>
    tpu.vector_store %arg5[%c0_251, %c6_252, %c0_253, %c0_254, %c0_255], %165 {strides = array<i32>} : memref<2x7x1x22x16xf32, #tpu.memory_space<vmem>>, vector<1x1x1x22x16xf32>,
    %c1_256 = arith.constant 1 : index
    %c0_257 = arith.constant 0 : index
    %c0_258 = arith.constant 0 : index
    %c0_259 = arith.constant 0 : index
    %166 = vector.load %arg4[%c1_256, %c0_257, %c0_258, %c0_259] : memref<2x1x22x22xf32, #tpu.memory_space<vmem>>, vector<1x1x22x16xf32>
    %167 = vector.shape_cast %166 : vector<1x1x22x16xf32> to vector<1x22x16xf32>
    %c1_260 = arith.constant 1 : index
    %c0_261 = arith.constant 0 : index
    %c0_262 = arith.constant 0 : index
    %c0_263 = arith.constant 0 : index
    %c0_264 = arith.constant 0 : index
    %168 = vector.load %arg5[%c1_260, %c0_261, %c0_262, %c0_263, %c0_264] : memref<2x7x1x22x16xf32, #tpu.memory_space<vmem>>, vector<1x1x1x22x16xf32>
    %169 = vector.shape_cast %168 : vector<1x1x1x22x16xf32> to vector<1x22x16xf32>
    %170 = vector.shape_cast %167 : vector<1x22x16xf32> to vector<1x1x1x22x16xf32>
    tpu.vector_store %arg5[%c1_260, %c0_261, %c0_262, %c0_263, %c0_264], %170 {strides = array<i32>} : memref<2x7x1x22x16xf32, #tpu.memory_space<vmem>>, vector<1x1x1x22x16xf32>,
    %c1_265 = arith.constant 1 : index
    %c0_266 = arith.constant 0 : index
    %c0_267 = arith.constant 0 : index
    %c1_268 = arith.constant 1 : index
    %171 = vector.load %arg4[%c1_265, %c0_266, %c0_267, %c1_268] : memref<2x1x22x22xf32, #tpu.memory_space<vmem>>, vector<1x1x22x16xf32>
    %172 = vector.shape_cast %171 : vector<1x1x22x16xf32> to vector<1x22x16xf32>
    %c1_269 = arith.constant 1 : index
    %c1_270 = arith.constant 1 : index
    %c0_271 = arith.constant 0 : index
    %c0_272 = arith.constant 0 : index
    %c0_273 = arith.constant 0 : index
    %173 = vector.load %arg5[%c1_269, %c1_270, %c0_271, %c0_272, %c0_273] : memref<2x7x1x22x16xf32, #tpu.memory_space<vmem>>, vector<1x1x1x22x16xf32>
    %174 = vector.shape_cast %173 : vector<1x1x1x22x16xf32> to vector<1x22x16xf32>
    %175 = vector.shape_cast %172 : vector<1x22x16xf32> to vector<1x1x1x22x16xf32>
    tpu.vector_store %arg5[%c1_269, %c1_270, %c0_271, %c0_272, %c0_273], %175 {strides = array<i32>} : memref<2x7x1x22x16xf32, #tpu.memory_space<vmem>>, vector<1x1x1x22x16xf32>,
    %c1_274 = arith.constant 1 : index
    %c0_275 = arith.constant 0 : index
    %c0_276 = arith.constant 0 : index
    %c2_277 = arith.constant 2 : index
    %176 = vector.load %arg4[%c1_274, %c0_275, %c0_276, %c2_277] : memref<2x1x22x22xf32, #tpu.memory_space<vmem>>, vector<1x1x22x16xf32>
    %177 = vector.shape_cast %176 : vector<1x1x22x16xf32> to vector<1x22x16xf32>
    %c1_278 = arith.constant 1 : index
    %c2_279 = arith.constant 2 : index
    %c0_280 = arith.constant 0 : index
    %c0_281 = arith.constant 0 : index
    %c0_282 = arith.constant 0 : index
    %178 = vector.load %arg5[%c1_278, %c2_279, %c0_280, %c0_281, %c0_282] : memref<2x7x1x22x16xf32, #tpu.memory_space<vmem>>, vector<1x1x1x22x16xf32>
    %179 = vector.shape_cast %178 : vector<1x1x1x22x16xf32> to vector<1x22x16xf32>
    %180 = vector.shape_cast %177 : vector<1x22x16xf32> to vector<1x1x1x22x16xf32>
    tpu.vector_store %arg5[%c1_278, %c2_279, %c0_280, %c0_281, %c0_282], %180 {strides = array<i32>} : memref<2x7x1x22x16xf32, #tpu.memory_space<vmem>>, vector<1x1x1x22x16xf32>,
    %c1_283 = arith.constant 1 : index
    %c0_284 = arith.constant 0 : index
    %c0_285 = arith.constant 0 : index
    %c3_286 = arith.constant 3 : index
    %181 = vector.load %arg4[%c1_283, %c0_284, %c0_285, %c3_286] : memref<2x1x22x22xf32, #tpu.memory_space<vmem>>, vector<1x1x22x16xf32>
    %182 = vector.shape_cast %181 : vector<1x1x22x16xf32> to vector<1x22x16xf32>
    %c1_287 = arith.constant 1 : index
    %c3_288 = arith.constant 3 : index
    %c0_289 = arith.constant 0 : index
    %c0_290 = arith.constant 0 : index
    %c0_291 = arith.constant 0 : index
    %183 = vector.load %arg5[%c1_287, %c3_288, %c0_289, %c0_290, %c0_291] : memref<2x7x1x22x16xf32, #tpu.memory_space<vmem>>, vector<1x1x1x22x16xf32>
    %184 = vector.shape_cast %183 : vector<1x1x1x22x16xf32> to vector<1x22x16xf32>
    %185 = vector.shape_cast %182 : vector<1x22x16xf32> to vector<1x1x1x22x16xf32>
    tpu.vector_store %arg5[%c1_287, %c3_288, %c0_289, %c0_290, %c0_291], %185 {strides = array<i32>} : memref<2x7x1x22x16xf32, #tpu.memory_space<vmem>>, vector<1x1x1x22x16xf32>,
    %c1_292 = arith.constant 1 : index
    %c0_293 = arith.constant 0 : index
    %c0_294 = arith.constant 0 : index
    %c4_295 = arith.constant 4 : index
    %186 = vector.load %arg4[%c1_292, %c0_293, %c0_294, %c4_295] : memref<2x1x22x22xf32, #tpu.memory_space<vmem>>, vector<1x1x22x16xf32>
    %187 = vector.shape_cast %186 : vector<1x1x22x16xf32> to vector<1x22x16xf32>
    %c1_296 = arith.constant 1 : index
    %c4_297 = arith.constant 4 : index
    %c0_298 = arith.constant 0 : index
    %c0_299 = arith.constant 0 : index
    %c0_300 = arith.constant 0 : index
    %188 = vector.load %arg5[%c1_296, %c4_297, %c0_298, %c0_299, %c0_300] : memref<2x7x1x22x16xf32, #tpu.memory_space<vmem>>, vector<1x1x1x22x16xf32>
    %189 = vector.shape_cast %188 : vector<1x1x1x22x16xf32> to vector<1x22x16xf32>
    %190 = vector.shape_cast %187 : vector<1x22x16xf32> to vector<1x1x1x22x16xf32>
    tpu.vector_store %arg5[%c1_296, %c4_297, %c0_298, %c0_299, %c0_300], %190 {strides = array<i32>} : memref<2x7x1x22x16xf32, #tpu.memory_space<vmem>>, vector<1x1x1x22x16xf32>,
    %c1_301 = arith.constant 1 : index
    %c0_302 = arith.constant 0 : index
    %c0_303 = arith.constant 0 : index
    %c5_304 = arith.constant 5 : index
    %191 = vector.load %arg4[%c1_301, %c0_302, %c0_303, %c5_304] : memref<2x1x22x22xf32, #tpu.memory_space<vmem>>, vector<1x1x22x16xf32>
    %192 = vector.shape_cast %191 : vector<1x1x22x16xf32> to vector<1x22x16xf32>
    %c1_305 = arith.constant 1 : index
    %c5_306 = arith.constant 5 : index
    %c0_307 = arith.constant 0 : index
    %c0_308 = arith.constant 0 : index
    %c0_309 = arith.constant 0 : index
    %193 = vector.load %arg5[%c1_305, %c5_306, %c0_307, %c0_308, %c0_309] : memref<2x7x1x22x16xf32, #tpu.memory_space<vmem>>, vector<1x1x1x22x16xf32>
    %194 = vector.shape_cast %193 : vector<1x1x1x22x16xf32> to vector<1x22x16xf32>
    %195 = vector.shape_cast %192 : vector<1x22x16xf32> to vector<1x1x1x22x16xf32>
    tpu.vector_store %arg5[%c1_305, %c5_306, %c0_307, %c0_308, %c0_309], %195 {strides = array<i32>} : memref<2x7x1x22x16xf32, #tpu.memory_space<vmem>>, vector<1x1x1x22x16xf32>,
    %c1_310 = arith.constant 1 : index
    %c0_311 = arith.constant 0 : index
    %c0_312 = arith.constant 0 : index
    %c6_313 = arith.constant 6 : index
    %196 = vector.load %arg4[%c1_310, %c0_311, %c0_312, %c6_313] : memref<2x1x22x22xf32, #tpu.memory_space<vmem>>, vector<1x1x22x16xf32>
    %197 = vector.shape_cast %196 : vector<1x1x22x16xf32> to vector<1x22x16xf32>
    %c1_314 = arith.constant 1 : index
    %c6_315 = arith.constant 6 : index
    %c0_316 = arith.constant 0 : index
    %c0_317 = arith.constant 0 : index
    %c0_318 = arith.constant 0 : index
    %198 = vector.load %arg5[%c1_314, %c6_315, %c0_316, %c0_317, %c0_318] : memref<2x7x1x22x16xf32, #tpu.memory_space<vmem>>, vector<1x1x1x22x16xf32>
    %199 = vector.shape_cast %198 : vector<1x1x1x22x16xf32> to vector<1x22x16xf32>
    %200 = vector.shape_cast %197 : vector<1x22x16xf32> to vector<1x1x1x22x16xf32>
    tpu.vector_store %arg5[%c1_314, %c6_315, %c0_316, %c0_317, %c0_318], %200 {strides = array<i32>} : memref<2x7x1x22x16xf32, #tpu.memory_space<vmem>>, vector<1x1x1x22x16xf32>,
    %cst_319 = arith.constant 0.000000e+00 : f32
    %201 = vector.broadcast %cst_319 : f32 to vector<1x16x16xf32>
    %cst_320 = arith.constant 0.000000e+00 : f32
    %202 = vector.broadcast %cst_320 : f32 to vector<1x16x16xf32>
    %cst_321 = arith.constant 0.000000e+00 : f32
    %203 = vector.broadcast %cst_321 : f32 to vector<1x16x16xf32>
    %cst_322 = arith.constant 0.000000e+00 : f32
    %204 = vector.broadcast %cst_322 : f32 to vector<1x16x16xf32>
    %c0_323 = arith.constant 0 : index
    %205 = memref.load %arg2[%c0_323] : memref<99xf32, #tpu.memory_space<smem>>
    %c0_324 = arith.constant 0 : index
    %c0_325 = arith.constant 0 : index
    %c0_326 = arith.constant 0 : index
    %c0_327 = arith.constant 0 : index
    %c0_328 = arith.constant 0 : index
    %206 = vector.load %arg5[%c0_324, %c0_325, %c0_326, %c0_327, %c0_328] : memref<2x7x1x22x16xf32, #tpu.memory_space<vmem>>, vector<1x1x1x16x16xf32>
    %207 = vector.shape_cast %206 : vector<1x1x1x16x16xf32> to vector<1x16x16xf32>
    %208 = vector.broadcast %205 : f32 to vector<1x16x16xf32>
    %209 = arith.mulf %208, %207 : vector<1x16x16xf32>
    %210 = arith.addf %201, %209 : vector<1x16x16xf32>
    %c7 = arith.constant 7 : index
    %211 = memref.load %arg2[%c7] : memref<99xf32, #tpu.memory_space<smem>>
    %c0_329 = arith.constant 0 : index
    %c0_330 = arith.constant 0 : index
    %c0_331 = arith.constant 0 : index
    %c1_332 = arith.constant 1 : index
    %c0_333 = arith.constant 0 : index
    %212 = vector.load %arg5[%c0_329, %c0_330, %c0_331, %c1_332, %c0_333] : memref<2x7x1x22x16xf32, #tpu.memory_space<vmem>>, vector<1x1x1x16x16xf32>
    %213 = vector.shape_cast %212 : vector<1x1x1x16x16xf32> to vector<1x16x16xf32>
    %214 = vector.broadcast %211 : f32 to vector<1x16x16xf32>
    %215 = arith.mulf %214, %213 : vector<1x16x16xf32>
    %216 = arith.addf %210, %215 : vector<1x16x16xf32>
    %c14 = arith.constant 14 : index
    %217 = memref.load %arg2[%c14] : memref<99xf32, #tpu.memory_space<smem>>
    %c0_334 = arith.constant 0 : index
    %c0_335 = arith.constant 0 : index
    %c0_336 = arith.constant 0 : index
    %c2_337 = arith.constant 2 : index
    %c0_338 = arith.constant 0 : index
    %218 = vector.load %arg5[%c0_334, %c0_335, %c0_336, %c2_337, %c0_338] : memref<2x7x1x22x16xf32, #tpu.memory_space<vmem>>, vector<1x1x1x16x16xf32>
    %219 = vector.shape_cast %218 : vector<1x1x1x16x16xf32> to vector<1x16x16xf32>
    %220 = vector.broadcast %217 : f32 to vector<1x16x16xf32>
    %221 = arith.mulf %220, %219 : vector<1x16x16xf32>
    %222 = arith.addf %216, %221 : vector<1x16x16xf32>
    %c21_339 = arith.constant 21 : index
    %223 = memref.load %arg2[%c21_339] : memref<99xf32, #tpu.memory_space<smem>>
    %c0_340 = arith.constant 0 : index
    %c0_341 = arith.constant 0 : index
    %c0_342 = arith.constant 0 : index
    %c3_343 = arith.constant 3 : index
    %c0_344 = arith.constant 0 : index
    %224 = vector.load %arg5[%c0_340, %c0_341, %c0_342, %c3_343, %c0_344] : memref<2x7x1x22x16xf32, #tpu.memory_space<vmem>>, vector<1x1x1x16x16xf32>
    %225 = vector.shape_cast %224 : vector<1x1x1x16x16xf32> to vector<1x16x16xf32>
    %226 = vector.broadcast %223 : f32 to vector<1x16x16xf32>
    %227 = arith.mulf %226, %225 : vector<1x16x16xf32>
    %228 = arith.addf %222, %227 : vector<1x16x16xf32>
    %c28 = arith.constant 28 : index
    %229 = memref.load %arg2[%c28] : memref<99xf32, #tpu.memory_space<smem>>
    %c0_345 = arith.constant 0 : index
    %c0_346 = arith.constant 0 : index
    %c0_347 = arith.constant 0 : index
    %c4_348 = arith.constant 4 : index
    %c0_349 = arith.constant 0 : index
    %230 = vector.load %arg5[%c0_345, %c0_346, %c0_347, %c4_348, %c0_349] : memref<2x7x1x22x16xf32, #tpu.memory_space<vmem>>, vector<1x1x1x16x16xf32>
    %231 = vector.shape_cast %230 : vector<1x1x1x16x16xf32> to vector<1x16x16xf32>
    %232 = vector.broadcast %229 : f32 to vector<1x16x16xf32>
    %233 = arith.mulf %232, %231 : vector<1x16x16xf32>
    %234 = arith.addf %228, %233 : vector<1x16x16xf32>
    %c35 = arith.constant 35 : index
    %235 = memref.load %arg2[%c35] : memref<99xf32, #tpu.memory_space<smem>>
    %c0_350 = arith.constant 0 : index
    %c0_351 = arith.constant 0 : index
    %c0_352 = arith.constant 0 : index
    %c5_353 = arith.constant 5 : index
    %c0_354 = arith.constant 0 : index
    %236 = vector.load %arg5[%c0_350, %c0_351, %c0_352, %c5_353, %c0_354] : memref<2x7x1x22x16xf32, #tpu.memory_space<vmem>>, vector<1x1x1x16x16xf32>
    %237 = vector.shape_cast %236 : vector<1x1x1x16x16xf32> to vector<1x16x16xf32>
    %238 = vector.broadcast %235 : f32 to vector<1x16x16xf32>
    %239 = arith.mulf %238, %237 : vector<1x16x16xf32>
    %240 = arith.addf %234, %239 : vector<1x16x16xf32>
    %c42 = arith.constant 42 : index
    %241 = memref.load %arg2[%c42] : memref<99xf32, #tpu.memory_space<smem>>
    %c0_355 = arith.constant 0 : index
    %c0_356 = arith.constant 0 : index
    %c0_357 = arith.constant 0 : index
    %c6_358 = arith.constant 6 : index
    %c0_359 = arith.constant 0 : index
    %242 = vector.load %arg5[%c0_355, %c0_356, %c0_357, %c6_358, %c0_359] : memref<2x7x1x22x16xf32, #tpu.memory_space<vmem>>, vector<1x1x1x16x16xf32>
    %243 = vector.shape_cast %242 : vector<1x1x1x16x16xf32> to vector<1x16x16xf32>
    %244 = vector.broadcast %241 : f32 to vector<1x16x16xf32>
    %245 = arith.mulf %244, %243 : vector<1x16x16xf32>
    %246 = arith.addf %240, %245 : vector<1x16x16xf32>
    %c1_360 = arith.constant 1 : index
    %247 = memref.load %arg2[%c1_360] : memref<99xf32, #tpu.memory_space<smem>>
    %c0_361 = arith.constant 0 : index
    %c1_362 = arith.constant 1 : index
    %c0_363 = arith.constant 0 : index
    %c0_364 = arith.constant 0 : index
    %c0_365 = arith.constant 0 : index
    %248 = vector.load %arg5[%c0_361, %c1_362, %c0_363, %c0_364, %c0_365] : memref<2x7x1x22x16xf32, #tpu.memory_space<vmem>>, vector<1x1x1x16x16xf32>
    %249 = vector.shape_cast %248 : vector<1x1x1x16x16xf32> to vector<1x16x16xf32>
    %250 = vector.broadcast %247 : f32 to vector<1x16x16xf32>
    %251 = arith.mulf %250, %249 : vector<1x16x16xf32>
    %252 = arith.addf %202, %251 : vector<1x16x16xf32>
    %c8 = arith.constant 8 : index
    %253 = memref.load %arg2[%c8] : memref<99xf32, #tpu.memory_space<smem>>
    %c0_366 = arith.constant 0 : index
    %c1_367 = arith.constant 1 : index
    %c0_368 = arith.constant 0 : index
    %c1_369 = arith.constant 1 : index
    %c0_370 = arith.constant 0 : index
    %254 = vector.load %arg5[%c0_366, %c1_367, %c0_368, %c1_369, %c0_370] : memref<2x7x1x22x16xf32, #tpu.memory_space<vmem>>, vector<1x1x1x16x16xf32>
    %255 = vector.shape_cast %254 : vector<1x1x1x16x16xf32> to vector<1x16x16xf32>
    %256 = vector.broadcast %253 : f32 to vector<1x16x16xf32>
    %257 = arith.mulf %256, %255 : vector<1x16x16xf32>
    %258 = arith.addf %252, %257 : vector<1x16x16xf32>
    %c15_371 = arith.constant 15 : index
    %259 = memref.load %arg2[%c15_371] : memref<99xf32, #tpu.memory_space<smem>>
    %c0_372 = arith.constant 0 : index
    %c1_373 = arith.constant 1 : index
    %c0_374 = arith.constant 0 : index
    %c2_375 = arith.constant 2 : index
    %c0_376 = arith.constant 0 : index
    %260 = vector.load %arg5[%c0_372, %c1_373, %c0_374, %c2_375, %c0_376] : memref<2x7x1x22x16xf32, #tpu.memory_space<vmem>>, vector<1x1x1x16x16xf32>
    %261 = vector.shape_cast %260 : vector<1x1x1x16x16xf32> to vector<1x16x16xf32>
    %262 = vector.broadcast %259 : f32 to vector<1x16x16xf32>
    %263 = arith.mulf %262, %261 : vector<1x16x16xf32>
    %264 = arith.addf %258, %263 : vector<1x16x16xf32>
    %c22 = arith.constant 22 : index
    %265 = memref.load %arg2[%c22] : memref<99xf32, #tpu.memory_space<smem>>
    %c0_377 = arith.constant 0 : index
    %c1_378 = arith.constant 1 : index
    %c0_379 = arith.constant 0 : index
    %c3_380 = arith.constant 3 : index
    %c0_381 = arith.constant 0 : index
    %266 = vector.load %arg5[%c0_377, %c1_378, %c0_379, %c3_380, %c0_381] : memref<2x7x1x22x16xf32, #tpu.memory_space<vmem>>, vector<1x1x1x16x16xf32>
    %267 = vector.shape_cast %266 : vector<1x1x1x16x16xf32> to vector<1x16x16xf32>
    %268 = vector.broadcast %265 : f32 to vector<1x16x16xf32>
    %269 = arith.mulf %268, %267 : vector<1x16x16xf32>
    %270 = arith.addf %264, %269 : vector<1x16x16xf32>
    %c29 = arith.constant 29 : index
    %271 = memref.load %arg2[%c29] : memref<99xf32, #tpu.memory_space<smem>>
    %c0_382 = arith.constant 0 : index
    %c1_383 = arith.constant 1 : index
    %c0_384 = arith.constant 0 : index
    %c4_385 = arith.constant 4 : index
    %c0_386 = arith.constant 0 : index
    %272 = vector.load %arg5[%c0_382, %c1_383, %c0_384, %c4_385, %c0_386] : memref<2x7x1x22x16xf32, #tpu.memory_space<vmem>>, vector<1x1x1x16x16xf32>
    %273 = vector.shape_cast %272 : vector<1x1x1x16x16xf32> to vector<1x16x16xf32>
    %274 = vector.broadcast %271 : f32 to vector<1x16x16xf32>
    %275 = arith.mulf %274, %273 : vector<1x16x16xf32>
    %276 = arith.addf %270, %275 : vector<1x16x16xf32>
    %c36 = arith.constant 36 : index
    %277 = memref.load %arg2[%c36] : memref<99xf32, #tpu.memory_space<smem>>
    %c0_387 = arith.constant 0 : index
    %c1_388 = arith.constant 1 : index
    %c0_389 = arith.constant 0 : index
    %c5_390 = arith.constant 5 : index
    %c0_391 = arith.constant 0 : index
    %278 = vector.load %arg5[%c0_387, %c1_388, %c0_389, %c5_390, %c0_391] : memref<2x7x1x22x16xf32, #tpu.memory_space<vmem>>, vector<1x1x1x16x16xf32>
    %279 = vector.shape_cast %278 : vector<1x1x1x16x16xf32> to vector<1x16x16xf32>
    %280 = vector.broadcast %277 : f32 to vector<1x16x16xf32>
    %281 = arith.mulf %280, %279 : vector<1x16x16xf32>
    %282 = arith.addf %276, %281 : vector<1x16x16xf32>
    %c43 = arith.constant 43 : index
    %283 = memref.load %arg2[%c43] : memref<99xf32, #tpu.memory_space<smem>>
    %c0_392 = arith.constant 0 : index
    %c1_393 = arith.constant 1 : index
    %c0_394 = arith.constant 0 : index
    %c6_395 = arith.constant 6 : index
    %c0_396 = arith.constant 0 : index
    %284 = vector.load %arg5[%c0_392, %c1_393, %c0_394, %c6_395, %c0_396] : memref<2x7x1x22x16xf32, #tpu.memory_space<vmem>>, vector<1x1x1x16x16xf32>
    %285 = vector.shape_cast %284 : vector<1x1x1x16x16xf32> to vector<1x16x16xf32>
    %286 = vector.broadcast %283 : f32 to vector<1x16x16xf32>
    %287 = arith.mulf %286, %285 : vector<1x16x16xf32>
    %288 = arith.addf %282, %287 : vector<1x16x16xf32>
    %c2_397 = arith.constant 2 : index
    %289 = memref.load %arg2[%c2_397] : memref<99xf32, #tpu.memory_space<smem>>
    %c0_398 = arith.constant 0 : index
    %c2_399 = arith.constant 2 : index
    %c0_400 = arith.constant 0 : index
    %c0_401 = arith.constant 0 : index
    %c0_402 = arith.constant 0 : index
    %290 = vector.load %arg5[%c0_398, %c2_399, %c0_400, %c0_401, %c0_402] : memref<2x7x1x22x16xf32, #tpu.memory_space<vmem>>, vector<1x1x1x16x16xf32>
    %291 = vector.shape_cast %290 : vector<1x1x1x16x16xf32> to vector<1x16x16xf32>
    %292 = vector.broadcast %289 : f32 to vector<1x16x16xf32>
    %293 = arith.mulf %292, %291 : vector<1x16x16xf32>
    %294 = arith.addf %246, %293 : vector<1x16x16xf32>
    %c9 = arith.constant 9 : index
    %295 = memref.load %arg2[%c9] : memref<99xf32, #tpu.memory_space<smem>>
    %c0_403 = arith.constant 0 : index
    %c2_404 = arith.constant 2 : index
    %c0_405 = arith.constant 0 : index
    %c1_406 = arith.constant 1 : index
    %c0_407 = arith.constant 0 : index
    %296 = vector.load %arg5[%c0_403, %c2_404, %c0_405, %c1_406, %c0_407] : memref<2x7x1x22x16xf32, #tpu.memory_space<vmem>>, vector<1x1x1x16x16xf32>
    %297 = vector.shape_cast %296 : vector<1x1x1x16x16xf32> to vector<1x16x16xf32>
    %298 = vector.broadcast %295 : f32 to vector<1x16x16xf32>
    %299 = arith.mulf %298, %297 : vector<1x16x16xf32>
    %300 = arith.addf %294, %299 : vector<1x16x16xf32>
    %c16_408 = arith.constant 16 : index
    %301 = memref.load %arg2[%c16_408] : memref<99xf32, #tpu.memory_space<smem>>
    %c0_409 = arith.constant 0 : index
    %c2_410 = arith.constant 2 : index
    %c0_411 = arith.constant 0 : index
    %c2_412 = arith.constant 2 : index
    %c0_413 = arith.constant 0 : index
    %302 = vector.load %arg5[%c0_409, %c2_410, %c0_411, %c2_412, %c0_413] : memref<2x7x1x22x16xf32, #tpu.memory_space<vmem>>, vector<1x1x1x16x16xf32>
    %303 = vector.shape_cast %302 : vector<1x1x1x16x16xf32> to vector<1x16x16xf32>
    %304 = vector.broadcast %301 : f32 to vector<1x16x16xf32>
    %305 = arith.mulf %304, %303 : vector<1x16x16xf32>
    %306 = arith.addf %300, %305 : vector<1x16x16xf32>
    %c23 = arith.constant 23 : index
    %307 = memref.load %arg2[%c23] : memref<99xf32, #tpu.memory_space<smem>>
    %c0_414 = arith.constant 0 : index
    %c2_415 = arith.constant 2 : index
    %c0_416 = arith.constant 0 : index
    %c3_417 = arith.constant 3 : index
    %c0_418 = arith.constant 0 : index
    %308 = vector.load %arg5[%c0_414, %c2_415, %c0_416, %c3_417, %c0_418] : memref<2x7x1x22x16xf32, #tpu.memory_space<vmem>>, vector<1x1x1x16x16xf32>
    %309 = vector.shape_cast %308 : vector<1x1x1x16x16xf32> to vector<1x16x16xf32>
    %310 = vector.broadcast %307 : f32 to vector<1x16x16xf32>
    %311 = arith.mulf %310, %309 : vector<1x16x16xf32>
    %312 = arith.addf %306, %311 : vector<1x16x16xf32>
    %c30 = arith.constant 30 : index
    %313 = memref.load %arg2[%c30] : memref<99xf32, #tpu.memory_space<smem>>
    %c0_419 = arith.constant 0 : index
    %c2_420 = arith.constant 2 : index
    %c0_421 = arith.constant 0 : index
    %c4_422 = arith.constant 4 : index
    %c0_423 = arith.constant 0 : index
    %314 = vector.load %arg5[%c0_419, %c2_420, %c0_421, %c4_422, %c0_423] : memref<2x7x1x22x16xf32, #tpu.memory_space<vmem>>, vector<1x1x1x16x16xf32>
    %315 = vector.shape_cast %314 : vector<1x1x1x16x16xf32> to vector<1x16x16xf32>
    %316 = vector.broadcast %313 : f32 to vector<1x16x16xf32>
    %317 = arith.mulf %316, %315 : vector<1x16x16xf32>
    %318 = arith.addf %312, %317 : vector<1x16x16xf32>
    %c37 = arith.constant 37 : index
    %319 = memref.load %arg2[%c37] : memref<99xf32, #tpu.memory_space<smem>>
    %c0_424 = arith.constant 0 : index
    %c2_425 = arith.constant 2 : index
    %c0_426 = arith.constant 0 : index
    %c5_427 = arith.constant 5 : index
    %c0_428 = arith.constant 0 : index
    %320 = vector.load %arg5[%c0_424, %c2_425, %c0_426, %c5_427, %c0_428] : memref<2x7x1x22x16xf32, #tpu.memory_space<vmem>>, vector<1x1x1x16x16xf32>
    %321 = vector.shape_cast %320 : vector<1x1x1x16x16xf32> to vector<1x16x16xf32>
    %322 = vector.broadcast %319 : f32 to vector<1x16x16xf32>
    %323 = arith.mulf %322, %321 : vector<1x16x16xf32>
    %324 = arith.addf %318, %323 : vector<1x16x16xf32>
    %c44 = arith.constant 44 : index
    %325 = memref.load %arg2[%c44] : memref<99xf32, #tpu.memory_space<smem>>
    %c0_429 = arith.constant 0 : index
    %c2_430 = arith.constant 2 : index
    %c0_431 = arith.constant 0 : index
    %c6_432 = arith.constant 6 : index
    %c0_433 = arith.constant 0 : index
    %326 = vector.load %arg5[%c0_429, %c2_430, %c0_431, %c6_432, %c0_433] : memref<2x7x1x22x16xf32, #tpu.memory_space<vmem>>, vector<1x1x1x16x16xf32>
    %327 = vector.shape_cast %326 : vector<1x1x1x16x16xf32> to vector<1x16x16xf32>
    %328 = vector.broadcast %325 : f32 to vector<1x16x16xf32>
    %329 = arith.mulf %328, %327 : vector<1x16x16xf32>
    %330 = arith.addf %324, %329 : vector<1x16x16xf32>
    %c3_434 = arith.constant 3 : index
    %331 = memref.load %arg2[%c3_434] : memref<99xf32, #tpu.memory_space<smem>>
    %c0_435 = arith.constant 0 : index
    %c3_436 = arith.constant 3 : index
    %c0_437 = arith.constant 0 : index
    %c0_438 = arith.constant 0 : index
    %c0_439 = arith.constant 0 : index
    %332 = vector.load %arg5[%c0_435, %c3_436, %c0_437, %c0_438, %c0_439] : memref<2x7x1x22x16xf32, #tpu.memory_space<vmem>>, vector<1x1x1x16x16xf32>
    %333 = vector.shape_cast %332 : vector<1x1x1x16x16xf32> to vector<1x16x16xf32>
    %334 = vector.broadcast %331 : f32 to vector<1x16x16xf32>
    %335 = arith.mulf %334, %333 : vector<1x16x16xf32>
    %336 = arith.addf %288, %335 : vector<1x16x16xf32>
    %c10 = arith.constant 10 : index
    %337 = memref.load %arg2[%c10] : memref<99xf32, #tpu.memory_space<smem>>
    %c0_440 = arith.constant 0 : index
    %c3_441 = arith.constant 3 : index
    %c0_442 = arith.constant 0 : index
    %c1_443 = arith.constant 1 : index
    %c0_444 = arith.constant 0 : index
    %338 = vector.load %arg5[%c0_440, %c3_441, %c0_442, %c1_443, %c0_444] : memref<2x7x1x22x16xf32, #tpu.memory_space<vmem>>, vector<1x1x1x16x16xf32>
    %339 = vector.shape_cast %338 : vector<1x1x1x16x16xf32> to vector<1x16x16xf32>
    %340 = vector.broadcast %337 : f32 to vector<1x16x16xf32>
    %341 = arith.mulf %340, %339 : vector<1x16x16xf32>
    %342 = arith.addf %336, %341 : vector<1x16x16xf32>
    %c17_445 = arith.constant 17 : index
    %343 = memref.load %arg2[%c17_445] : memref<99xf32, #tpu.memory_space<smem>>
    %c0_446 = arith.constant 0 : index
    %c3_447 = arith.constant 3 : index
    %c0_448 = arith.constant 0 : index
    %c2_449 = arith.constant 2 : index
    %c0_450 = arith.constant 0 : index
    %344 = vector.load %arg5[%c0_446, %c3_447, %c0_448, %c2_449, %c0_450] : memref<2x7x1x22x16xf32, #tpu.memory_space<vmem>>, vector<1x1x1x16x16xf32>
    %345 = vector.shape_cast %344 : vector<1x1x1x16x16xf32> to vector<1x16x16xf32>
    %346 = vector.broadcast %343 : f32 to vector<1x16x16xf32>
    %347 = arith.mulf %346, %345 : vector<1x16x16xf32>
    %348 = arith.addf %342, %347 : vector<1x16x16xf32>
    %c24 = arith.constant 24 : index
    %349 = memref.load %arg2[%c24] : memref<99xf32, #tpu.memory_space<smem>>
    %c0_451 = arith.constant 0 : index
    %c3_452 = arith.constant 3 : index
    %c0_453 = arith.constant 0 : index
    %c3_454 = arith.constant 3 : index
    %c0_455 = arith.constant 0 : index
    %350 = vector.load %arg5[%c0_451, %c3_452, %c0_453, %c3_454, %c0_455] : memref<2x7x1x22x16xf32, #tpu.memory_space<vmem>>, vector<1x1x1x16x16xf32>
    %351 = vector.shape_cast %350 : vector<1x1x1x16x16xf32> to vector<1x16x16xf32>
    %352 = vector.broadcast %349 : f32 to vector<1x16x16xf32>
    %353 = arith.mulf %352, %351 : vector<1x16x16xf32>
    %354 = arith.addf %348, %353 : vector<1x16x16xf32>
    %c31 = arith.constant 31 : index
    %355 = memref.load %arg2[%c31] : memref<99xf32, #tpu.memory_space<smem>>
    %c0_456 = arith.constant 0 : index
    %c3_457 = arith.constant 3 : index
    %c0_458 = arith.constant 0 : index
    %c4_459 = arith.constant 4 : index
    %c0_460 = arith.constant 0 : index
    %356 = vector.load %arg5[%c0_456, %c3_457, %c0_458, %c4_459, %c0_460] : memref<2x7x1x22x16xf32, #tpu.memory_space<vmem>>, vector<1x1x1x16x16xf32>
    %357 = vector.shape_cast %356 : vector<1x1x1x16x16xf32> to vector<1x16x16xf32>
    %358 = vector.broadcast %355 : f32 to vector<1x16x16xf32>
    %359 = arith.mulf %358, %357 : vector<1x16x16xf32>
    %360 = arith.addf %354, %359 : vector<1x16x16xf32>
    %c38 = arith.constant 38 : index
    %361 = memref.load %arg2[%c38] : memref<99xf32, #tpu.memory_space<smem>>
    %c0_461 = arith.constant 0 : index
    %c3_462 = arith.constant 3 : index
    %c0_463 = arith.constant 0 : index
    %c5_464 = arith.constant 5 : index
    %c0_465 = arith.constant 0 : index
    %362 = vector.load %arg5[%c0_461, %c3_462, %c0_463, %c5_464, %c0_465] : memref<2x7x1x22x16xf32, #tpu.memory_space<vmem>>, vector<1x1x1x16x16xf32>
    %363 = vector.shape_cast %362 : vector<1x1x1x16x16xf32> to vector<1x16x16xf32>
    %364 = vector.broadcast %361 : f32 to vector<1x16x16xf32>
    %365 = arith.mulf %364, %363 : vector<1x16x16xf32>
    %366 = arith.addf %360, %365 : vector<1x16x16xf32>
    %c45 = arith.constant 45 : index
    %367 = memref.load %arg2[%c45] : memref<99xf32, #tpu.memory_space<smem>>
    %c0_466 = arith.constant 0 : index
    %c3_467 = arith.constant 3 : index
    %c0_468 = arith.constant 0 : index
    %c6_469 = arith.constant 6 : index
    %c0_470 = arith.constant 0 : index
    %368 = vector.load %arg5[%c0_466, %c3_467, %c0_468, %c6_469, %c0_470] : memref<2x7x1x22x16xf32, #tpu.memory_space<vmem>>, vector<1x1x1x16x16xf32>
    %369 = vector.shape_cast %368 : vector<1x1x1x16x16xf32> to vector<1x16x16xf32>
    %370 = vector.broadcast %367 : f32 to vector<1x16x16xf32>
    %371 = arith.mulf %370, %369 : vector<1x16x16xf32>
    %372 = arith.addf %366, %371 : vector<1x16x16xf32>
    %c4_471 = arith.constant 4 : index
    %373 = memref.load %arg2[%c4_471] : memref<99xf32, #tpu.memory_space<smem>>
    %c0_472 = arith.constant 0 : index
    %c4_473 = arith.constant 4 : index
    %c0_474 = arith.constant 0 : index
    %c0_475 = arith.constant 0 : index
    %c0_476 = arith.constant 0 : index
    %374 = vector.load %arg5[%c0_472, %c4_473, %c0_474, %c0_475, %c0_476] : memref<2x7x1x22x16xf32, #tpu.memory_space<vmem>>, vector<1x1x1x16x16xf32>
    %375 = vector.shape_cast %374 : vector<1x1x1x16x16xf32> to vector<1x16x16xf32>
    %376 = vector.broadcast %373 : f32 to vector<1x16x16xf32>
    %377 = arith.mulf %376, %375 : vector<1x16x16xf32>
    %378 = arith.addf %330, %377 : vector<1x16x16xf32>
    %c11 = arith.constant 11 : index
    %379 = memref.load %arg2[%c11] : memref<99xf32, #tpu.memory_space<smem>>
    %c0_477 = arith.constant 0 : index
    %c4_478 = arith.constant 4 : index
    %c0_479 = arith.constant 0 : index
    %c1_480 = arith.constant 1 : index
    %c0_481 = arith.constant 0 : index
    %380 = vector.load %arg5[%c0_477, %c4_478, %c0_479, %c1_480, %c0_481] : memref<2x7x1x22x16xf32, #tpu.memory_space<vmem>>, vector<1x1x1x16x16xf32>
    %381 = vector.shape_cast %380 : vector<1x1x1x16x16xf32> to vector<1x16x16xf32>
    %382 = vector.broadcast %379 : f32 to vector<1x16x16xf32>
    %383 = arith.mulf %382, %381 : vector<1x16x16xf32>
    %384 = arith.addf %378, %383 : vector<1x16x16xf32>
    %c18 = arith.constant 18 : index
    %385 = memref.load %arg2[%c18] : memref<99xf32, #tpu.memory_space<smem>>
    %c0_482 = arith.constant 0 : index
    %c4_483 = arith.constant 4 : index
    %c0_484 = arith.constant 0 : index
    %c2_485 = arith.constant 2 : index
    %c0_486 = arith.constant 0 : index
    %386 = vector.load %arg5[%c0_482, %c4_483, %c0_484, %c2_485, %c0_486] : memref<2x7x1x22x16xf32, #tpu.memory_space<vmem>>, vector<1x1x1x16x16xf32>
    %387 = vector.shape_cast %386 : vector<1x1x1x16x16xf32> to vector<1x16x16xf32>
    %388 = vector.broadcast %385 : f32 to vector<1x16x16xf32>
    %389 = arith.mulf %388, %387 : vector<1x16x16xf32>
    %390 = arith.addf %384, %389 : vector<1x16x16xf32>
    %c25 = arith.constant 25 : index
    %391 = memref.load %arg2[%c25] : memref<99xf32, #tpu.memory_space<smem>>
    %c0_487 = arith.constant 0 : index
    %c4_488 = arith.constant 4 : index
    %c0_489 = arith.constant 0 : index
    %c3_490 = arith.constant 3 : index
    %c0_491 = arith.constant 0 : index
    %392 = vector.load %arg5[%c0_487, %c4_488, %c0_489, %c3_490, %c0_491] : memref<2x7x1x22x16xf32, #tpu.memory_space<vmem>>, vector<1x1x1x16x16xf32>
    %393 = vector.shape_cast %392 : vector<1x1x1x16x16xf32> to vector<1x16x16xf32>
    %394 = vector.broadcast %391 : f32 to vector<1x16x16xf32>
    %395 = arith.mulf %394, %393 : vector<1x16x16xf32>
    %396 = arith.addf %390, %395 : vector<1x16x16xf32>
    %c32 = arith.constant 32 : index
    %397 = memref.load %arg2[%c32] : memref<99xf32, #tpu.memory_space<smem>>
    %c0_492 = arith.constant 0 : index
    %c4_493 = arith.constant 4 : index
    %c0_494 = arith.constant 0 : index
    %c4_495 = arith.constant 4 : index
    %c0_496 = arith.constant 0 : index
    %398 = vector.load %arg5[%c0_492, %c4_493, %c0_494, %c4_495, %c0_496] : memref<2x7x1x22x16xf32, #tpu.memory_space<vmem>>, vector<1x1x1x16x16xf32>
    %399 = vector.shape_cast %398 : vector<1x1x1x16x16xf32> to vector<1x16x16xf32>
    %400 = vector.broadcast %397 : f32 to vector<1x16x16xf32>
    %401 = arith.mulf %400, %399 : vector<1x16x16xf32>
    %402 = arith.addf %396, %401 : vector<1x16x16xf32>
    %c39 = arith.constant 39 : index
    %403 = memref.load %arg2[%c39] : memref<99xf32, #tpu.memory_space<smem>>
    %c0_497 = arith.constant 0 : index
    %c4_498 = arith.constant 4 : index
    %c0_499 = arith.constant 0 : index
    %c5_500 = arith.constant 5 : index
    %c0_501 = arith.constant 0 : index
    %404 = vector.load %arg5[%c0_497, %c4_498, %c0_499, %c5_500, %c0_501] : memref<2x7x1x22x16xf32, #tpu.memory_space<vmem>>, vector<1x1x1x16x16xf32>
    %405 = vector.shape_cast %404 : vector<1x1x1x16x16xf32> to vector<1x16x16xf32>
    %406 = vector.broadcast %403 : f32 to vector<1x16x16xf32>
    %407 = arith.mulf %406, %405 : vector<1x16x16xf32>
    %408 = arith.addf %402, %407 : vector<1x16x16xf32>
    %c46 = arith.constant 46 : index
    %409 = memref.load %arg2[%c46] : memref<99xf32, #tpu.memory_space<smem>>
    %c0_502 = arith.constant 0 : index
    %c4_503 = arith.constant 4 : index
    %c0_504 = arith.constant 0 : index
    %c6_505 = arith.constant 6 : index
    %c0_506 = arith.constant 0 : index
    %410 = vector.load %arg5[%c0_502, %c4_503, %c0_504, %c6_505, %c0_506] : memref<2x7x1x22x16xf32, #tpu.memory_space<vmem>>, vector<1x1x1x16x16xf32>
    %411 = vector.shape_cast %410 : vector<1x1x1x16x16xf32> to vector<1x16x16xf32>
    %412 = vector.broadcast %409 : f32 to vector<1x16x16xf32>
    %413 = arith.mulf %412, %411 : vector<1x16x16xf32>
    %414 = arith.addf %408, %413 : vector<1x16x16xf32>
    %c5_507 = arith.constant 5 : index
    %415 = memref.load %arg2[%c5_507] : memref<99xf32, #tpu.memory_space<smem>>
    %c0_508 = arith.constant 0 : index
    %c5_509 = arith.constant 5 : index
    %c0_510 = arith.constant 0 : index
    %c0_511 = arith.constant 0 : index
    %c0_512 = arith.constant 0 : index
    %416 = vector.load %arg5[%c0_508, %c5_509, %c0_510, %c0_511, %c0_512] : memref<2x7x1x22x16xf32, #tpu.memory_space<vmem>>, vector<1x1x1x16x16xf32>
    %417 = vector.shape_cast %416 : vector<1x1x1x16x16xf32> to vector<1x16x16xf32>
    %418 = vector.broadcast %415 : f32 to vector<1x16x16xf32>
    %419 = arith.mulf %418, %417 : vector<1x16x16xf32>
    %420 = arith.addf %372, %419 : vector<1x16x16xf32>
    %c12 = arith.constant 12 : index
    %421 = memref.load %arg2[%c12] : memref<99xf32, #tpu.memory_space<smem>>
    %c0_513 = arith.constant 0 : index
    %c5_514 = arith.constant 5 : index
    %c0_515 = arith.constant 0 : index
    %c1_516 = arith.constant 1 : index
    %c0_517 = arith.constant 0 : index
    %422 = vector.load %arg5[%c0_513, %c5_514, %c0_515, %c1_516, %c0_517] : memref<2x7x1x22x16xf32, #tpu.memory_space<vmem>>, vector<1x1x1x16x16xf32>
    %423 = vector.shape_cast %422 : vector<1x1x1x16x16xf32> to vector<1x16x16xf32>
    %424 = vector.broadcast %421 : f32 to vector<1x16x16xf32>
    %425 = arith.mulf %424, %423 : vector<1x16x16xf32>
    %426 = arith.addf %420, %425 : vector<1x16x16xf32>
    %c19_518 = arith.constant 19 : index
    %427 = memref.load %arg2[%c19_518] : memref<99xf32, #tpu.memory_space<smem>>
    %c0_519 = arith.constant 0 : index
    %c5_520 = arith.constant 5 : index
    %c0_521 = arith.constant 0 : index
    %c2_522 = arith.constant 2 : index
    %c0_523 = arith.constant 0 : index
    %428 = vector.load %arg5[%c0_519, %c5_520, %c0_521, %c2_522, %c0_523] : memref<2x7x1x22x16xf32, #tpu.memory_space<vmem>>, vector<1x1x1x16x16xf32>
    %429 = vector.shape_cast %428 : vector<1x1x1x16x16xf32> to vector<1x16x16xf32>
    %430 = vector.broadcast %427 : f32 to vector<1x16x16xf32>
    %431 = arith.mulf %430, %429 : vector<1x16x16xf32>
    %432 = arith.addf %426, %431 : vector<1x16x16xf32>
    %c26 = arith.constant 26 : index
    %433 = memref.load %arg2[%c26] : memref<99xf32, #tpu.memory_space<smem>>
    %c0_524 = arith.constant 0 : index
    %c5_525 = arith.constant 5 : index
    %c0_526 = arith.constant 0 : index
    %c3_527 = arith.constant 3 : index
    %c0_528 = arith.constant 0 : index
    %434 = vector.load %arg5[%c0_524, %c5_525, %c0_526, %c3_527, %c0_528] : memref<2x7x1x22x16xf32, #tpu.memory_space<vmem>>, vector<1x1x1x16x16xf32>
    %435 = vector.shape_cast %434 : vector<1x1x1x16x16xf32> to vector<1x16x16xf32>
    %436 = vector.broadcast %433 : f32 to vector<1x16x16xf32>
    %437 = arith.mulf %436, %435 : vector<1x16x16xf32>
    %438 = arith.addf %432, %437 : vector<1x16x16xf32>
    %c33 = arith.constant 33 : index
    %439 = memref.load %arg2[%c33] : memref<99xf32, #tpu.memory_space<smem>>
    %c0_529 = arith.constant 0 : index
    %c5_530 = arith.constant 5 : index
    %c0_531 = arith.constant 0 : index
    %c4_532 = arith.constant 4 : index
    %c0_533 = arith.constant 0 : index
    %440 = vector.load %arg5[%c0_529, %c5_530, %c0_531, %c4_532, %c0_533] : memref<2x7x1x22x16xf32, #tpu.memory_space<vmem>>, vector<1x1x1x16x16xf32>
    %441 = vector.shape_cast %440 : vector<1x1x1x16x16xf32> to vector<1x16x16xf32>
    %442 = vector.broadcast %439 : f32 to vector<1x16x16xf32>
    %443 = arith.mulf %442, %441 : vector<1x16x16xf32>
    %444 = arith.addf %438, %443 : vector<1x16x16xf32>
    %c40 = arith.constant 40 : index
    %445 = memref.load %arg2[%c40] : memref<99xf32, #tpu.memory_space<smem>>
    %c0_534 = arith.constant 0 : index
    %c5_535 = arith.constant 5 : index
    %c0_536 = arith.constant 0 : index
    %c5_537 = arith.constant 5 : index
    %c0_538 = arith.constant 0 : index
    %446 = vector.load %arg5[%c0_534, %c5_535, %c0_536, %c5_537, %c0_538] : memref<2x7x1x22x16xf32, #tpu.memory_space<vmem>>, vector<1x1x1x16x16xf32>
    %447 = vector.shape_cast %446 : vector<1x1x1x16x16xf32> to vector<1x16x16xf32>
    %448 = vector.broadcast %445 : f32 to vector<1x16x16xf32>
    %449 = arith.mulf %448, %447 : vector<1x16x16xf32>
    %450 = arith.addf %444, %449 : vector<1x16x16xf32>
    %c47 = arith.constant 47 : index
    %451 = memref.load %arg2[%c47] : memref<99xf32, #tpu.memory_space<smem>>
    %c0_539 = arith.constant 0 : index
    %c5_540 = arith.constant 5 : index
    %c0_541 = arith.constant 0 : index
    %c6_542 = arith.constant 6 : index
    %c0_543 = arith.constant 0 : index
    %452 = vector.load %arg5[%c0_539, %c5_540, %c0_541, %c6_542, %c0_543] : memref<2x7x1x22x16xf32, #tpu.memory_space<vmem>>, vector<1x1x1x16x16xf32>
    %453 = vector.shape_cast %452 : vector<1x1x1x16x16xf32> to vector<1x16x16xf32>
    %454 = vector.broadcast %451 : f32 to vector<1x16x16xf32>
    %455 = arith.mulf %454, %453 : vector<1x16x16xf32>
    %456 = arith.addf %450, %455 : vector<1x16x16xf32>
    %c6_544 = arith.constant 6 : index
    %457 = memref.load %arg2[%c6_544] : memref<99xf32, #tpu.memory_space<smem>>
    %c0_545 = arith.constant 0 : index
    %c6_546 = arith.constant 6 : index
    %c0_547 = arith.constant 0 : index
    %c0_548 = arith.constant 0 : index
    %c0_549 = arith.constant 0 : index
    %458 = vector.load %arg5[%c0_545, %c6_546, %c0_547, %c0_548, %c0_549] : memref<2x7x1x22x16xf32, #tpu.memory_space<vmem>>, vector<1x1x1x16x16xf32>
    %459 = vector.shape_cast %458 : vector<1x1x1x16x16xf32> to vector<1x16x16xf32>
    %460 = vector.broadcast %457 : f32 to vector<1x16x16xf32>
    %461 = arith.mulf %460, %459 : vector<1x16x16xf32>
    %462 = arith.addf %414, %461 : vector<1x16x16xf32>
    %c13 = arith.constant 13 : index
    %463 = memref.load %arg2[%c13] : memref<99xf32, #tpu.memory_space<smem>>
    %c0_550 = arith.constant 0 : index
    %c6_551 = arith.constant 6 : index
    %c0_552 = arith.constant 0 : index
    %c1_553 = arith.constant 1 : index
    %c0_554 = arith.constant 0 : index
    %464 = vector.load %arg5[%c0_550, %c6_551, %c0_552, %c1_553, %c0_554] : memref<2x7x1x22x16xf32, #tpu.memory_space<vmem>>, vector<1x1x1x16x16xf32>
    %465 = vector.shape_cast %464 : vector<1x1x1x16x16xf32> to vector<1x16x16xf32>
    %466 = vector.broadcast %463 : f32 to vector<1x16x16xf32>
    %467 = arith.mulf %466, %465 : vector<1x16x16xf32>
    %468 = arith.addf %462, %467 : vector<1x16x16xf32>
    %c20_555 = arith.constant 20 : index
    %469 = memref.load %arg2[%c20_555] : memref<99xf32, #tpu.memory_space<smem>>
    %c0_556 = arith.constant 0 : index
    %c6_557 = arith.constant 6 : index
    %c0_558 = arith.constant 0 : index
    %c2_559 = arith.constant 2 : index
    %c0_560 = arith.constant 0 : index
    %470 = vector.load %arg5[%c0_556, %c6_557, %c0_558, %c2_559, %c0_560] : memref<2x7x1x22x16xf32, #tpu.memory_space<vmem>>, vector<1x1x1x16x16xf32>
    %471 = vector.shape_cast %470 : vector<1x1x1x16x16xf32> to vector<1x16x16xf32>
    %472 = vector.broadcast %469 : f32 to vector<1x16x16xf32>
    %473 = arith.mulf %472, %471 : vector<1x16x16xf32>
    %474 = arith.addf %468, %473 : vector<1x16x16xf32>
    %c27 = arith.constant 27 : index
    %475 = memref.load %arg2[%c27] : memref<99xf32, #tpu.memory_space<smem>>
    %c0_561 = arith.constant 0 : index
    %c6_562 = arith.constant 6 : index
    %c0_563 = arith.constant 0 : index
    %c3_564 = arith.constant 3 : index
    %c0_565 = arith.constant 0 : index
    %476 = vector.load %arg5[%c0_561, %c6_562, %c0_563, %c3_564, %c0_565] : memref<2x7x1x22x16xf32, #tpu.memory_space<vmem>>, vector<1x1x1x16x16xf32>
    %477 = vector.shape_cast %476 : vector<1x1x1x16x16xf32> to vector<1x16x16xf32>
    %478 = vector.broadcast %475 : f32 to vector<1x16x16xf32>
    %479 = arith.mulf %478, %477 : vector<1x16x16xf32>
    %480 = arith.addf %474, %479 : vector<1x16x16xf32>
    %c34 = arith.constant 34 : index
    %481 = memref.load %arg2[%c34] : memref<99xf32, #tpu.memory_space<smem>>
    %c0_566 = arith.constant 0 : index
    %c6_567 = arith.constant 6 : index
    %c0_568 = arith.constant 0 : index
    %c4_569 = arith.constant 4 : index
    %c0_570 = arith.constant 0 : index
    %482 = vector.load %arg5[%c0_566, %c6_567, %c0_568, %c4_569, %c0_570] : memref<2x7x1x22x16xf32, #tpu.memory_space<vmem>>, vector<1x1x1x16x16xf32>
    %483 = vector.shape_cast %482 : vector<1x1x1x16x16xf32> to vector<1x16x16xf32>
    %484 = vector.broadcast %481 : f32 to vector<1x16x16xf32>
    %485 = arith.mulf %484, %483 : vector<1x16x16xf32>
    %486 = arith.addf %480, %485 : vector<1x16x16xf32>
    %c41 = arith.constant 41 : index
    %487 = memref.load %arg2[%c41] : memref<99xf32, #tpu.memory_space<smem>>
    %c0_571 = arith.constant 0 : index
    %c6_572 = arith.constant 6 : index
    %c0_573 = arith.constant 0 : index
    %c5_574 = arith.constant 5 : index
    %c0_575 = arith.constant 0 : index
    %488 = vector.load %arg5[%c0_571, %c6_572, %c0_573, %c5_574, %c0_575] : memref<2x7x1x22x16xf32, #tpu.memory_space<vmem>>, vector<1x1x1x16x16xf32>
    %489 = vector.shape_cast %488 : vector<1x1x1x16x16xf32> to vector<1x16x16xf32>
    %490 = vector.broadcast %487 : f32 to vector<1x16x16xf32>
    %491 = arith.mulf %490, %489 : vector<1x16x16xf32>
    %492 = arith.addf %486, %491 : vector<1x16x16xf32>
    %c48 = arith.constant 48 : index
    %493 = memref.load %arg2[%c48] : memref<99xf32, #tpu.memory_space<smem>>
    %c0_576 = arith.constant 0 : index
    %c6_577 = arith.constant 6 : index
    %c0_578 = arith.constant 0 : index
    %c6_579 = arith.constant 6 : index
    %c0_580 = arith.constant 0 : index
    %494 = vector.load %arg5[%c0_576, %c6_577, %c0_578, %c6_579, %c0_580] : memref<2x7x1x22x16xf32, #tpu.memory_space<vmem>>, vector<1x1x1x16x16xf32>
    %495 = vector.shape_cast %494 : vector<1x1x1x16x16xf32> to vector<1x16x16xf32>
    %496 = vector.broadcast %493 : f32 to vector<1x16x16xf32>
    %497 = arith.mulf %496, %495 : vector<1x16x16xf32>
    %498 = arith.addf %492, %497 : vector<1x16x16xf32>
    %c49 = arith.constant 49 : index
    %499 = memref.load %arg2[%c49] : memref<99xf32, #tpu.memory_space<smem>>
    %c1_581 = arith.constant 1 : index
    %c0_582 = arith.constant 0 : index
    %c0_583 = arith.constant 0 : index
    %c0_584 = arith.constant 0 : index
    %c0_585 = arith.constant 0 : index
    %500 = vector.load %arg5[%c1_581, %c0_582, %c0_583, %c0_584, %c0_585] : memref<2x7x1x22x16xf32, #tpu.memory_space<vmem>>, vector<1x1x1x16x16xf32>
    %501 = vector.shape_cast %500 : vector<1x1x1x16x16xf32> to vector<1x16x16xf32>
    %502 = vector.broadcast %499 : f32 to vector<1x16x16xf32>
    %503 = arith.mulf %502, %501 : vector<1x16x16xf32>
    %504 = arith.addf %203, %503 : vector<1x16x16xf32>
    %c56 = arith.constant 56 : index
    %505 = memref.load %arg2[%c56] : memref<99xf32, #tpu.memory_space<smem>>
    %c1_586 = arith.constant 1 : index
    %c0_587 = arith.constant 0 : index
    %c0_588 = arith.constant 0 : index
    %c1_589 = arith.constant 1 : index
    %c0_590 = arith.constant 0 : index
    %506 = vector.load %arg5[%c1_586, %c0_587, %c0_588, %c1_589, %c0_590] : memref<2x7x1x22x16xf32, #tpu.memory_space<vmem>>, vector<1x1x1x16x16xf32>
    %507 = vector.shape_cast %506 : vector<1x1x1x16x16xf32> to vector<1x16x16xf32>
    %508 = vector.broadcast %505 : f32 to vector<1x16x16xf32>
    %509 = arith.mulf %508, %507 : vector<1x16x16xf32>
    %510 = arith.addf %504, %509 : vector<1x16x16xf32>
    %c63 = arith.constant 63 : index
    %511 = memref.load %arg2[%c63] : memref<99xf32, #tpu.memory_space<smem>>
    %c1_591 = arith.constant 1 : index
    %c0_592 = arith.constant 0 : index
    %c0_593 = arith.constant 0 : index
    %c2_594 = arith.constant 2 : index
    %c0_595 = arith.constant 0 : index
    %512 = vector.load %arg5[%c1_591, %c0_592, %c0_593, %c2_594, %c0_595] : memref<2x7x1x22x16xf32, #tpu.memory_space<vmem>>, vector<1x1x1x16x16xf32>
    %513 = vector.shape_cast %512 : vector<1x1x1x16x16xf32> to vector<1x16x16xf32>
    %514 = vector.broadcast %511 : f32 to vector<1x16x16xf32>
    %515 = arith.mulf %514, %513 : vector<1x16x16xf32>
    %516 = arith.addf %510, %515 : vector<1x16x16xf32>
    %c70 = arith.constant 70 : index
    %517 = memref.load %arg2[%c70] : memref<99xf32, #tpu.memory_space<smem>>
    %c1_596 = arith.constant 1 : index
    %c0_597 = arith.constant 0 : index
    %c0_598 = arith.constant 0 : index
    %c3_599 = arith.constant 3 : index
    %c0_600 = arith.constant 0 : index
    %518 = vector.load %arg5[%c1_596, %c0_597, %c0_598, %c3_599, %c0_600] : memref<2x7x1x22x16xf32, #tpu.memory_space<vmem>>, vector<1x1x1x16x16xf32>
    %519 = vector.shape_cast %518 : vector<1x1x1x16x16xf32> to vector<1x16x16xf32>
    %520 = vector.broadcast %517 : f32 to vector<1x16x16xf32>
    %521 = arith.mulf %520, %519 : vector<1x16x16xf32>
    %522 = arith.addf %516, %521 : vector<1x16x16xf32>
    %c77 = arith.constant 77 : index
    %523 = memref.load %arg2[%c77] : memref<99xf32, #tpu.memory_space<smem>>
    %c1_601 = arith.constant 1 : index
    %c0_602 = arith.constant 0 : index
    %c0_603 = arith.constant 0 : index
    %c4_604 = arith.constant 4 : index
    %c0_605 = arith.constant 0 : index
    %524 = vector.load %arg5[%c1_601, %c0_602, %c0_603, %c4_604, %c0_605] : memref<2x7x1x22x16xf32, #tpu.memory_space<vmem>>, vector<1x1x1x16x16xf32>
    %525 = vector.shape_cast %524 : vector<1x1x1x16x16xf32> to vector<1x16x16xf32>
    %526 = vector.broadcast %523 : f32 to vector<1x16x16xf32>
    %527 = arith.mulf %526, %525 : vector<1x16x16xf32>
    %528 = arith.addf %522, %527 : vector<1x16x16xf32>
    %c84 = arith.constant 84 : index
    %529 = memref.load %arg2[%c84] : memref<99xf32, #tpu.memory_space<smem>>
    %c1_606 = arith.constant 1 : index
    %c0_607 = arith.constant 0 : index
    %c0_608 = arith.constant 0 : index
    %c5_609 = arith.constant 5 : index
    %c0_610 = arith.constant 0 : index
    %530 = vector.load %arg5[%c1_606, %c0_607, %c0_608, %c5_609, %c0_610] : memref<2x7x1x22x16xf32, #tpu.memory_space<vmem>>, vector<1x1x1x16x16xf32>
    %531 = vector.shape_cast %530 : vector<1x1x1x16x16xf32> to vector<1x16x16xf32>
    %532 = vector.broadcast %529 : f32 to vector<1x16x16xf32>
    %533 = arith.mulf %532, %531 : vector<1x16x16xf32>
    %534 = arith.addf %528, %533 : vector<1x16x16xf32>
    %c91 = arith.constant 91 : index
    %535 = memref.load %arg2[%c91] : memref<99xf32, #tpu.memory_space<smem>>
    %c1_611 = arith.constant 1 : index
    %c0_612 = arith.constant 0 : index
    %c0_613 = arith.constant 0 : index
    %c6_614 = arith.constant 6 : index
    %c0_615 = arith.constant 0 : index
    %536 = vector.load %arg5[%c1_611, %c0_612, %c0_613, %c6_614, %c0_615] : memref<2x7x1x22x16xf32, #tpu.memory_space<vmem>>, vector<1x1x1x16x16xf32>
    %537 = vector.shape_cast %536 : vector<1x1x1x16x16xf32> to vector<1x16x16xf32>
    %538 = vector.broadcast %535 : f32 to vector<1x16x16xf32>
    %539 = arith.mulf %538, %537 : vector<1x16x16xf32>
    %540 = arith.addf %534, %539 : vector<1x16x16xf32>
    %c50 = arith.constant 50 : index
    %541 = memref.load %arg2[%c50] : memref<99xf32, #tpu.memory_space<smem>>
    %c1_616 = arith.constant 1 : index
    %c1_617 = arith.constant 1 : index
    %c0_618 = arith.constant 0 : index
    %c0_619 = arith.constant 0 : index
    %c0_620 = arith.constant 0 : index
    %542 = vector.load %arg5[%c1_616, %c1_617, %c0_618, %c0_619, %c0_620] : memref<2x7x1x22x16xf32, #tpu.memory_space<vmem>>, vector<1x1x1x16x16xf32>
    %543 = vector.shape_cast %542 : vector<1x1x1x16x16xf32> to vector<1x16x16xf32>
    %544 = vector.broadcast %541 : f32 to vector<1x16x16xf32>
    %545 = arith.mulf %544, %543 : vector<1x16x16xf32>
    %546 = arith.addf %204, %545 : vector<1x16x16xf32>
    %c57 = arith.constant 57 : index
    %547 = memref.load %arg2[%c57] : memref<99xf32, #tpu.memory_space<smem>>
    %c1_621 = arith.constant 1 : index
    %c1_622 = arith.constant 1 : index
    %c0_623 = arith.constant 0 : index
    %c1_624 = arith.constant 1 : index
    %c0_625 = arith.constant 0 : index
    %548 = vector.load %arg5[%c1_621, %c1_622, %c0_623, %c1_624, %c0_625] : memref<2x7x1x22x16xf32, #tpu.memory_space<vmem>>, vector<1x1x1x16x16xf32>
    %549 = vector.shape_cast %548 : vector<1x1x1x16x16xf32> to vector<1x16x16xf32>
    %550 = vector.broadcast %547 : f32 to vector<1x16x16xf32>
    %551 = arith.mulf %550, %549 : vector<1x16x16xf32>
    %552 = arith.addf %546, %551 : vector<1x16x16xf32>
    %c64 = arith.constant 64 : index
    %553 = memref.load %arg2[%c64] : memref<99xf32, #tpu.memory_space<smem>>
    %c1_626 = arith.constant 1 : index
    %c1_627 = arith.constant 1 : index
    %c0_628 = arith.constant 0 : index
    %c2_629 = arith.constant 2 : index
    %c0_630 = arith.constant 0 : index
    %554 = vector.load %arg5[%c1_626, %c1_627, %c0_628, %c2_629, %c0_630] : memref<2x7x1x22x16xf32, #tpu.memory_space<vmem>>, vector<1x1x1x16x16xf32>
    %555 = vector.shape_cast %554 : vector<1x1x1x16x16xf32> to vector<1x16x16xf32>
    %556 = vector.broadcast %553 : f32 to vector<1x16x16xf32>
    %557 = arith.mulf %556, %555 : vector<1x16x16xf32>
    %558 = arith.addf %552, %557 : vector<1x16x16xf32>
    %c71 = arith.constant 71 : index
    %559 = memref.load %arg2[%c71] : memref<99xf32, #tpu.memory_space<smem>>
    %c1_631 = arith.constant 1 : index
    %c1_632 = arith.constant 1 : index
    %c0_633 = arith.constant 0 : index
    %c3_634 = arith.constant 3 : index
    %c0_635 = arith.constant 0 : index
    %560 = vector.load %arg5[%c1_631, %c1_632, %c0_633, %c3_634, %c0_635] : memref<2x7x1x22x16xf32, #tpu.memory_space<vmem>>, vector<1x1x1x16x16xf32>
    %561 = vector.shape_cast %560 : vector<1x1x1x16x16xf32> to vector<1x16x16xf32>
    %562 = vector.broadcast %559 : f32 to vector<1x16x16xf32>
    %563 = arith.mulf %562, %561 : vector<1x16x16xf32>
    %564 = arith.addf %558, %563 : vector<1x16x16xf32>
    %c78 = arith.constant 78 : index
    %565 = memref.load %arg2[%c78] : memref<99xf32, #tpu.memory_space<smem>>
    %c1_636 = arith.constant 1 : index
    %c1_637 = arith.constant 1 : index
    %c0_638 = arith.constant 0 : index
    %c4_639 = arith.constant 4 : index
    %c0_640 = arith.constant 0 : index
    %566 = vector.load %arg5[%c1_636, %c1_637, %c0_638, %c4_639, %c0_640] : memref<2x7x1x22x16xf32, #tpu.memory_space<vmem>>, vector<1x1x1x16x16xf32>
    %567 = vector.shape_cast %566 : vector<1x1x1x16x16xf32> to vector<1x16x16xf32>
    %568 = vector.broadcast %565 : f32 to vector<1x16x16xf32>
    %569 = arith.mulf %568, %567 : vector<1x16x16xf32>
    %570 = arith.addf %564, %569 : vector<1x16x16xf32>
    %c85 = arith.constant 85 : index
    %571 = memref.load %arg2[%c85] : memref<99xf32, #tpu.memory_space<smem>>
    %c1_641 = arith.constant 1 : index
    %c1_642 = arith.constant 1 : index
    %c0_643 = arith.constant 0 : index
    %c5_644 = arith.constant 5 : index
    %c0_645 = arith.constant 0 : index
    %572 = vector.load %arg5[%c1_641, %c1_642, %c0_643, %c5_644, %c0_645] : memref<2x7x1x22x16xf32, #tpu.memory_space<vmem>>, vector<1x1x1x16x16xf32>
    %573 = vector.shape_cast %572 : vector<1x1x1x16x16xf32> to vector<1x16x16xf32>
    %574 = vector.broadcast %571 : f32 to vector<1x16x16xf32>
    %575 = arith.mulf %574, %573 : vector<1x16x16xf32>
    %576 = arith.addf %570, %575 : vector<1x16x16xf32>
    %c92 = arith.constant 92 : index
    %577 = memref.load %arg2[%c92] : memref<99xf32, #tpu.memory_space<smem>>
    %c1_646 = arith.constant 1 : index
    %c1_647 = arith.constant 1 : index
    %c0_648 = arith.constant 0 : index
    %c6_649 = arith.constant 6 : index
    %c0_650 = arith.constant 0 : index
    %578 = vector.load %arg5[%c1_646, %c1_647, %c0_648, %c6_649, %c0_650] : memref<2x7x1x22x16xf32, #tpu.memory_space<vmem>>, vector<1x1x1x16x16xf32>
    %579 = vector.shape_cast %578 : vector<1x1x1x16x16xf32> to vector<1x16x16xf32>
    %580 = vector.broadcast %577 : f32 to vector<1x16x16xf32>
    %581 = arith.mulf %580, %579 : vector<1x16x16xf32>
    %582 = arith.addf %576, %581 : vector<1x16x16xf32>
    %c51 = arith.constant 51 : index
    %583 = memref.load %arg2[%c51] : memref<99xf32, #tpu.memory_space<smem>>
    %c1_651 = arith.constant 1 : index
    %c2_652 = arith.constant 2 : index
    %c0_653 = arith.constant 0 : index
    %c0_654 = arith.constant 0 : index
    %c0_655 = arith.constant 0 : index
    %584 = vector.load %arg5[%c1_651, %c2_652, %c0_653, %c0_654, %c0_655] : memref<2x7x1x22x16xf32, #tpu.memory_space<vmem>>, vector<1x1x1x16x16xf32>
    %585 = vector.shape_cast %584 : vector<1x1x1x16x16xf32> to vector<1x16x16xf32>
    %586 = vector.broadcast %583 : f32 to vector<1x16x16xf32>
    %587 = arith.mulf %586, %585 : vector<1x16x16xf32>
    %588 = arith.addf %540, %587 : vector<1x16x16xf32>
    %c58 = arith.constant 58 : index
    %589 = memref.load %arg2[%c58] : memref<99xf32, #tpu.memory_space<smem>>
    %c1_656 = arith.constant 1 : index
    %c2_657 = arith.constant 2 : index
    %c0_658 = arith.constant 0 : index
    %c1_659 = arith.constant 1 : index
    %c0_660 = arith.constant 0 : index
    %590 = vector.load %arg5[%c1_656, %c2_657, %c0_658, %c1_659, %c0_660] : memref<2x7x1x22x16xf32, #tpu.memory_space<vmem>>, vector<1x1x1x16x16xf32>
    %591 = vector.shape_cast %590 : vector<1x1x1x16x16xf32> to vector<1x16x16xf32>
    %592 = vector.broadcast %589 : f32 to vector<1x16x16xf32>
    %593 = arith.mulf %592, %591 : vector<1x16x16xf32>
    %594 = arith.addf %588, %593 : vector<1x16x16xf32>
    %c65 = arith.constant 65 : index
    %595 = memref.load %arg2[%c65] : memref<99xf32, #tpu.memory_space<smem>>
    %c1_661 = arith.constant 1 : index
    %c2_662 = arith.constant 2 : index
    %c0_663 = arith.constant 0 : index
    %c2_664 = arith.constant 2 : index
    %c0_665 = arith.constant 0 : index
    %596 = vector.load %arg5[%c1_661, %c2_662, %c0_663, %c2_664, %c0_665] : memref<2x7x1x22x16xf32, #tpu.memory_space<vmem>>, vector<1x1x1x16x16xf32>
    %597 = vector.shape_cast %596 : vector<1x1x1x16x16xf32> to vector<1x16x16xf32>
    %598 = vector.broadcast %595 : f32 to vector<1x16x16xf32>
    %599 = arith.mulf %598, %597 : vector<1x16x16xf32>
    %600 = arith.addf %594, %599 : vector<1x16x16xf32>
    %c72 = arith.constant 72 : index
    %601 = memref.load %arg2[%c72] : memref<99xf32, #tpu.memory_space<smem>>
    %c1_666 = arith.constant 1 : index
    %c2_667 = arith.constant 2 : index
    %c0_668 = arith.constant 0 : index
    %c3_669 = arith.constant 3 : index
    %c0_670 = arith.constant 0 : index
    %602 = vector.load %arg5[%c1_666, %c2_667, %c0_668, %c3_669, %c0_670] : memref<2x7x1x22x16xf32, #tpu.memory_space<vmem>>, vector<1x1x1x16x16xf32>
    %603 = vector.shape_cast %602 : vector<1x1x1x16x16xf32> to vector<1x16x16xf32>
    %604 = vector.broadcast %601 : f32 to vector<1x16x16xf32>
    %605 = arith.mulf %604, %603 : vector<1x16x16xf32>
    %606 = arith.addf %600, %605 : vector<1x16x16xf32>
    %c79 = arith.constant 79 : index
    %607 = memref.load %arg2[%c79] : memref<99xf32, #tpu.memory_space<smem>>
    %c1_671 = arith.constant 1 : index
    %c2_672 = arith.constant 2 : index
    %c0_673 = arith.constant 0 : index
    %c4_674 = arith.constant 4 : index
    %c0_675 = arith.constant 0 : index
    %608 = vector.load %arg5[%c1_671, %c2_672, %c0_673, %c4_674, %c0_675] : memref<2x7x1x22x16xf32, #tpu.memory_space<vmem>>, vector<1x1x1x16x16xf32>
    %609 = vector.shape_cast %608 : vector<1x1x1x16x16xf32> to vector<1x16x16xf32>
    %610 = vector.broadcast %607 : f32 to vector<1x16x16xf32>
    %611 = arith.mulf %610, %609 : vector<1x16x16xf32>
    %612 = arith.addf %606, %611 : vector<1x16x16xf32>
    %c86 = arith.constant 86 : index
    %613 = memref.load %arg2[%c86] : memref<99xf32, #tpu.memory_space<smem>>
    %c1_676 = arith.constant 1 : index
    %c2_677 = arith.constant 2 : index
    %c0_678 = arith.constant 0 : index
    %c5_679 = arith.constant 5 : index
    %c0_680 = arith.constant 0 : index
    %614 = vector.load %arg5[%c1_676, %c2_677, %c0_678, %c5_679, %c0_680] : memref<2x7x1x22x16xf32, #tpu.memory_space<vmem>>, vector<1x1x1x16x16xf32>
    %615 = vector.shape_cast %614 : vector<1x1x1x16x16xf32> to vector<1x16x16xf32>
    %616 = vector.broadcast %613 : f32 to vector<1x16x16xf32>
    %617 = arith.mulf %616, %615 : vector<1x16x16xf32>
    %618 = arith.addf %612, %617 : vector<1x16x16xf32>
    %c93 = arith.constant 93 : index
    %619 = memref.load %arg2[%c93] : memref<99xf32, #tpu.memory_space<smem>>
    %c1_681 = arith.constant 1 : index
    %c2_682 = arith.constant 2 : index
    %c0_683 = arith.constant 0 : index
    %c6_684 = arith.constant 6 : index
    %c0_685 = arith.constant 0 : index
    %620 = vector.load %arg5[%c1_681, %c2_682, %c0_683, %c6_684, %c0_685] : memref<2x7x1x22x16xf32, #tpu.memory_space<vmem>>, vector<1x1x1x16x16xf32>
    %621 = vector.shape_cast %620 : vector<1x1x1x16x16xf32> to vector<1x16x16xf32>
    %622 = vector.broadcast %619 : f32 to vector<1x16x16xf32>
    %623 = arith.mulf %622, %621 : vector<1x16x16xf32>
    %624 = arith.addf %618, %623 : vector<1x16x16xf32>
    %c52 = arith.constant 52 : index
    %625 = memref.load %arg2[%c52] : memref<99xf32, #tpu.memory_space<smem>>
    %c1_686 = arith.constant 1 : index
    %c3_687 = arith.constant 3 : index
    %c0_688 = arith.constant 0 : index
    %c0_689 = arith.constant 0 : index
    %c0_690 = arith.constant 0 : index
    %626 = vector.load %arg5[%c1_686, %c3_687, %c0_688, %c0_689, %c0_690] : memref<2x7x1x22x16xf32, #tpu.memory_space<vmem>>, vector<1x1x1x16x16xf32>
    %627 = vector.shape_cast %626 : vector<1x1x1x16x16xf32> to vector<1x16x16xf32>
    %628 = vector.broadcast %625 : f32 to vector<1x16x16xf32>
    %629 = arith.mulf %628, %627 : vector<1x16x16xf32>
    %630 = arith.addf %582, %629 : vector<1x16x16xf32>
    %c59 = arith.constant 59 : index
    %631 = memref.load %arg2[%c59] : memref<99xf32, #tpu.memory_space<smem>>
    %c1_691 = arith.constant 1 : index
    %c3_692 = arith.constant 3 : index
    %c0_693 = arith.constant 0 : index
    %c1_694 = arith.constant 1 : index
    %c0_695 = arith.constant 0 : index
    %632 = vector.load %arg5[%c1_691, %c3_692, %c0_693, %c1_694, %c0_695] : memref<2x7x1x22x16xf32, #tpu.memory_space<vmem>>, vector<1x1x1x16x16xf32>
    %633 = vector.shape_cast %632 : vector<1x1x1x16x16xf32> to vector<1x16x16xf32>
    %634 = vector.broadcast %631 : f32 to vector<1x16x16xf32>
    %635 = arith.mulf %634, %633 : vector<1x16x16xf32>
    %636 = arith.addf %630, %635 : vector<1x16x16xf32>
    %c66 = arith.constant 66 : index
    %637 = memref.load %arg2[%c66] : memref<99xf32, #tpu.memory_space<smem>>
    %c1_696 = arith.constant 1 : index
    %c3_697 = arith.constant 3 : index
    %c0_698 = arith.constant 0 : index
    %c2_699 = arith.constant 2 : index
    %c0_700 = arith.constant 0 : index
    %638 = vector.load %arg5[%c1_696, %c3_697, %c0_698, %c2_699, %c0_700] : memref<2x7x1x22x16xf32, #tpu.memory_space<vmem>>, vector<1x1x1x16x16xf32>
    %639 = vector.shape_cast %638 : vector<1x1x1x16x16xf32> to vector<1x16x16xf32>
    %640 = vector.broadcast %637 : f32 to vector<1x16x16xf32>
    %641 = arith.mulf %640, %639 : vector<1x16x16xf32>
    %642 = arith.addf %636, %641 : vector<1x16x16xf32>
    %c73 = arith.constant 73 : index
    %643 = memref.load %arg2[%c73] : memref<99xf32, #tpu.memory_space<smem>>
    %c1_701 = arith.constant 1 : index
    %c3_702 = arith.constant 3 : index
    %c0_703 = arith.constant 0 : index
    %c3_704 = arith.constant 3 : index
    %c0_705 = arith.constant 0 : index
    %644 = vector.load %arg5[%c1_701, %c3_702, %c0_703, %c3_704, %c0_705] : memref<2x7x1x22x16xf32, #tpu.memory_space<vmem>>, vector<1x1x1x16x16xf32>
    %645 = vector.shape_cast %644 : vector<1x1x1x16x16xf32> to vector<1x16x16xf32>
    %646 = vector.broadcast %643 : f32 to vector<1x16x16xf32>
    %647 = arith.mulf %646, %645 : vector<1x16x16xf32>
    %648 = arith.addf %642, %647 : vector<1x16x16xf32>
    %c80 = arith.constant 80 : index
    %649 = memref.load %arg2[%c80] : memref<99xf32, #tpu.memory_space<smem>>
    %c1_706 = arith.constant 1 : index
    %c3_707 = arith.constant 3 : index
    %c0_708 = arith.constant 0 : index
    %c4_709 = arith.constant 4 : index
    %c0_710 = arith.constant 0 : index
    %650 = vector.load %arg5[%c1_706, %c3_707, %c0_708, %c4_709, %c0_710] : memref<2x7x1x22x16xf32, #tpu.memory_space<vmem>>, vector<1x1x1x16x16xf32>
    %651 = vector.shape_cast %650 : vector<1x1x1x16x16xf32> to vector<1x16x16xf32>
    %652 = vector.broadcast %649 : f32 to vector<1x16x16xf32>
    %653 = arith.mulf %652, %651 : vector<1x16x16xf32>
    %654 = arith.addf %648, %653 : vector<1x16x16xf32>
    %c87 = arith.constant 87 : index
    %655 = memref.load %arg2[%c87] : memref<99xf32, #tpu.memory_space<smem>>
    %c1_711 = arith.constant 1 : index
    %c3_712 = arith.constant 3 : index
    %c0_713 = arith.constant 0 : index
    %c5_714 = arith.constant 5 : index
    %c0_715 = arith.constant 0 : index
    %656 = vector.load %arg5[%c1_711, %c3_712, %c0_713, %c5_714, %c0_715] : memref<2x7x1x22x16xf32, #tpu.memory_space<vmem>>, vector<1x1x1x16x16xf32>
    %657 = vector.shape_cast %656 : vector<1x1x1x16x16xf32> to vector<1x16x16xf32>
    %658 = vector.broadcast %655 : f32 to vector<1x16x16xf32>
    %659 = arith.mulf %658, %657 : vector<1x16x16xf32>
    %660 = arith.addf %654, %659 : vector<1x16x16xf32>
    %c94 = arith.constant 94 : index
    %661 = memref.load %arg2[%c94] : memref<99xf32, #tpu.memory_space<smem>>
    %c1_716 = arith.constant 1 : index
    %c3_717 = arith.constant 3 : index
    %c0_718 = arith.constant 0 : index
    %c6_719 = arith.constant 6 : index
    %c0_720 = arith.constant 0 : index
    %662 = vector.load %arg5[%c1_716, %c3_717, %c0_718, %c6_719, %c0_720] : memref<2x7x1x22x16xf32, #tpu.memory_space<vmem>>, vector<1x1x1x16x16xf32>
    %663 = vector.shape_cast %662 : vector<1x1x1x16x16xf32> to vector<1x16x16xf32>
    %664 = vector.broadcast %661 : f32 to vector<1x16x16xf32>
    %665 = arith.mulf %664, %663 : vector<1x16x16xf32>
    %666 = arith.addf %660, %665 : vector<1x16x16xf32>
    %c53 = arith.constant 53 : index
    %667 = memref.load %arg2[%c53] : memref<99xf32, #tpu.memory_space<smem>>
    %c1_721 = arith.constant 1 : index
    %c4_722 = arith.constant 4 : index
    %c0_723 = arith.constant 0 : index
    %c0_724 = arith.constant 0 : index
    %c0_725 = arith.constant 0 : index
    %668 = vector.load %arg5[%c1_721, %c4_722, %c0_723, %c0_724, %c0_725] : memref<2x7x1x22x16xf32, #tpu.memory_space<vmem>>, vector<1x1x1x16x16xf32>
    %669 = vector.shape_cast %668 : vector<1x1x1x16x16xf32> to vector<1x16x16xf32>
    %670 = vector.broadcast %667 : f32 to vector<1x16x16xf32>
    %671 = arith.mulf %670, %669 : vector<1x16x16xf32>
    %672 = arith.addf %624, %671 : vector<1x16x16xf32>
    %c60 = arith.constant 60 : index
    %673 = memref.load %arg2[%c60] : memref<99xf32, #tpu.memory_space<smem>>
    %c1_726 = arith.constant 1 : index
    %c4_727 = arith.constant 4 : index
    %c0_728 = arith.constant 0 : index
    %c1_729 = arith.constant 1 : index
    %c0_730 = arith.constant 0 : index
    %674 = vector.load %arg5[%c1_726, %c4_727, %c0_728, %c1_729, %c0_730] : memref<2x7x1x22x16xf32, #tpu.memory_space<vmem>>, vector<1x1x1x16x16xf32>
    %675 = vector.shape_cast %674 : vector<1x1x1x16x16xf32> to vector<1x16x16xf32>
    %676 = vector.broadcast %673 : f32 to vector<1x16x16xf32>
    %677 = arith.mulf %676, %675 : vector<1x16x16xf32>
    %678 = arith.addf %672, %677 : vector<1x16x16xf32>
    %c67 = arith.constant 67 : index
    %679 = memref.load %arg2[%c67] : memref<99xf32, #tpu.memory_space<smem>>
    %c1_731 = arith.constant 1 : index
    %c4_732 = arith.constant 4 : index
    %c0_733 = arith.constant 0 : index
    %c2_734 = arith.constant 2 : index
    %c0_735 = arith.constant 0 : index
    %680 = vector.load %arg5[%c1_731, %c4_732, %c0_733, %c2_734, %c0_735] : memref<2x7x1x22x16xf32, #tpu.memory_space<vmem>>, vector<1x1x1x16x16xf32>
    %681 = vector.shape_cast %680 : vector<1x1x1x16x16xf32> to vector<1x16x16xf32>
    %682 = vector.broadcast %679 : f32 to vector<1x16x16xf32>
    %683 = arith.mulf %682, %681 : vector<1x16x16xf32>
    %684 = arith.addf %678, %683 : vector<1x16x16xf32>
    %c74 = arith.constant 74 : index
    %685 = memref.load %arg2[%c74] : memref<99xf32, #tpu.memory_space<smem>>
    %c1_736 = arith.constant 1 : index
    %c4_737 = arith.constant 4 : index
    %c0_738 = arith.constant 0 : index
    %c3_739 = arith.constant 3 : index
    %c0_740 = arith.constant 0 : index
    %686 = vector.load %arg5[%c1_736, %c4_737, %c0_738, %c3_739, %c0_740] : memref<2x7x1x22x16xf32, #tpu.memory_space<vmem>>, vector<1x1x1x16x16xf32>
    %687 = vector.shape_cast %686 : vector<1x1x1x16x16xf32> to vector<1x16x16xf32>
    %688 = vector.broadcast %685 : f32 to vector<1x16x16xf32>
    %689 = arith.mulf %688, %687 : vector<1x16x16xf32>
    %690 = arith.addf %684, %689 : vector<1x16x16xf32>
    %c81 = arith.constant 81 : index
    %691 = memref.load %arg2[%c81] : memref<99xf32, #tpu.memory_space<smem>>
    %c1_741 = arith.constant 1 : index
    %c4_742 = arith.constant 4 : index
    %c0_743 = arith.constant 0 : index
    %c4_744 = arith.constant 4 : index
    %c0_745 = arith.constant 0 : index
    %692 = vector.load %arg5[%c1_741, %c4_742, %c0_743, %c4_744, %c0_745] : memref<2x7x1x22x16xf32, #tpu.memory_space<vmem>>, vector<1x1x1x16x16xf32>
    %693 = vector.shape_cast %692 : vector<1x1x1x16x16xf32> to vector<1x16x16xf32>
    %694 = vector.broadcast %691 : f32 to vector<1x16x16xf32>
    %695 = arith.mulf %694, %693 : vector<1x16x16xf32>
    %696 = arith.addf %690, %695 : vector<1x16x16xf32>
    %c88 = arith.constant 88 : index
    %697 = memref.load %arg2[%c88] : memref<99xf32, #tpu.memory_space<smem>>
    %c1_746 = arith.constant 1 : index
    %c4_747 = arith.constant 4 : index
    %c0_748 = arith.constant 0 : index
    %c5_749 = arith.constant 5 : index
    %c0_750 = arith.constant 0 : index
    %698 = vector.load %arg5[%c1_746, %c4_747, %c0_748, %c5_749, %c0_750] : memref<2x7x1x22x16xf32, #tpu.memory_space<vmem>>, vector<1x1x1x16x16xf32>
    %699 = vector.shape_cast %698 : vector<1x1x1x16x16xf32> to vector<1x16x16xf32>
    %700 = vector.broadcast %697 : f32 to vector<1x16x16xf32>
    %701 = arith.mulf %700, %699 : vector<1x16x16xf32>
    %702 = arith.addf %696, %701 : vector<1x16x16xf32>
    %c95 = arith.constant 95 : index
    %703 = memref.load %arg2[%c95] : memref<99xf32, #tpu.memory_space<smem>>
    %c1_751 = arith.constant 1 : index
    %c4_752 = arith.constant 4 : index
    %c0_753 = arith.constant 0 : index
    %c6_754 = arith.constant 6 : index
    %c0_755 = arith.constant 0 : index
    %704 = vector.load %arg5[%c1_751, %c4_752, %c0_753, %c6_754, %c0_755] : memref<2x7x1x22x16xf32, #tpu.memory_space<vmem>>, vector<1x1x1x16x16xf32>
    %705 = vector.shape_cast %704 : vector<1x1x1x16x16xf32> to vector<1x16x16xf32>
    %706 = vector.broadcast %703 : f32 to vector<1x16x16xf32>
    %707 = arith.mulf %706, %705 : vector<1x16x16xf32>
    %708 = arith.addf %702, %707 : vector<1x16x16xf32>
    %c54 = arith.constant 54 : index
    %709 = memref.load %arg2[%c54] : memref<99xf32, #tpu.memory_space<smem>>
    %c1_756 = arith.constant 1 : index
    %c5_757 = arith.constant 5 : index
    %c0_758 = arith.constant 0 : index
    %c0_759 = arith.constant 0 : index
    %c0_760 = arith.constant 0 : index
    %710 = vector.load %arg5[%c1_756, %c5_757, %c0_758, %c0_759, %c0_760] : memref<2x7x1x22x16xf32, #tpu.memory_space<vmem>>, vector<1x1x1x16x16xf32>
    %711 = vector.shape_cast %710 : vector<1x1x1x16x16xf32> to vector<1x16x16xf32>
    %712 = vector.broadcast %709 : f32 to vector<1x16x16xf32>
    %713 = arith.mulf %712, %711 : vector<1x16x16xf32>
    %714 = arith.addf %666, %713 : vector<1x16x16xf32>
    %c61 = arith.constant 61 : index
    %715 = memref.load %arg2[%c61] : memref<99xf32, #tpu.memory_space<smem>>
    %c1_761 = arith.constant 1 : index
    %c5_762 = arith.constant 5 : index
    %c0_763 = arith.constant 0 : index
    %c1_764 = arith.constant 1 : index
    %c0_765 = arith.constant 0 : index
    %716 = vector.load %arg5[%c1_761, %c5_762, %c0_763, %c1_764, %c0_765] : memref<2x7x1x22x16xf32, #tpu.memory_space<vmem>>, vector<1x1x1x16x16xf32>
    %717 = vector.shape_cast %716 : vector<1x1x1x16x16xf32> to vector<1x16x16xf32>
    %718 = vector.broadcast %715 : f32 to vector<1x16x16xf32>
    %719 = arith.mulf %718, %717 : vector<1x16x16xf32>
    %720 = arith.addf %714, %719 : vector<1x16x16xf32>
    %c68 = arith.constant 68 : index
    %721 = memref.load %arg2[%c68] : memref<99xf32, #tpu.memory_space<smem>>
    %c1_766 = arith.constant 1 : index
    %c5_767 = arith.constant 5 : index
    %c0_768 = arith.constant 0 : index
    %c2_769 = arith.constant 2 : index
    %c0_770 = arith.constant 0 : index
    %722 = vector.load %arg5[%c1_766, %c5_767, %c0_768, %c2_769, %c0_770] : memref<2x7x1x22x16xf32, #tpu.memory_space<vmem>>, vector<1x1x1x16x16xf32>
    %723 = vector.shape_cast %722 : vector<1x1x1x16x16xf32> to vector<1x16x16xf32>
    %724 = vector.broadcast %721 : f32 to vector<1x16x16xf32>
    %725 = arith.mulf %724, %723 : vector<1x16x16xf32>
    %726 = arith.addf %720, %725 : vector<1x16x16xf32>
    %c75 = arith.constant 75 : index
    %727 = memref.load %arg2[%c75] : memref<99xf32, #tpu.memory_space<smem>>
    %c1_771 = arith.constant 1 : index
    %c5_772 = arith.constant 5 : index
    %c0_773 = arith.constant 0 : index
    %c3_774 = arith.constant 3 : index
    %c0_775 = arith.constant 0 : index
    %728 = vector.load %arg5[%c1_771, %c5_772, %c0_773, %c3_774, %c0_775] : memref<2x7x1x22x16xf32, #tpu.memory_space<vmem>>, vector<1x1x1x16x16xf32>
    %729 = vector.shape_cast %728 : vector<1x1x1x16x16xf32> to vector<1x16x16xf32>
    %730 = vector.broadcast %727 : f32 to vector<1x16x16xf32>
    %731 = arith.mulf %730, %729 : vector<1x16x16xf32>
    %732 = arith.addf %726, %731 : vector<1x16x16xf32>
    %c82 = arith.constant 82 : index
    %733 = memref.load %arg2[%c82] : memref<99xf32, #tpu.memory_space<smem>>
    %c1_776 = arith.constant 1 : index
    %c5_777 = arith.constant 5 : index
    %c0_778 = arith.constant 0 : index
    %c4_779 = arith.constant 4 : index
    %c0_780 = arith.constant 0 : index
    %734 = vector.load %arg5[%c1_776, %c5_777, %c0_778, %c4_779, %c0_780] : memref<2x7x1x22x16xf32, #tpu.memory_space<vmem>>, vector<1x1x1x16x16xf32>
    %735 = vector.shape_cast %734 : vector<1x1x1x16x16xf32> to vector<1x16x16xf32>
    %736 = vector.broadcast %733 : f32 to vector<1x16x16xf32>
    %737 = arith.mulf %736, %735 : vector<1x16x16xf32>
    %738 = arith.addf %732, %737 : vector<1x16x16xf32>
    %c89 = arith.constant 89 : index
    %739 = memref.load %arg2[%c89] : memref<99xf32, #tpu.memory_space<smem>>
    %c1_781 = arith.constant 1 : index
    %c5_782 = arith.constant 5 : index
    %c0_783 = arith.constant 0 : index
    %c5_784 = arith.constant 5 : index
    %c0_785 = arith.constant 0 : index
    %740 = vector.load %arg5[%c1_781, %c5_782, %c0_783, %c5_784, %c0_785] : memref<2x7x1x22x16xf32, #tpu.memory_space<vmem>>, vector<1x1x1x16x16xf32>
    %741 = vector.shape_cast %740 : vector<1x1x1x16x16xf32> to vector<1x16x16xf32>
    %742 = vector.broadcast %739 : f32 to vector<1x16x16xf32>
    %743 = arith.mulf %742, %741 : vector<1x16x16xf32>
    %744 = arith.addf %738, %743 : vector<1x16x16xf32>
    %c96 = arith.constant 96 : index
    %745 = memref.load %arg2[%c96] : memref<99xf32, #tpu.memory_space<smem>>
    %c1_786 = arith.constant 1 : index
    %c5_787 = arith.constant 5 : index
    %c0_788 = arith.constant 0 : index
    %c6_789 = arith.constant 6 : index
    %c0_790 = arith.constant 0 : index
    %746 = vector.load %arg5[%c1_786, %c5_787, %c0_788, %c6_789, %c0_790] : memref<2x7x1x22x16xf32, #tpu.memory_space<vmem>>, vector<1x1x1x16x16xf32>
    %747 = vector.shape_cast %746 : vector<1x1x1x16x16xf32> to vector<1x16x16xf32>
    %748 = vector.broadcast %745 : f32 to vector<1x16x16xf32>
    %749 = arith.mulf %748, %747 : vector<1x16x16xf32>
    %750 = arith.addf %744, %749 : vector<1x16x16xf32>
    %c55 = arith.constant 55 : index
    %751 = memref.load %arg2[%c55] : memref<99xf32, #tpu.memory_space<smem>>
    %c1_791 = arith.constant 1 : index
    %c6_792 = arith.constant 6 : index
    %c0_793 = arith.constant 0 : index
    %c0_794 = arith.constant 0 : index
    %c0_795 = arith.constant 0 : index
    %752 = vector.load %arg5[%c1_791, %c6_792, %c0_793, %c0_794, %c0_795] : memref<2x7x1x22x16xf32, #tpu.memory_space<vmem>>, vector<1x1x1x16x16xf32>
    %753 = vector.shape_cast %752 : vector<1x1x1x16x16xf32> to vector<1x16x16xf32>
    %754 = vector.broadcast %751 : f32 to vector<1x16x16xf32>
    %755 = arith.mulf %754, %753 : vector<1x16x16xf32>
    %756 = arith.addf %708, %755 : vector<1x16x16xf32>
    %c62 = arith.constant 62 : index
    %757 = memref.load %arg2[%c62] : memref<99xf32, #tpu.memory_space<smem>>
    %c1_796 = arith.constant 1 : index
    %c6_797 = arith.constant 6 : index
    %c0_798 = arith.constant 0 : index
    %c1_799 = arith.constant 1 : index
    %c0_800 = arith.constant 0 : index
    %758 = vector.load %arg5[%c1_796, %c6_797, %c0_798, %c1_799, %c0_800] : memref<2x7x1x22x16xf32, #tpu.memory_space<vmem>>, vector<1x1x1x16x16xf32>
    %759 = vector.shape_cast %758 : vector<1x1x1x16x16xf32> to vector<1x16x16xf32>
    %760 = vector.broadcast %757 : f32 to vector<1x16x16xf32>
    %761 = arith.mulf %760, %759 : vector<1x16x16xf32>
    %762 = arith.addf %756, %761 : vector<1x16x16xf32>
    %c69 = arith.constant 69 : index
    %763 = memref.load %arg2[%c69] : memref<99xf32, #tpu.memory_space<smem>>
    %c1_801 = arith.constant 1 : index
    %c6_802 = arith.constant 6 : index
    %c0_803 = arith.constant 0 : index
    %c2_804 = arith.constant 2 : index
    %c0_805 = arith.constant 0 : index
    %764 = vector.load %arg5[%c1_801, %c6_802, %c0_803, %c2_804, %c0_805] : memref<2x7x1x22x16xf32, #tpu.memory_space<vmem>>, vector<1x1x1x16x16xf32>
    %765 = vector.shape_cast %764 : vector<1x1x1x16x16xf32> to vector<1x16x16xf32>
    %766 = vector.broadcast %763 : f32 to vector<1x16x16xf32>
    %767 = arith.mulf %766, %765 : vector<1x16x16xf32>
    %768 = arith.addf %762, %767 : vector<1x16x16xf32>
    %c76 = arith.constant 76 : index
    %769 = memref.load %arg2[%c76] : memref<99xf32, #tpu.memory_space<smem>>
    %c1_806 = arith.constant 1 : index
    %c6_807 = arith.constant 6 : index
    %c0_808 = arith.constant 0 : index
    %c3_809 = arith.constant 3 : index
    %c0_810 = arith.constant 0 : index
    %770 = vector.load %arg5[%c1_806, %c6_807, %c0_808, %c3_809, %c0_810] : memref<2x7x1x22x16xf32, #tpu.memory_space<vmem>>, vector<1x1x1x16x16xf32>
    %771 = vector.shape_cast %770 : vector<1x1x1x16x16xf32> to vector<1x16x16xf32>
    %772 = vector.broadcast %769 : f32 to vector<1x16x16xf32>
    %773 = arith.mulf %772, %771 : vector<1x16x16xf32>
    %774 = arith.addf %768, %773 : vector<1x16x16xf32>
    %c83 = arith.constant 83 : index
    %775 = memref.load %arg2[%c83] : memref<99xf32, #tpu.memory_space<smem>>
    %c1_811 = arith.constant 1 : index
    %c6_812 = arith.constant 6 : index
    %c0_813 = arith.constant 0 : index
    %c4_814 = arith.constant 4 : index
    %c0_815 = arith.constant 0 : index
    %776 = vector.load %arg5[%c1_811, %c6_812, %c0_813, %c4_814, %c0_815] : memref<2x7x1x22x16xf32, #tpu.memory_space<vmem>>, vector<1x1x1x16x16xf32>
    %777 = vector.shape_cast %776 : vector<1x1x1x16x16xf32> to vector<1x16x16xf32>
    %778 = vector.broadcast %775 : f32 to vector<1x16x16xf32>
    %779 = arith.mulf %778, %777 : vector<1x16x16xf32>
    %780 = arith.addf %774, %779 : vector<1x16x16xf32>
    %c90 = arith.constant 90 : index
    %781 = memref.load %arg2[%c90] : memref<99xf32, #tpu.memory_space<smem>>
    %c1_816 = arith.constant 1 : index
    %c6_817 = arith.constant 6 : index
    %c0_818 = arith.constant 0 : index
    %c5_819 = arith.constant 5 : index
    %c0_820 = arith.constant 0 : index
    %782 = vector.load %arg5[%c1_816, %c6_817, %c0_818, %c5_819, %c0_820] : memref<2x7x1x22x16xf32, #tpu.memory_space<vmem>>, vector<1x1x1x16x16xf32>
    %783 = vector.shape_cast %782 : vector<1x1x1x16x16xf32> to vector<1x16x16xf32>
    %784 = vector.broadcast %781 : f32 to vector<1x16x16xf32>
    %785 = arith.mulf %784, %783 : vector<1x16x16xf32>
    %786 = arith.addf %780, %785 : vector<1x16x16xf32>
    %c97 = arith.constant 97 : index
    %787 = memref.load %arg2[%c97] : memref<99xf32, #tpu.memory_space<smem>>
    %c1_821 = arith.constant 1 : index
    %c6_822 = arith.constant 6 : index
    %c0_823 = arith.constant 0 : index
    %c6_824 = arith.constant 6 : index
    %c0_825 = arith.constant 0 : index
    %788 = vector.load %arg5[%c1_821, %c6_822, %c0_823, %c6_824, %c0_825] : memref<2x7x1x22x16xf32, #tpu.memory_space<vmem>>, vector<1x1x1x16x16xf32>
    %789 = vector.shape_cast %788 : vector<1x1x1x16x16xf32> to vector<1x16x16xf32>
    %790 = vector.broadcast %787 : f32 to vector<1x16x16xf32>
    %791 = arith.mulf %790, %789 : vector<1x16x16xf32>
    %792 = arith.addf %786, %791 : vector<1x16x16xf32>
    %793 = arith.addf %498, %456 : vector<1x16x16xf32>
    %794 = arith.addf %792, %750 : vector<1x16x16xf32>
    %795 = arith.addf %793, %794 : vector<1x16x16xf32>
    %c98 = arith.constant 98 : index
    %796 = memref.load %arg2[%c98] : memref<99xf32, #tpu.memory_space<smem>>
    %797 = vector.broadcast %796 : f32 to vector<1x16x16xf32>
    %798 = arith.addf %795, %797 : vector<1x16x16xf32>
    %c0_826 = arith.constant 0 : index
    %c0_827 = arith.constant 0 : index
    %c0_828 = arith.constant 0 : index
    %799 = vector.load %arg3[%c0_826, %c0_827, %c0_828] : memref<1x16x16xf32, #tpu.memory_space<vmem>>, vector<1x16x16xf32>
    tpu.vector_store %arg3[%c0_826, %c0_827, %c0_828], %798 {strides = array<i32>} : memref<1x16x16xf32, #tpu.memory_space<vmem>>, vector<1x16x16xf32>,
    return
  }
  func.func @transform_0(%arg0: i32) -> (i32, i32, i32, i32) {
    %c0_i32 = arith.constant 0 : i32
    %c0_i32_0 = arith.constant 0 : i32
    %c0_i32_1 = arith.constant 0 : i32
    %c0_i32_2 = arith.constant 0 : i32
    return %arg0, %c0_i32, %c0_i32_0, %c0_i32_1 : i32, i32, i32, i32
  }
  func.func @transform_1(%arg0: i32) -> i32 {
    %c0_i32 = arith.constant 0 : i32
    %c0_i32_0 = arith.constant 0 : i32
    return %c0_i32 : i32
  }
  func.func @transform_2(%arg0: i32) -> (i32, i32, i32) {
    %c0_i32 = arith.constant 0 : i32
    %c0_i32_0 = arith.constant 0 : i32
    %c0_i32_1 = arith.constant 0 : i32
    return %arg0, %c0_i32, %c0_i32_0 : i32, i32, i32
  }
}

</mosaic_0001>

<llo_original>
// kernel: tpu_custom_call.1
$region0: #{tpu_custom_call.1}
  #allocation0 [shape = 'u32[]', space=smem, size = 0x4, offset = 0x4, fixed_abs, tag = 'smem constant byte address 0x4 - core index']
  #allocation1 [shape = 'u32[144,128]{1,0:T(1,128)}', space=vmem, size = 0x12000, scoped, tag = 'internal scratch']
  #allocation2 [shape = 'f32[2,1,22,22]{3,2,1,0:T(8,128)}', space=vmem, size = 0x6000, scoped, tag = 'scratch operand']
  #allocation3 [shape = 'f32[2,7,1,22,16]{4,3,2,1,0:T(8,128)}', space=vmem, size = 0x2a000, scoped, tag = 'scratch operand']
  %s0 = inlined_call_operand.hbm [shape: f32[2,4,16,16], index: 0, kind: input, shape index: {}]
  %s1 = inlined_call_operand.vmem [shape: f32[99], index: 1, kind: input, shape index: {}]
  %s2 = inlined_call_operand.hbm [shape: f32[2,16,16], index: 2, kind: output, shape index: {}]
  %s3 = sld [smem:[#allocation0]]
  $region49: #{tpu_custom_call.1} parent=0
    _
  %s5 = ssub.s32 1, %s3
  %s6 = scalar_select 0, %s5, %s3
  $region1: #{tpu_custom_call.1} parent=0
    #allocation4 [shape = 'u8[65536]{0}', space=vmem, size = 0x10000, scoped, tag = 'input window, operand 0']
    #allocation5 [shape = 's32[2]{0}', space=sflag, size = 0x8, scoped, tag = 'scoped memory for tpu_custom_call.1']
    #allocation6 [shape = 's32[2]{0}', space=sflag, size = 0x8, scoped, tag = 'scoped memory for tpu_custom_call.1']
    #allocation7 [shape = 's32[2]{0}', space=sflag, size = 0x8, scoped, tag = 'scoped memory for tpu_custom_call.1']
    #allocation8 [shape = 'u8[512]{0}', space=smem, size = 0x200, scoped, tag = 'input window, operand 1, single buffered']
    #allocation9 [shape = 'u8[16384]{0}', space=vmem, size = 0x4000, scoped, tag = 'output window, operand 0']
    %7 = vsyncpa [#allocation5], 0
    %s8 = scalar_lea.sflag [#allocation5], 1
    %9 = vsyncpa %s8, 0
    %10 = vsyncpa [#allocation7], 0
    %11 = vsyncpa [#allocation6], 0
    %s12 = scalar_lea.sflag [#allocation6], 1
    %13 = vsyncpa %s12, 0
    loop: start=0, step=1, limit=4
    $region2: #{tpu_custom_call.1} parent=1 // loop_pre_header
      _
    $region3: #{tpu_custom_call.1} parent=1 // loop_header
      %s15 = sphi 0, %s19
      %p16 = scmp.ge.s32.totalorder %s15, 4
      %s25 = sphi 0, %s27
      %s28 = sphi 0, %s25
      %s29 = sphi 0, %s28
      %s45 = sphi 0, %s29
      %s49 = sphi 0, %s49
      %s51 = sphi 0, %s49
      %s52 = sphi 0, %s51
      %s66 = sphi 0, %s52
      %s72 = sphi 0, %s74
      %s75 = sphi 0, %s72
      %s76 = sphi 0, %s75
      %s92 = sphi 0, %s76
    $region4: #{tpu_custom_call.1} parent=1 // loop_header_branch
      %18 = sbr.rel (%p16) target = $region8
    $region5: #{tpu_custom_call.1} parent=1 // loop_body
      %s20 = ssub.s32 %s15, 1
      %s21 = ssub.s32 %s15, 2
      %s22 = sadd.s32 %s15, 1
      %s23 = ssub.s32 %s15, %s22
      %p24 = scmp.eq.s32.totalorder %s23, 0
      %s26 = sadd.s32 %s25, 1
      %s27 = scalar_select %p24, %s25, %s26
      %p30 = pneg %p24
      %p31 = scmp.eq.s32.totalorder %s15, 1
      %p32 = por %p30, %p31
      %p33 = scmp.ne.s32.totalorder %s25, %s28
      %p34 = scmp.eq.s32.totalorder %s15, 0
      %p35 = por %p33, %p34
      %p36 = scmp.ne.s32.totalorder %s25, %s28
      %p37 = scmp.eq.s32.totalorder %s20, 1
      %p38 = por %p36, %p37
      %p39 = scmp.ne.s32.totalorder %s28, %s29
      %p40 = scmp.eq.s32.totalorder %s20, 0
      %p41 = por %p39, %p40
      %p42 = scmp.ne.s32.totalorder %s28, %s29
      %p43 = scmp.eq.s32.totalorder %s21, 1
      %p44 = por %p42, %p43
      %p46 = scmp.ne.s32.totalorder %s29, %s45
      %p47 = scmp.eq.s32.totalorder %s21, 0
      %p48 = por %p46, %p47
      %s50 = sadd.s32 %s49, 1
      %p53 = scmp.eq.s32.totalorder %s15, 1
      %p54 = scmp.ne.s32.totalorder %s49, %s51
      %p55 = scmp.eq.s32.totalorder %s15, 0
      %p56 = por %p54, %p55
      %p57 = scmp.ne.s32.totalorder %s49, %s51
      %p58 = scmp.eq.s32.totalorder %s20, 1
      %p59 = por %p57, %p58
      %p60 = scmp.ne.s32.totalorder %s51, %s52
      %p61 = scmp.eq.s32.totalorder %s20, 0
      %p62 = por %p60, %p61
      %p63 = scmp.ne.s32.totalorder %s51, %s52
      %p64 = scmp.eq.s32.totalorder %s21, 1
      %p65 = por %p63, %p64
      %p67 = scmp.ne.s32.totalorder %s52, %s66
      %p68 = scmp.eq.s32.totalorder %s21, 0
      %p69 = por %p67, %p68
      %s70 = ssub.s32 %s15, %s22
      %p71 = scmp.eq.s32.totalorder %s70, 0
      %s73 = sadd.s32 %s72, 1
      %s74 = scalar_select %p71, %s72, %s73
      %p77 = pneg %p71
      %p78 = scmp.eq.s32.totalorder %s15, 1
      %p79 = por %p77, %p78
      %p80 = scmp.ne.s32.totalorder %s72, %s75
      %p81 = scmp.eq.s32.totalorder %s15, 0
      %p82 = por %p80, %p81
      %p83 = scmp.ne.s32.totalorder %s72, %s75
      %p84 = scmp.eq.s32.totalorder %s20, 1
      %p85 = por %p83, %p84
      %p86 = scmp.ne.s32.totalorder %s75, %s76
      %p87 = scmp.eq.s32.totalorder %s20, 0
      %p88 = por %p86, %p87
      %p89 = scmp.ne.s32.totalorder %s75, %s76
      %p90 = scmp.eq.s32.totalorder %s21, 1
      %p91 = por %p89, %p90
      %p93 = scmp.ne.s32.totalorder %s76, %s92
      %p94 = scmp.eq.s32.totalorder %s21, 0
      %p95 = por %p93, %p94
      %p96 = scmp.le.s32.totalorder 1, %s15
      %p97 = scmp.lt.s32.totalorder %s15, 3
      %p98 = pnand %p96, %p97
      %p99 = pneg %p98
      // Predicated region
      $region9: #{tpu_custom_call.1} parent=5 // pred_check
        _
      $region10: #{tpu_custom_call.1} parent=5 // pred_check_branch
        %101 = sbr.rel (%p98) target = $region12
      $region11: #{tpu_custom_call.1} parent=5 // pred_region
        %s102 = ssub.s32 %s15, 1
        // Predicated region
        $region13: #{tpu_custom_call.1} parent=11 // pred_check
          %p103 = pneg %p62
        $region14: #{tpu_custom_call.1} parent=11 // pred_check_branch
          %105 = sbr.rel (%p103) target = $region16
        $region15: #{tpu_custom_call.1} parent=11 // pred_region
          %s107 = ssub.s32 16, 16
          %108 = vsyncadd [#allocation7], %s107
          %s110 = sshll.u32 %s1, 4
          %s111 = int_to_ptr.vmem [resolvable:$true] %s110
          %113 = dma.vmem_to_smem %s111, 16, [#allocation8], [#allocation7]
        $region16: #{tpu_custom_call.1} parent=11 // pred_fallthru
          _
      $region12: #{tpu_custom_call.1} parent=5 // pred_fallthru
        _
      %p114 = scmp.lt.s32.totalorder %s15, 2
      // Predicated region
      $region17: #{tpu_custom_call.1} parent=5 // pred_check
        %p115 = pneg %p114
      $region18: #{tpu_custom_call.1} parent=5 // pred_check_branch
        %117 = sbr.rel (%p115) target = $region20
      $region19: #{tpu_custom_call.1} parent=5 // pred_region
        // Predicated region
        $region21: #{tpu_custom_call.1} parent=19 // pred_check
          %p118 = pneg %p35
        $region22: #{tpu_custom_call.1} parent=19 // pred_check_branch
          %120 = sbr.rel (%p118) target = $region24
        $region23: #{tpu_custom_call.1} parent=19 // pred_region
          %s121 = sand.u32 %s25, 1
          %s122 = scalar_lea.sflag [#allocation5], %s121
          %s123 = sand.u32 %s25, 1
          %s124 = smul.addr %s123, 64
          %s125 = scalar_lea.vmem [#allocation4], %s124
          %s127 = ssub.s32 1024, 1024
          %128 = vsyncadd %s122, %s127
          %s129 = smul.addr %s15, 8
          %s130 = smul.addr %s129, 128
          %s131 = scalar_lea.hbm %s0, %s130
          %s132 = sshll.u32 %s125, 4
          %s133 = int_to_ptr.vmem [resolvable:$true] %s132
          %138 = dma.hbm_to_vmem [thread:$0]  %s131, 1024, %s133, %s122, 128, 128, 8
        $region24: #{tpu_custom_call.1} parent=19 // pred_fallthru
          _
      $region20: #{tpu_custom_call.1} parent=5 // pred_fallthru
        _
      %p139 = scmp.le.s32.totalorder 1, %s15
      %p140 = scmp.lt.s32.totalorder %s15, 3
      %p141 = pnand %p139, %p140
      %p142 = pneg %p141
      // Predicated region
      $region25: #{tpu_custom_call.1} parent=5 // pred_check
        _
      $region26: #{tpu_custom_call.1} parent=5 // pred_check_branch
        %144 = sbr.rel (%p141) target = $region28
      $region27: #{tpu_custom_call.1} parent=5 // pred_region
        %s145 = ssub.s32 %s15, 1
        %s146 = sand.u32 %s28, 1
        %s147 = scalar_lea.sflag [#allocation5], %s146
        %s148 = sand.u32 %s28, 1
        %s149 = smul.addr %s148, 64
        %s150 = scalar_lea.vmem [#allocation4], %s149
        // Predicated region
        $region29: #{tpu_custom_call.1} parent=27 // pred_check
          %p151 = pneg %p41
        $region30: #{tpu_custom_call.1} parent=27 // pred_check_branch
          %153 = sbr.rel (%p151) target = $region32
        $region31: #{tpu_custom_call.1} parent=27 // pred_region
          %154 = dma.done %s147, 1024
        $region32: #{tpu_custom_call.1} parent=27 // pred_fallthru
          _
        // Predicated region
        $region33: #{tpu_custom_call.1} parent=27 // pred_check
          %p155 = pneg %p62
        $region34: #{tpu_custom_call.1} parent=27 // pred_check_branch
          %157 = sbr.rel (%p155) target = $region36
        $region35: #{tpu_custom_call.1} parent=27 // pred_region
          %158 = dma.done [#allocation7], 16
        $region36: #{tpu_custom_call.1} parent=27 // pred_fallthru
          _
        %159 = sfence
        %s160 = sand.u32 %s28, 1
        %s161 = scalar_lea.sflag [#allocation5], %s160
        %s162 = sand.u32 %s28, 1
        %s163 = smul.addr %s162, 64
        %s164 = scalar_lea.vmem [#allocation4], %s163
        %p165 = pneg %p41
        %p166 = pneg %p38
        %p167 = pneg %p62
        %p168 = pneg %p59
        %p169 = pneg %p88
        %p170 = pneg %p85
        %s171 = sand.u32 %s75, 1
        %s172 = scalar_lea.sflag [#allocation6], %s171
        %s173 = sand.u32 %s75, 1
        %s174 = smul.addr %s173, 16
        %s175 = scalar_lea.vmem [#allocation9], %s174
        %v176 = vld [vmem:[%s150] sm:$0xff]
        %v177 = vld [vmem:[%s150 + $0x8] sm:$0xff]
        %v178 = vld [vmem:[%s150 + $0x10] sm:$0xff]
        %v179 = vld [vmem:[%s150 + $0x18] sm:$0xff]
        %v180 = vld [vmem:[%s150 + $0x20] sm:$0xff]
        %v181 = vld [vmem:[%s150 + $0x28] sm:$0xff]
        %v182 = vld [vmem:[%s150 + $0x30] sm:$0xff]
        %v183 = vld [vmem:[%s150 + $0x38] sm:$0xff]
        %vm184 = vcmask 130048
        %v185 = vsel %vm184, %v176, 0.0
        %v186 = vsel %vm184, %v178, 0.0
        %v187 = vadd.f32 %v185, %v186
        %v188 = vsel %vm184, %v180, 0.0
        %v189 = vadd.f32 %v187, %v188
        %v190 = vsel %vm184, %v182, 0.0
        %v191 = vadd.f32 %v189, %v190
        %v192 = vsel %vm184, %v177, 0.0
        %v193 = vsel %vm184, %v179, 0.0
        %v194 = vadd.f32 %v192, %v193
        %v195 = vsel %vm184, %v181, 0.0
        %v196 = vadd.f32 %v194, %v195
        %v197 = vsel %vm184, %v183, 0.0
        %v198 = vadd.f32 %v196, %v197
        %v199 = vsel %vm184, %v176, -inf
        %v200 = vsel %vm184, %v178, -inf
        %v201 = vsel %vm184, %v180, -inf
        %v202 = vmax.f32 %v199, %v201
        %v203 = vsel %vm184, %v182, -inf
        %v204 = vmax.f32 %v200, %v203
        %v205 = vmax.f32 %v202, %v204
        %v206 = vsel %vm184, %v177, -inf
        %v207 = vsel %vm184, %v179, -inf
        %v208 = vsel %vm184, %v181, -inf
        %v209 = vmax.f32 %v206, %v208
        %v210 = vsel %vm184, %v183, -inf
        %v211 = vmax.f32 %v207, %v210
        %v212 = vmax.f32 %v209, %v211
        %v213 = vmul.f32 %v191, 0.25
        %v214 = vmul.f32 %v198, 0.25
        %217 = vrot.lane.b32.xlu0 %v213, 3
        %v218 = vpop.permute.xlu0 %217
        %219 = vrot.lane.b32.xlu0 %v214, 3
        %v220 = vpop.permute.xlu0 %219
        %vm223 = vcmask 154648
        %224 = vst.msk [vmem:[#allocation2 + $0x3] sm:$0xff] %vm223, %v218
        %225 = vst.msk [vmem:[#allocation2 + $0xb] sm:$0xff] %vm223, %v220
        %v226 = vld [vmem:[#allocation2 + $0x4] sm:$0x1]
        %vm227 = vcmask 147480
        %228 = vst.msk [vmem:[#allocation2 + $0x2] sm:$0x1] %vm227, %v226
        %v229 = vld [vmem:[#allocation2 + $0x11] sm:$0x1]
        %230 = vst.msk [vmem:[#allocation2 + $0x13] sm:$0x1] %vm227, %v229
        %v231 = vld [vmem:[#allocation2 + $0x5] sm:$0x1]
        %232 = vst.msk [vmem:[#allocation2 + $0x1] sm:$0x1] %vm227, %v231
        %v233 = vld [vmem:[#allocation2 + $0x10] sm:$0x1]
        %234 = vst.msk [vmem:[#allocation2 + $0x14] sm:$0x1] %vm227, %v233
        %v235 = vld [vmem:[#allocation2 + $0x6] sm:$0x1]
        %236 = vst.msk [vmem:[#allocation2] sm:$0x1] %vm227, %v235
        %v237 = vld [vmem:[#allocation2 + $0xf] sm:$0x1]
        %238 = vst.msk [vmem:[#allocation2 + $0x15] sm:$0x1] %vm227, %v237
        %v239 = vld [vmem:[#allocation2] sm:$0xff]
        %v240 = vld [vmem:[#allocation2 + $0x8] sm:$0xff]
        %v241 = vld [vmem:[#allocation2 + $0x10] sm:$0x3f]
        %245 = vrot.lane.b32.xlu0 %v239, 126
        %v246 = vpop.permute.xlu0 %245
        %247 = vrot.lane.b32.xlu0 %v240, 126
        %v248 = vpop.permute.xlu0 %247
        %249 = vrot.lane.b32.xlu0 %v241, 126
        %v250 = vpop.permute.xlu0 %249
        %vm254 = vcmask 23568
        %255 = vst.msk [vmem:[#allocation2] sm:$0xff] %vm254, %v246
        %256 = vst.msk [vmem:[#allocation2 + $0x8] sm:$0xff] %vm254, %v248
        %vm257 = vcmask 21520
        %258 = vst.msk [vmem:[#allocation2 + $0x10] sm:$0x3f] %vm257, %v250
        %v259 = vld [vmem:[#allocation2] sm:$0xff]
        %v260 = vld [vmem:[#allocation2 + $0x8] sm:$0xff]
        %v261 = vld [vmem:[#allocation2 + $0x10] sm:$0x3f]
        %265 = vrot.lane.b32.xlu0 %v259, 2
        %v266 = vpop.permute.xlu0 %265
        %267 = vrot.lane.b32.xlu0 %v260, 2
        %v268 = vpop.permute.xlu0 %267
        %269 = vrot.lane.b32.xlu0 %v261, 2
        %v270 = vpop.permute.xlu0 %269
        %vm274 = vcmask 162968
        %275 = vst.msk [vmem:[#allocation2] sm:$0xff] %vm274, %v266
        %276 = vst.msk [vmem:[#allocation2 + $0x8] sm:$0xff] %vm274, %v268
        %vm277 = vcmask 160920
        %278 = vst.msk [vmem:[#allocation2 + $0x10] sm:$0x3f] %vm277, %v270
        %v279 = vld [vmem:[#allocation2] sm:$0xff]
        %v280 = vld [vmem:[#allocation2 + $0x8] sm:$0xff]
        %v281 = vld [vmem:[#allocation2 + $0x10] sm:$0x3f]
        %285 = vrot.lane.b32.xlu0 %v279, 124
        %v286 = vpop.permute.xlu0 %285
        %287 = vrot.lane.b32.xlu0 %v280, 124
        %v288 = vpop.permute.xlu0 %287
        %289 = vrot.lane.b32.xlu0 %v281, 124
        %v290 = vpop.permute.xlu0 %289
        %vm294 = vcmask 15368
        %295 = vst.msk [vmem:[#allocation2] sm:$0xff] %vm294, %v286
        %296 = vst.msk [vmem:[#allocation2 + $0x8] sm:$0xff] %vm294, %v288
        %vm297 = vcmask 13320
        %298 = vst.msk [vmem:[#allocation2 + $0x10] sm:$0x3f] %vm297, %v290
        %v299 = vld [vmem:[#allocation2] sm:$0xff]
        %v300 = vld [vmem:[#allocation2 + $0x8] sm:$0xff]
        %v301 = vld [vmem:[#allocation2 + $0x10] sm:$0x3f]
        %305 = vrot.lane.b32.xlu0 %v299, 4
        %v306 = vpop.permute.xlu0 %305
        %307 = vrot.lane.b32.xlu0 %v300, 4
        %v308 = vpop.permute.xlu0 %307
        %309 = vrot.lane.b32.xlu0 %v301, 4
        %v310 = vpop.permute.xlu0 %309
        %vm314 = vcmask 171168
        %315 = vst.msk [vmem:[#allocation2] sm:$0xff] %vm314, %v306
        %316 = vst.msk [vmem:[#allocation2 + $0x8] sm:$0xff] %vm314, %v308
        %vm317 = vcmask 169120
        %318 = vst.msk [vmem:[#allocation2 + $0x10] sm:$0x3f] %vm317, %v310
        %v319 = vld [vmem:[#allocation2] sm:$0xff]
        %v320 = vld [vmem:[#allocation2 + $0x8] sm:$0xff]
        %v321 = vld [vmem:[#allocation2 + $0x10] sm:$0x3f]
        %325 = vrot.lane.b32.xlu0 %v319, 122
        %v326 = vpop.permute.xlu0 %325
        %327 = vrot.lane.b32.xlu0 %v320, 122
        %v328 = vpop.permute.xlu0 %327
        %329 = vrot.lane.b32.xlu0 %v321, 122
        %v330 = vpop.permute.xlu0 %329
        %vm334 = vcmask 7168
        %335 = vst.msk [vmem:[#allocation2] sm:$0xff] %vm334, %v326
        %336 = vst.msk [vmem:[#allocation2 + $0x8] sm:$0xff] %vm334, %v328
        %vm337 = vcmask 5120
        %338 = vst.msk [vmem:[#allocation2 + $0x10] sm:$0x3f] %vm337, %v330
        %v339 = vld [vmem:[#allocation2] sm:$0xff]
        %v340 = vld [vmem:[#allocation2 + $0x8] sm:$0xff]
        %v341 = vld [vmem:[#allocation2 + $0x10] sm:$0x3f]
        %345 = vrot.lane.b32.xlu0 %v339, 6
        %v346 = vpop.permute.xlu0 %345
        %347 = vrot.lane.b32.xlu0 %v340, 6
        %v348 = vpop.permute.xlu0 %347
        %349 = vrot.lane.b32.xlu0 %v341, 6
        %v350 = vpop.permute.xlu0 %349
        %vm354 = vcmask 179368
        %355 = vst.msk [vmem:[#allocation2] sm:$0xff] %vm354, %v346
        %356 = vst.msk [vmem:[#allocation2 + $0x8] sm:$0xff] %vm354, %v348
        %vm357 = vcmask 177320
        %358 = vst.msk [vmem:[#allocation2 + $0x10] sm:$0x3f] %vm357, %v350
        %361 = vrot.lane.b32.xlu0 %v205, 3
        %v362 = vpop.permute.xlu0 %361
        %363 = vrot.lane.b32.xlu0 %v212, 3
        %v364 = vpop.permute.xlu0 %363
        %s367 = scalar_lea.vmem [#allocation2], 24
        %368 = vst.msk [vmem:[%s367 + $0x3] sm:$0xff] %vm223, %v362
        %369 = vst.msk [vmem:[%s367 + $0xb] sm:$0xff] %vm223, %v364
        %v370 = vld [vmem:[%s367 + $0x4] sm:$0x1]
        %371 = vst.msk [vmem:[%s367 + $0x2] sm:$0x1] %vm227, %v370
        %v372 = vld [vmem:[%s367 + $0x11] sm:$0x1]
        %373 = vst.msk [vmem:[%s367 + $0x13] sm:$0x1] %vm227, %v372
        %v374 = vld [vmem:[%s367 + $0x5] sm:$0x1]
        %375 = vst.msk [vmem:[%s367 + $0x1] sm:$0x1] %vm227, %v374
        %v376 = vld [vmem:[%s367 + $0x10] sm:$0x1]
        %377 = vst.msk [vmem:[%s367 + $0x14] sm:$0x1] %vm227, %v376
        %v378 = vld [vmem:[%s367 + $0x6] sm:$0x1]
        %379 = vst.msk [vmem:[%s367] sm:$0x1] %vm227, %v378
        %v380 = vld [vmem:[%s367 + $0xf] sm:$0x1]
        %381 = vst.msk [vmem:[%s367 + $0x15] sm:$0x1] %vm227, %v380
        %v382 = vld [vmem:[%s367] sm:$0xff]
        %v383 = vld [vmem:[%s367 + $0x8] sm:$0xff]
        %v384 = vld [vmem:[%s367 + $0x10] sm:$0x3f]
        %388 = vrot.lane.b32.xlu0 %v382, 126
        %v389 = vpop.permute.xlu0 %388
        %390 = vrot.lane.b32.xlu0 %v383, 126
        %v391 = vpop.permute.xlu0 %390
        %392 = vrot.lane.b32.xlu0 %v384, 126
        %v393 = vpop.permute.xlu0 %392
        %397 = vst.msk [vmem:[%s367] sm:$0xff] %vm254, %v389
        %398 = vst.msk [vmem:[%s367 + $0x8] sm:$0xff] %vm254, %v391
        %399 = vst.msk [vmem:[%s367 + $0x10] sm:$0x3f] %vm257, %v393
        %v400 = vld [vmem:[%s367] sm:$0xff]
        %v401 = vld [vmem:[%s367 + $0x8] sm:$0xff]
        %v402 = vld [vmem:[%s367 + $0x10] sm:$0x3f]
        %406 = vrot.lane.b32.xlu0 %v400, 2
        %v407 = vpop.permute.xlu0 %406
        %408 = vrot.lane.b32.xlu0 %v401, 2
        %v409 = vpop.permute.xlu0 %408
        %410 = vrot.lane.b32.xlu0 %v402, 2
        %v411 = vpop.permute.xlu0 %410
        %415 = vst.msk [vmem:[%s367] sm:$0xff] %vm274, %v407
        %416 = vst.msk [vmem:[%s367 + $0x8] sm:$0xff] %vm274, %v409
        %417 = vst.msk [vmem:[%s367 + $0x10] sm:$0x3f] %vm277, %v411
        %v418 = vld [vmem:[%s367] sm:$0xff]
        %v419 = vld [vmem:[%s367 + $0x8] sm:$0xff]
        %v420 = vld [vmem:[%s367 + $0x10] sm:$0x3f]
        %424 = vrot.lane.b32.xlu0 %v418, 124
        %v425 = vpop.permute.xlu0 %424
        %426 = vrot.lane.b32.xlu0 %v419, 124
        %v427 = vpop.permute.xlu0 %426
        %428 = vrot.lane.b32.xlu0 %v420, 124
        %v429 = vpop.permute.xlu0 %428
        %433 = vst.msk [vmem:[%s367] sm:$0xff] %vm294, %v425
        %434 = vst.msk [vmem:[%s367 + $0x8] sm:$0xff] %vm294, %v427
        %435 = vst.msk [vmem:[%s367 + $0x10] sm:$0x3f] %vm297, %v429
        %v436 = vld [vmem:[%s367] sm:$0xff]
        %v437 = vld [vmem:[%s367 + $0x8] sm:$0xff]
        %v438 = vld [vmem:[%s367 + $0x10] sm:$0x3f]
        %442 = vrot.lane.b32.xlu0 %v436, 4
        %v443 = vpop.permute.xlu0 %442
        %444 = vrot.lane.b32.xlu0 %v437, 4
        %v445 = vpop.permute.xlu0 %444
        %446 = vrot.lane.b32.xlu0 %v438, 4
        %v447 = vpop.permute.xlu0 %446
        %451 = vst.msk [vmem:[%s367] sm:$0xff] %vm314, %v443
        %452 = vst.msk [vmem:[%s367 + $0x8] sm:$0xff] %vm314, %v445
        %453 = vst.msk [vmem:[%s367 + $0x10] sm:$0x3f] %vm317, %v447
        %v454 = vld [vmem:[%s367] sm:$0xff]
        %v455 = vld [vmem:[%s367 + $0x8] sm:$0xff]
        %v456 = vld [vmem:[%s367 + $0x10] sm:$0x3f]
        %460 = vrot.lane.b32.xlu0 %v454, 122
        %v461 = vpop.permute.xlu0 %460
        %462 = vrot.lane.b32.xlu0 %v455, 122
        %v463 = vpop.permute.xlu0 %462
        %464 = vrot.lane.b32.xlu0 %v456, 122
        %v465 = vpop.permute.xlu0 %464
        %469 = vst.msk [vmem:[%s367] sm:$0xff] %vm334, %v461
        %470 = vst.msk [vmem:[%s367 + $0x8] sm:$0xff] %vm334, %v463
        %471 = vst.msk [vmem:[%s367 + $0x10] sm:$0x3f] %vm337, %v465
        %v472 = vld [vmem:[%s367] sm:$0xff]
        %v473 = vld [vmem:[%s367 + $0x8] sm:$0xff]
        %v474 = vld [vmem:[%s367 + $0x10] sm:$0x3f]
        %478 = vrot.lane.b32.xlu0 %v472, 6
        %v479 = vpop.permute.xlu0 %478
        %480 = vrot.lane.b32.xlu0 %v473, 6
        %v481 = vpop.permute.xlu0 %480
        %482 = vrot.lane.b32.xlu0 %v474, 6
        %v483 = vpop.permute.xlu0 %482
        %487 = vst.msk [vmem:[%s367] sm:$0xff] %vm354, %v479
        %488 = vst.msk [vmem:[%s367 + $0x8] sm:$0xff] %vm354, %v481
        %489 = vst.msk [vmem:[%s367 + $0x10] sm:$0x3f] %vm357, %v483
        %v490 = vld [vmem:[#allocation2] sm:$0xff]
        %v491 = vld [vmem:[#allocation2 + $0x8] sm:$0xff]
        %v492 = vld [vmem:[#allocation2 + $0x10] sm:$0x3f]
        %493 = vst.msk [vmem:[#allocation3] sm:$0xff] %vm184, %v490
        %494 = vst.msk [vmem:[#allocation3 + $0x8] sm:$0xff] %vm184, %v491
        %vm495 = vcmask 128000
        %496 = vst.msk [vmem:[#allocation3 + $0x10] sm:$0x3f] %vm495, %v492
        %v497 = vld [vmem:[#allocation2] sm:$0xff]
        %v498 = vld [vmem:[#allocation2 + $0x8] sm:$0xff]
        %v499 = vld [vmem:[#allocation2 + $0x10] sm:$0x3f]
        %503 = vrot.lane.b32.xlu0 %v497, 127
        %v504 = vpop.permute.xlu0 %503
        %505 = vrot.lane.b32.xlu0 %v498, 127
        %v506 = vpop.permute.xlu0 %505
        %507 = vrot.lane.b32.xlu0 %v499, 127
        %v508 = vpop.permute.xlu0 %507
        %s512 = scalar_lea.vmem [#allocation3], 24
        %513 = vst.msk [vmem:[%s512] sm:$0xff] %vm184, %v504
        %514 = vst.msk [vmem:[%s512 + $0x8] sm:$0xff] %vm184, %v506
        %515 = vst.msk [vmem:[%s512 + $0x10] sm:$0x3f] %vm495, %v508
        %v516 = vld [vmem:[#allocation2] sm:$0xff]
        %v517 = vld [vmem:[#allocation2 + $0x8] sm:$0xff]
        %v518 = vld [vmem:[#allocation2 + $0x10] sm:$0x3f]
        %522 = vrot.lane.b32.xlu0 %v516, 126
        %v523 = vpop.permute.xlu0 %522
        %524 = vrot.lane.b32.xlu0 %v517, 126
        %v525 = vpop.permute.xlu0 %524
        %526 = vrot.lane.b32.xlu0 %v518, 126
        %v527 = vpop.permute.xlu0 %526
        %s531 = scalar_lea.vmem [#allocation3], 48
        %532 = vst.msk [vmem:[%s531] sm:$0xff] %vm184, %v523
        %533 = vst.msk [vmem:[%s531 + $0x8] sm:$0xff] %vm184, %v525
        %534 = vst.msk [vmem:[%s531 + $0x10] sm:$0x3f] %vm495, %v527
        %v535 = vld [vmem:[#allocation2] sm:$0xff]
        %v536 = vld [vmem:[#allocation2 + $0x8] sm:$0xff]
        %v537 = vld [vmem:[#allocation2 + $0x10] sm:$0x3f]
        %541 = vrot.lane.b32.xlu0 %v535, 125
        %v542 = vpop.permute.xlu0 %541
        %543 = vrot.lane.b32.xlu0 %v536, 125
        %v544 = vpop.permute.xlu0 %543
        %545 = vrot.lane.b32.xlu0 %v537, 125
        %v546 = vpop.permute.xlu0 %545
        %s550 = scalar_lea.vmem [#allocation3], 72
        %551 = vst.msk [vmem:[%s550] sm:$0xff] %vm184, %v542
        %552 = vst.msk [vmem:[%s550 + $0x8] sm:$0xff] %vm184, %v544
        %553 = vst.msk [vmem:[%s550 + $0x10] sm:$0x3f] %vm495, %v546
        %v554 = vld [vmem:[#allocation2] sm:$0xff]
        %v555 = vld [vmem:[#allocation2 + $0x8] sm:$0xff]
        %v556 = vld [vmem:[#allocation2 + $0x10] sm:$0x3f]
        %560 = vrot.lane.b32.xlu0 %v554, 124
        %v561 = vpop.permute.xlu0 %560
        %562 = vrot.lane.b32.xlu0 %v555, 124
        %v563 = vpop.permute.xlu0 %562
        %564 = vrot.lane.b32.xlu0 %v556, 124
        %v565 = vpop.permute.xlu0 %564
        %s569 = scalar_lea.vmem [#allocation3], 96
        %570 = vst.msk [vmem:[%s569] sm:$0xff] %vm184, %v561
        %571 = vst.msk [vmem:[%s569 + $0x8] sm:$0xff] %vm184, %v563
        %572 = vst.msk [vmem:[%s569 + $0x10] sm:$0x3f] %vm495, %v565
        %v573 = vld [vmem:[#allocation2] sm:$0xff]
        %v574 = vld [vmem:[#allocation2 + $0x8] sm:$0xff]
        %v575 = vld [vmem:[#allocation2 + $0x10] sm:$0x3f]
        %579 = vrot.lane.b32.xlu0 %v573, 123
        %v580 = vpop.permute.xlu0 %579
        %581 = vrot.lane.b32.xlu0 %v574, 123
        %v582 = vpop.permute.xlu0 %581
        %583 = vrot.lane.b32.xlu0 %v575, 123
        %v584 = vpop.permute.xlu0 %583
        %s588 = scalar_lea.vmem [#allocation3], 120
        %589 = vst.msk [vmem:[%s588] sm:$0xff] %vm184, %v580
        %590 = vst.msk [vmem:[%s588 + $0x8] sm:$0xff] %vm184, %v582
        %591 = vst.msk [vmem:[%s588 + $0x10] sm:$0x3f] %vm495, %v584
        %v592 = vld [vmem:[#allocation2] sm:$0xff]
        %v593 = vld [vmem:[#allocation2 + $0x8] sm:$0xff]
        %v594 = vld [vmem:[#allocation2 + $0x10] sm:$0x3f]
        %598 = vrot.lane.b32.xlu0 %v592, 122
        %v599 = vpop.permute.xlu0 %598
        %600 = vrot.lane.b32.xlu0 %v593, 122
        %v601 = vpop.permute.xlu0 %600
        %602 = vrot.lane.b32.xlu0 %v594, 122
        %v603 = vpop.permute.xlu0 %602
        %s607 = scalar_lea.vmem [#allocation3], 144
        %608 = vst.msk [vmem:[%s607] sm:$0xff] %vm184, %v599
        %609 = vst.msk [vmem:[%s607 + $0x8] sm:$0xff] %vm184, %v601
        %610 = vst.msk [vmem:[%s607 + $0x10] sm:$0x3f] %vm495, %v603
        %v611 = vld [vmem:[%s367] sm:$0xff]
        %v612 = vld [vmem:[%s367 + $0x8] sm:$0xff]
        %v613 = vld [vmem:[%s367 + $0x10] sm:$0x3f]
        %s614 = scalar_lea.vmem [#allocation3], 168
        %615 = vst.msk [vmem:[%s614] sm:$0xff] %vm184, %v611
        %616 = vst.msk [vmem:[%s614 + $0x8] sm:$0xff] %vm184, %v612
        %617 = vst.msk [vmem:[%s614 + $0x10] sm:$0x3f] %vm495, %v613
        %v618 = vld [vmem:[%s367] sm:$0xff]
        %v619 = vld [vmem:[%s367 + $0x8] sm:$0xff]
        %v620 = vld [vmem:[%s367 + $0x10] sm:$0x3f]
        %624 = vrot.lane.b32.xlu0 %v618, 127
        %v625 = vpop.permute.xlu0 %624
        %626 = vrot.lane.b32.xlu0 %v619, 127
        %v627 = vpop.permute.xlu0 %626
        %628 = vrot.lane.b32.xlu0 %v620, 127
        %v629 = vpop.permute.xlu0 %628
        %s633 = scalar_lea.vmem [#allocation3], 192
        %634 = vst.msk [vmem:[%s633] sm:$0xff] %vm184, %v625
        %635 = vst.msk [vmem:[%s633 + $0x8] sm:$0xff] %vm184, %v627
        %636 = vst.msk [vmem:[%s633 + $0x10] sm:$0x3f] %vm495, %v629
        %v637 = vld [vmem:[%s367] sm:$0xff]
        %v638 = vld [vmem:[%s367 + $0x8] sm:$0xff]
        %v639 = vld [vmem:[%s367 + $0x10] sm:$0x3f]
        %643 = vrot.lane.b32.xlu0 %v637, 126
        %v644 = vpop.permute.xlu0 %643
        %645 = vrot.lane.b32.xlu0 %v638, 126
        %v646 = vpop.permute.xlu0 %645
        %647 = vrot.lane.b32.xlu0 %v639, 126
        %v648 = vpop.permute.xlu0 %647
        %s652 = scalar_lea.vmem [#allocation3], 216
        %653 = vst.msk [vmem:[%s652] sm:$0xff] %vm184, %v644
        %654 = vst.msk [vmem:[%s652 + $0x8] sm:$0xff] %vm184, %v646
        %655 = vst.msk [vmem:[%s652 + $0x10] sm:$0x3f] %vm495, %v648
        %v656 = vld [vmem:[%s367] sm:$0xff]
        %v657 = vld [vmem:[%s367 + $0x8] sm:$0xff]
        %v658 = vld [vmem:[%s367 + $0x10] sm:$0x3f]
        %662 = vrot.lane.b32.xlu0 %v656, 125
        %v663 = vpop.permute.xlu0 %662
        %664 = vrot.lane.b32.xlu0 %v657, 125
        %v665 = vpop.permute.xlu0 %664
        %666 = vrot.lane.b32.xlu0 %v658, 125
        %v667 = vpop.permute.xlu0 %666
        %s671 = scalar_lea.vmem [#allocation3], 240
        %672 = vst.msk [vmem:[%s671] sm:$0xff] %vm184, %v663
        %673 = vst.msk [vmem:[%s671 + $0x8] sm:$0xff] %vm184, %v665
        %674 = vst.msk [vmem:[%s671 + $0x10] sm:$0x3f] %vm495, %v667
        %v675 = vld [vmem:[%s367] sm:$0xff]
        %v676 = vld [vmem:[%s367 + $0x8] sm:$0xff]
        %v677 = vld [vmem:[%s367 + $0x10] sm:$0x3f]
        %681 = vrot.lane.b32.xlu0 %v675, 124
        %v682 = vpop.permute.xlu0 %681
        %683 = vrot.lane.b32.xlu0 %v676, 124
        %v684 = vpop.permute.xlu0 %683
        %685 = vrot.lane.b32.xlu0 %v677, 124
        %v686 = vpop.permute.xlu0 %685
        %s690 = scalar_lea.vmem [#allocation3], 264
        %691 = vst.msk [vmem:[%s690] sm:$0xff] %vm184, %v682
        %692 = vst.msk [vmem:[%s690 + $0x8] sm:$0xff] %vm184, %v684
        %693 = vst.msk [vmem:[%s690 + $0x10] sm:$0x3f] %vm495, %v686
        %v694 = vld [vmem:[%s367] sm:$0xff]
        %v695 = vld [vmem:[%s367 + $0x8] sm:$0xff]
        %v696 = vld [vmem:[%s367 + $0x10] sm:$0x3f]
        %700 = vrot.lane.b32.xlu0 %v694, 123
        %v701 = vpop.permute.xlu0 %700
        %702 = vrot.lane.b32.xlu0 %v695, 123
        %v703 = vpop.permute.xlu0 %702
        %704 = vrot.lane.b32.xlu0 %v696, 123
        %v705 = vpop.permute.xlu0 %704
        %s709 = scalar_lea.vmem [#allocation3], 288
        %710 = vst.msk [vmem:[%s709] sm:$0xff] %vm184, %v701
        %711 = vst.msk [vmem:[%s709 + $0x8] sm:$0xff] %vm184, %v703
        %712 = vst.msk [vmem:[%s709 + $0x10] sm:$0x3f] %vm495, %v705
        %v713 = vld [vmem:[%s367] sm:$0xff]
        %v714 = vld [vmem:[%s367 + $0x8] sm:$0xff]
        %v715 = vld [vmem:[%s367 + $0x10] sm:$0x3f]
        %719 = vrot.lane.b32.xlu0 %v713, 122
        %v720 = vpop.permute.xlu0 %719
        %721 = vrot.lane.b32.xlu0 %v714, 122
        %v722 = vpop.permute.xlu0 %721
        %723 = vrot.lane.b32.xlu0 %v715, 122
        %v724 = vpop.permute.xlu0 %723
        %s728 = scalar_lea.vmem [#allocation3], 312
        %729 = vst.msk [vmem:[%s728] sm:$0xff] %vm184, %v720
        %730 = vst.msk [vmem:[%s728 + $0x8] sm:$0xff] %vm184, %v722
        %731 = vst.msk [vmem:[%s728 + $0x10] sm:$0x3f] %vm495, %v724
        %s732 = sld [smem:[#allocation8]]
        %v733 = vld [vmem:[#allocation3] sm:$0xff]
        %v734 = vld [vmem:[#allocation3 + $0x8] sm:$0xff]
        %v735 = vstv %s732
        %v736 = vmul.f32 %v735, %v733
        %v737 = vmul.f32 %v735, %v734
        %v738 = vadd.f32 %v736, 0.0
        %v739 = vadd.f32 %v737, 0.0
        %s740 = sld [smem:[#allocation8 + $0x7]]
        %v741 = vld [vmem:[#allocation3 + $0x1] sm:$0xff]
        %v742 = vld [vmem:[#allocation3 + $0x9] sm:$0xff]
        %v743 = vstv %s740
        %v744 = vmul.f32 %v743, %v741
        %v745 = vmul.f32 %v743, %v742
        %v746 = vadd.f32 %v738, %v744
        %v747 = vadd.f32 %v739, %v745
        %s748 = sld [smem:[#allocation8 + $0xe]]
        %v749 = vld [vmem:[#allocation3 + $0x2] sm:$0xff]
        %v750 = vld [vmem:[#allocation3 + $0xa] sm:$0xff]
        %v751 = vstv %s748
        %v752 = vmul.f32 %v751, %v749
        %v753 = vmul.f32 %v751, %v750
        %v754 = vadd.f32 %v746, %v752
        %v755 = vadd.f32 %v747, %v753
        %s756 = sld [smem:[#allocation8 + $0x15]]
        %v757 = vld [vmem:[#allocation3 + $0x3] sm:$0xff]
        %v758 = vld [vmem:[#allocation3 + $0xb] sm:$0xff]
        %v759 = vstv %s756
        %v760 = vmul.f32 %v759, %v757
        %v761 = vmul.f32 %v759, %v758
        %v762 = vadd.f32 %v754, %v760
        %v763 = vadd.f32 %v755, %v761
        %s764 = sld [smem:[#allocation8 + $0x1c]]
        %v765 = vld [vmem:[#allocation3 + $0x4] sm:$0xff]
        %v766 = vld [vmem:[#allocation3 + $0xc] sm:$0xff]
        %v767 = vstv %s764
        %v768 = vmul.f32 %v767, %v765
        %v769 = vmul.f32 %v767, %v766
        %v770 = vadd.f32 %v762, %v768
        %v771 = vadd.f32 %v763, %v769
        %s772 = sld [smem:[#allocation8 + $0x23]]
        %v773 = vld [vmem:[#allocation3 + $0x5] sm:$0xff]
        %v774 = vld [vmem:[#allocation3 + $0xd] sm:$0xff]
        %v775 = vstv %s772
        %v776 = vmul.f32 %v775, %v773
        %v777 = vmul.f32 %v775, %v774
        %v778 = vadd.f32 %v770, %v776
        %v779 = vadd.f32 %v771, %v777
        %s780 = sld [smem:[#allocation8 + $0x2a]]
        %v781 = vld [vmem:[#allocation3 + $0x6] sm:$0xff]
        %v782 = vld [vmem:[#allocation3 + $0xe] sm:$0xff]
        %v783 = vstv %s780
        %v784 = vmul.f32 %v783, %v781
        %v785 = vmul.f32 %v783, %v782
        %v786 = vadd.f32 %v778, %v784
        %v787 = vadd.f32 %v779, %v785
        %s788 = sld [smem:[#allocation8 + $0x1]]
        %v789 = vld [vmem:[%s512] sm:$0xff]
        %v790 = vld [vmem:[%s512 + $0x8] sm:$0xff]
        %v791 = vstv %s788
        %v792 = vmul.f32 %v791, %v789
        %v793 = vmul.f32 %v791, %v790
        %v794 = vadd.f32 %v792, 0.0
        %v795 = vadd.f32 %v793, 0.0
        %s796 = sld [smem:[#allocation8 + $0x8]]
        %v797 = vld [vmem:[%s512 + $0x1] sm:$0xff]
        %v798 = vld [vmem:[%s512 + $0x9] sm:$0xff]
        %v799 = vstv %s796
        %v800 = vmul.f32 %v799, %v797
        %v801 = vmul.f32 %v799, %v798
        %v802 = vadd.f32 %v794, %v800
        %v803 = vadd.f32 %v795, %v801
        %s804 = sld [smem:[#allocation8 + $0xf]]
        %v805 = vld [vmem:[%s512 + $0x2] sm:$0xff]
        %v806 = vld [vmem:[%s512 + $0xa] sm:$0xff]
        %v807 = vstv %s804
        %v808 = vmul.f32 %v807, %v805
        %v809 = vmul.f32 %v807, %v806
        %v810 = vadd.f32 %v802, %v808
        %v811 = vadd.f32 %v803, %v809
        %s812 = sld [smem:[#allocation8 + $0x16]]
        %v813 = vld [vmem:[%s512 + $0x3] sm:$0xff]
        %v814 = vld [vmem:[%s512 + $0xb] sm:$0xff]
        %v815 = vstv %s812
        %v816 = vmul.f32 %v815, %v813
        %v817 = vmul.f32 %v815, %v814
        %v818 = vadd.f32 %v810, %v816
        %v819 = vadd.f32 %v811, %v817
        %s820 = sld [smem:[#allocation8 + $0x1d]]
        %v821 = vld [vmem:[%s512 + $0x4] sm:$0xff]
        %v822 = vld [vmem:[%s512 + $0xc] sm:$0xff]
        %v823 = vstv %s820
        %v824 = vmul.f32 %v823, %v821
        %v825 = vmul.f32 %v823, %v822
        %v826 = vadd.f32 %v818, %v824
        %v827 = vadd.f32 %v819, %v825
        %s828 = sld [smem:[#allocation8 + $0x24]]
        %v829 = vld [vmem:[%s512 + $0x5] sm:$0xff]
        %v830 = vld [vmem:[%s512 + $0xd] sm:$0xff]
        %v831 = vstv %s828
        %v832 = vmul.f32 %v831, %v829
        %v833 = vmul.f32 %v831, %v830
        %v834 = vadd.f32 %v826, %v832
        %v835 = vadd.f32 %v827, %v833
        %s836 = sld [smem:[#allocation8 + $0x2b]]
        %v837 = vld [vmem:[%s512 + $0x6] sm:$0xff]
        %v838 = vld [vmem:[%s512 + $0xe] sm:$0xff]
        %v839 = vstv %s836
        %v840 = vmul.f32 %v839, %v837
        %v841 = vmul.f32 %v839, %v838
        %v842 = vadd.f32 %v834, %v840
        %v843 = vadd.f32 %v835, %v841
        %s844 = sld [smem:[#allocation8 + $0x2]]
        %v845 = vld [vmem:[%s531] sm:$0xff]
        %v846 = vld [vmem:[%s531 + $0x8] sm:$0xff]
        %v847 = vstv %s844
        %v848 = vmul.f32 %v847, %v845
        %v849 = vmul.f32 %v847, %v846
        %v850 = vadd.f32 %v786, %v848
        %v851 = vadd.f32 %v787, %v849
        %s852 = sld [smem:[#allocation8 + $0x9]]
        %v853 = vld [vmem:[%s531 + $0x1] sm:$0xff]
        %v854 = vld [vmem:[%s531 + $0x9] sm:$0xff]
        %v855 = vstv %s852
        %v856 = vmul.f32 %v855, %v853
        %v857 = vmul.f32 %v855, %v854
        %v858 = vadd.f32 %v850, %v856
        %v859 = vadd.f32 %v851, %v857
        %s860 = sld [smem:[#allocation8 + $0x10]]
        %v861 = vld [vmem:[%s531 + $0x2] sm:$0xff]
        %v862 = vld [vmem:[%s531 + $0xa] sm:$0xff]
        %v863 = vstv %s860
        %v864 = vmul.f32 %v863, %v861
        %v865 = vmul.f32 %v863, %v862
        %v866 = vadd.f32 %v858, %v864
        %v867 = vadd.f32 %v859, %v865
        %s868 = sld [smem:[#allocation8 + $0x17]]
        %v869 = vld [vmem:[%s531 + $0x3] sm:$0xff]
        %v870 = vld [vmem:[%s531 + $0xb] sm:$0xff]
        %v871 = vstv %s868
        %v872 = vmul.f32 %v871, %v869
        %v873 = vmul.f32 %v871, %v870
        %v874 = vadd.f32 %v866, %v872
        %v875 = vadd.f32 %v867, %v873
        %s876 = sld [smem:[#allocation8 + $0x1e]]
        %v877 = vld [vmem:[%s531 + $0x4] sm:$0xff]
        %v878 = vld [vmem:[%s531 + $0xc] sm:$0xff]
        %v879 = vstv %s876
        %v880 = vmul.f32 %v879, %v877
        %v881 = vmul.f32 %v879, %v878
        %v882 = vadd.f32 %v874, %v880
        %v883 = vadd.f32 %v875, %v881
        %s884 = sld [smem:[#allocation8 + $0x25]]
        %v885 = vld [vmem:[%s531 + $0x5] sm:$0xff]
        %v886 = vld [vmem:[%s531 + $0xd] sm:$0xff]
        %v887 = vstv %s884
        %v888 = vmul.f32 %v887, %v885
        %v889 = vmul.f32 %v887, %v886
        %v890 = vadd.f32 %v882, %v888
        %v891 = vadd.f32 %v883, %v889
        %s892 = sld [smem:[#allocation8 + $0x2c]]
        %v893 = vld [vmem:[%s531 + $0x6] sm:$0xff]
        %v894 = vld [vmem:[%s531 + $0xe] sm:$0xff]
        %v895 = vstv %s892
        %v896 = vmul.f32 %v895, %v893
        %v897 = vmul.f32 %v895, %v894
        %v898 = vadd.f32 %v890, %v896
        %v899 = vadd.f32 %v891, %v897
        %s900 = sld [smem:[#allocation8 + $0x3]]
        %v901 = vld [vmem:[%s550] sm:$0xff]
        %v902 = vld [vmem:[%s550 + $0x8] sm:$0xff]
        %v903 = vstv %s900
        %v904 = vmul.f32 %v903, %v901
        %v905 = vmul.f32 %v903, %v902
        %v906 = vadd.f32 %v842, %v904
        %v907 = vadd.f32 %v843, %v905
        %s908 = sld [smem:[#allocation8 + $0xa]]
        %v909 = vld [vmem:[%s550 + $0x1] sm:$0xff]
        %v910 = vld [vmem:[%s550 + $0x9] sm:$0xff]
        %v911 = vstv %s908
        %v912 = vmul.f32 %v911, %v909
        %v913 = vmul.f32 %v911, %v910
        %v914 = vadd.f32 %v906, %v912
        %v915 = vadd.f32 %v907, %v913
        %s916 = sld [smem:[#allocation8 + $0x11]]
        %v917 = vld [vmem:[%s550 + $0x2] sm:$0xff]
        %v918 = vld [vmem:[%s550 + $0xa] sm:$0xff]
        %v919 = vstv %s916
        %v920 = vmul.f32 %v919, %v917
        %v921 = vmul.f32 %v919, %v918
        %v922 = vadd.f32 %v914, %v920
        %v923 = vadd.f32 %v915, %v921
        %s924 = sld [smem:[#allocation8 + $0x18]]
        %v925 = vld [vmem:[%s550 + $0x3] sm:$0xff]
        %v926 = vld [vmem:[%s550 + $0xb] sm:$0xff]
        %v927 = vstv %s924
        %v928 = vmul.f32 %v927, %v925
        %v929 = vmul.f32 %v927, %v926
        %v930 = vadd.f32 %v922, %v928
        %v931 = vadd.f32 %v923, %v929
        %s932 = sld [smem:[#allocation8 + $0x1f]]
        %v933 = vld [vmem:[%s550 + $0x4] sm:$0xff]
        %v934 = vld [vmem:[%s550 + $0xc] sm:$0xff]
        %v935 = vstv %s932
        %v936 = vmul.f32 %v935, %v933
        %v937 = vmul.f32 %v935, %v934
        %v938 = vadd.f32 %v930, %v936
        %v939 = vadd.f32 %v931, %v937
        %s940 = sld [smem:[#allocation8 + $0x26]]
        %v941 = vld [vmem:[%s550 + $0x5] sm:$0xff]
        %v942 = vld [vmem:[%s550 + $0xd] sm:$0xff]
        %v943 = vstv %s940
        %v944 = vmul.f32 %v943, %v941
        %v945 = vmul.f32 %v943, %v942
        %v946 = vadd.f32 %v938, %v944
        %v947 = vadd.f32 %v939, %v945
        %s948 = sld [smem:[#allocation8 + $0x2d]]
        %v949 = vld [vmem:[%s550 + $0x6] sm:$0xff]
        %v950 = vld [vmem:[%s550 + $0xe] sm:$0xff]
        %v951 = vstv %s948
        %v952 = vmul.f32 %v951, %v949
        %v953 = vmul.f32 %v951, %v950
        %v954 = vadd.f32 %v946, %v952
        %v955 = vadd.f32 %v947, %v953
        %s956 = sld [smem:[#allocation8 + $0x4]]
        %v957 = vld [vmem:[%s569] sm:$0xff]
        %v958 = vld [vmem:[%s569 + $0x8] sm:$0xff]
        %v959 = vstv %s956
        %v960 = vmul.f32 %v959, %v957
        %v961 = vmul.f32 %v959, %v958
        %v962 = vadd.f32 %v898, %v960
        %v963 = vadd.f32 %v899, %v961
        %s964 = sld [smem:[#allocation8 + $0xb]]
        %v965 = vld [vmem:[%s569 + $0x1] sm:$0xff]
        %v966 = vld [vmem:[%s569 + $0x9] sm:$0xff]
        %v967 = vstv %s964
        %v968 = vmul.f32 %v967, %v965
        %v969 = vmul.f32 %v967, %v966
        %v970 = vadd.f32 %v962, %v968
        %v971 = vadd.f32 %v963, %v969
        %s972 = sld [smem:[#allocation8 + $0x12]]
        %v973 = vld [vmem:[%s569 + $0x2] sm:$0xff]
        %v974 = vld [vmem:[%s569 + $0xa] sm:$0xff]
        %v975 = vstv %s972
        %v976 = vmul.f32 %v975, %v973
        %v977 = vmul.f32 %v975, %v974
        %v978 = vadd.f32 %v970, %v976
        %v979 = vadd.f32 %v971, %v977
        %s980 = sld [smem:[#allocation8 + $0x19]]
        %v981 = vld [vmem:[%s569 + $0x3] sm:$0xff]
        %v982 = vld [vmem:[%s569 + $0xb] sm:$0xff]
        %v983 = vstv %s980
        %v984 = vmul.f32 %v983, %v981
        %v985 = vmul.f32 %v983, %v982
        %v986 = vadd.f32 %v978, %v984
        %v987 = vadd.f32 %v979, %v985
        %s988 = sld [smem:[#allocation8 + $0x20]]
        %v989 = vld [vmem:[%s569 + $0x4] sm:$0xff]
        %v990 = vld [vmem:[%s569 + $0xc] sm:$0xff]
        %v991 = vstv %s988
        %v992 = vmul.f32 %v991, %v989
        %v993 = vmul.f32 %v991, %v990
        %v994 = vadd.f32 %v986, %v992
        %v995 = vadd.f32 %v987, %v993
        %s996 = sld [smem:[#allocation8 + $0x27]]
        %v997 = vld [vmem:[%s569 + $0x5] sm:$0xff]
        %v998 = vld [vmem:[%s569 + $0xd] sm:$0xff]
        %v999 = vstv %s996
        %v1000 = vmul.f32 %v999, %v997
        %v1001 = vmul.f32 %v999, %v998
        %v1002 = vadd.f32 %v994, %v1000
        %v1003 = vadd.f32 %v995, %v1001
        %s1004 = sld [smem:[#allocation8 + $0x2e]]
        %v1005 = vld [vmem:[%s569 + $0x6] sm:$0xff]
        %v1006 = vld [vmem:[%s569 + $0xe] sm:$0xff]
        %v1007 = vstv %s1004
        %v1008 = vmul.f32 %v1007, %v1005
        %v1009 = vmul.f32 %v1007, %v1006
        %v1010 = vadd.f32 %v1002, %v1008
        %v1011 = vadd.f32 %v1003, %v1009
        %s1012 = sld [smem:[#allocation8 + $0x5]]
        %v1013 = vld [vmem:[%s588] sm:$0xff]
        %v1014 = vld [vmem:[%s588 + $0x8] sm:$0xff]
        %v1015 = vstv %s1012
        %v1016 = vmul.f32 %v1015, %v1013
        %v1017 = vmul.f32 %v1015, %v1014
        %v1018 = vadd.f32 %v954, %v1016
        %v1019 = vadd.f32 %v955, %v1017
        %s1020 = sld [smem:[#allocation8 + $0xc]]
        %v1021 = vld [vmem:[%s588 + $0x1] sm:$0xff]
        %v1022 = vld [vmem:[%s588 + $0x9] sm:$0xff]
        %v1023 = vstv %s1020
        %v1024 = vmul.f32 %v1023, %v1021
        %v1025 = vmul.f32 %v1023, %v1022
        %v1026 = vadd.f32 %v1018, %v1024
        %v1027 = vadd.f32 %v1019, %v1025
        %s1028 = sld [smem:[#allocation8 + $0x13]]
        %v1029 = vld [vmem:[%s588 + $0x2] sm:$0xff]
        %v1030 = vld [vmem:[%s588 + $0xa] sm:$0xff]
        %v1031 = vstv %s1028
        %v1032 = vmul.f32 %v1031, %v1029
        %v1033 = vmul.f32 %v1031, %v1030
        %v1034 = vadd.f32 %v1026, %v1032
        %v1035 = vadd.f32 %v1027, %v1033
        %s1036 = sld [smem:[#allocation8 + $0x1a]]
        %v1037 = vld [vmem:[%s588 + $0x3] sm:$0xff]
        %v1038 = vld [vmem:[%s588 + $0xb] sm:$0xff]
        %v1039 = vstv %s1036
        %v1040 = vmul.f32 %v1039, %v1037
        %v1041 = vmul.f32 %v1039, %v1038
        %v1042 = vadd.f32 %v1034, %v1040
        %v1043 = vadd.f32 %v1035, %v1041
        %s1044 = sld [smem:[#allocation8 + $0x21]]
        %v1045 = vld [vmem:[%s588 + $0x4] sm:$0xff]
        %v1046 = vld [vmem:[%s588 + $0xc] sm:$0xff]
        %v1047 = vstv %s1044
        %v1048 = vmul.f32 %v1047, %v1045
        %v1049 = vmul.f32 %v1047, %v1046
        %v1050 = vadd.f32 %v1042, %v1048
        %v1051 = vadd.f32 %v1043, %v1049
        %s1052 = sld [smem:[#allocation8 + $0x28]]
        %v1053 = vld [vmem:[%s588 + $0x5] sm:$0xff]
        %v1054 = vld [vmem:[%s588 + $0xd] sm:$0xff]
        %v1055 = vstv %s1052
        %v1056 = vmul.f32 %v1055, %v1053
        %v1057 = vmul.f32 %v1055, %v1054
        %v1058 = vadd.f32 %v1050, %v1056
        %v1059 = vadd.f32 %v1051, %v1057
        %s1060 = sld [smem:[#allocation8 + $0x2f]]
        %v1061 = vld [vmem:[%s588 + $0x6] sm:$0xff]
        %v1062 = vld [vmem:[%s588 + $0xe] sm:$0xff]
        %v1063 = vstv %s1060
        %v1064 = vmul.f32 %v1063, %v1061
        %v1065 = vmul.f32 %v1063, %v1062
        %v1066 = vadd.f32 %v1058, %v1064
        %v1067 = vadd.f32 %v1059, %v1065
        %s1068 = sld [smem:[#allocation8 + $0x6]]
        %v1069 = vld [vmem:[%s607] sm:$0xff]
        %v1070 = vld [vmem:[%s607 + $0x8] sm:$0xff]
        %v1071 = vstv %s1068
        %v1072 = vmul.f32 %v1071, %v1069
        %v1073 = vmul.f32 %v1071, %v1070
        %v1074 = vadd.f32 %v1010, %v1072
        %v1075 = vadd.f32 %v1011, %v1073
        %s1076 = sld [smem:[#allocation8 + $0xd]]
        %v1077 = vld [vmem:[%s607 + $0x1] sm:$0xff]
        %v1078 = vld [vmem:[%s607 + $0x9] sm:$0xff]
        %v1079 = vstv %s1076
        %v1080 = vmul.f32 %v1079, %v1077
        %v1081 = vmul.f32 %v1079, %v1078
        %v1082 = vadd.f32 %v1074, %v1080
        %v1083 = vadd.f32 %v1075, %v1081
        %s1084 = sld [smem:[#allocation8 + $0x14]]
        %v1085 = vld [vmem:[%s607 + $0x2] sm:$0xff]
        %v1086 = vld [vmem:[%s607 + $0xa] sm:$0xff]
        %v1087 = vstv %s1084
        %v1088 = vmul.f32 %v1087, %v1085
        %v1089 = vmul.f32 %v1087, %v1086
        %v1090 = vadd.f32 %v1082, %v1088
        %v1091 = vadd.f32 %v1083, %v1089
        %s1092 = sld [smem:[#allocation8 + $0x1b]]
        %v1093 = vld [vmem:[%s607 + $0x3] sm:$0xff]
        %v1094 = vld [vmem:[%s607 + $0xb] sm:$0xff]
        %v1095 = vstv %s1092
        %v1096 = vmul.f32 %v1095, %v1093
        %v1097 = vmul.f32 %v1095, %v1094
        %v1098 = vadd.f32 %v1090, %v1096
        %v1099 = vadd.f32 %v1091, %v1097
        %s1100 = sld [smem:[#allocation8 + $0x22]]
        %v1101 = vld [vmem:[%s607 + $0x4] sm:$0xff]
        %v1102 = vld [vmem:[%s607 + $0xc] sm:$0xff]
        %v1103 = vstv %s1100
        %v1104 = vmul.f32 %v1103, %v1101
        %v1105 = vmul.f32 %v1103, %v1102
        %v1106 = vadd.f32 %v1098, %v1104
        %v1107 = vadd.f32 %v1099, %v1105
        %s1108 = sld [smem:[#allocation8 + $0x29]]
        %v1109 = vld [vmem:[%s607 + $0x5] sm:$0xff]
        %v1110 = vld [vmem:[%s607 + $0xd] sm:$0xff]
        %v1111 = vstv %s1108
        %v1112 = vmul.f32 %v1111, %v1109
        %v1113 = vmul.f32 %v1111, %v1110
        %v1114 = vadd.f32 %v1106, %v1112
        %v1115 = vadd.f32 %v1107, %v1113
        %s1116 = sld [smem:[#allocation8 + $0x30]]
        %v1117 = vld [vmem:[%s607 + $0x6] sm:$0xff]
        %v1118 = vld [vmem:[%s607 + $0xe] sm:$0xff]
        %v1119 = vstv %s1116
        %v1120 = vmul.f32 %v1119, %v1117
        %v1121 = vmul.f32 %v1119, %v1118
        %v1122 = vadd.f32 %v1114, %v1120
        %v1123 = vadd.f32 %v1115, %v1121
        %s1124 = sld [smem:[#allocation8 + $0x31]]
        %v1125 = vld [vmem:[%s614] sm:$0xff]
        %v1126 = vld [vmem:[%s614 + $0x8] sm:$0xff]
        %v1127 = vstv %s1124
        %v1128 = vmul.f32 %v1127, %v1125
        %v1129 = vmul.f32 %v1127, %v1126
        %v1130 = vadd.f32 %v1128, 0.0
        %v1131 = vadd.f32 %v1129, 0.0
        %s1132 = sld [smem:[#allocation8 + $0x38]]
        %v1133 = vld [vmem:[%s614 + $0x1] sm:$0xff]
        %v1134 = vld [vmem:[%s614 + $0x9] sm:$0xff]
        %v1135 = vstv %s1132
        %v1136 = vmul.f32 %v1135, %v1133
        %v1137 = vmul.f32 %v1135, %v1134
        %v1138 = vadd.f32 %v1130, %v1136
        %v1139 = vadd.f32 %v1131, %v1137
        %s1140 = sld [smem:[#allocation8 + $0x3f]]
        %v1141 = vld [vmem:[%s614 + $0x2] sm:$0xff]
        %v1142 = vld [vmem:[%s614 + $0xa] sm:$0xff]
        %v1143 = vstv %s1140
        %v1144 = vmul.f32 %v1143, %v1141
        %v1145 = vmul.f32 %v1143, %v1142
        %v1146 = vadd.f32 %v1138, %v1144
        %v1147 = vadd.f32 %v1139, %v1145
        %s1148 = sld [smem:[#allocation8 + $0x46]]
        %v1149 = vld [vmem:[%s614 + $0x3] sm:$0xff]
        %v1150 = vld [vmem:[%s614 + $0xb] sm:$0xff]
        %v1151 = vstv %s1148
        %v1152 = vmul.f32 %v1151, %v1149
        %v1153 = vmul.f32 %v1151, %v1150
        %v1154 = vadd.f32 %v1146, %v1152
        %v1155 = vadd.f32 %v1147, %v1153
        %s1156 = sld [smem:[#allocation8 + $0x4d]]
        %v1157 = vld [vmem:[%s614 + $0x4] sm:$0xff]
        %v1158 = vld [vmem:[%s614 + $0xc] sm:$0xff]
        %v1159 = vstv %s1156
        %v1160 = vmul.f32 %v1159, %v1157
        %v1161 = vmul.f32 %v1159, %v1158
        %v1162 = vadd.f32 %v1154, %v1160
        %v1163 = vadd.f32 %v1155, %v1161
        %s1164 = sld [smem:[#allocation8 + $0x54]]
        %v1165 = vld [vmem:[%s614 + $0x5] sm:$0xff]
        %v1166 = vld [vmem:[%s614 + $0xd] sm:$0xff]
        %v1167 = vstv %s1164
        %v1168 = vmul.f32 %v1167, %v1165
        %v1169 = vmul.f32 %v1167, %v1166
        %v1170 = vadd.f32 %v1162, %v1168
        %v1171 = vadd.f32 %v1163, %v1169
        %s1172 = sld [smem:[#allocation8 + $0x5b]]
        %v1173 = vld [vmem:[%s614 + $0x6] sm:$0xff]
        %v1174 = vld [vmem:[%s614 + $0xe] sm:$0xff]
        %v1175 = vstv %s1172
        %v1176 = vmul.f32 %v1175, %v1173
        %v1177 = vmul.f32 %v1175, %v1174
        %v1178 = vadd.f32 %v1170, %v1176
        %v1179 = vadd.f32 %v1171, %v1177
        %s1180 = sld [smem:[#allocation8 + $0x32]]
        %v1181 = vld [vmem:[%s633] sm:$0xff]
        %v1182 = vld [vmem:[%s633 + $0x8] sm:$0xff]
        %v1183 = vstv %s1180
        %v1184 = vmul.f32 %v1183, %v1181
        %v1185 = vmul.f32 %v1183, %v1182
        %v1186 = vadd.f32 %v1184, 0.0
        %v1187 = vadd.f32 %v1185, 0.0
        %s1188 = sld [smem:[#allocation8 + $0x39]]
        %v1189 = vld [vmem:[%s633 + $0x1] sm:$0xff]
        %v1190 = vld [vmem:[%s633 + $0x9] sm:$0xff]
        %v1191 = vstv %s1188
        %v1192 = vmul.f32 %v1191, %v1189
        %v1193 = vmul.f32 %v1191, %v1190
        %v1194 = vadd.f32 %v1186, %v1192
        %v1195 = vadd.f32 %v1187, %v1193
        %s1196 = sld [smem:[#allocation8 + $0x40]]
        %v1197 = vld [vmem:[%s633 + $0x2] sm:$0xff]
        %v1198 = vld [vmem:[%s633 + $0xa] sm:$0xff]
        %v1199 = vstv %s1196
        %v1200 = vmul.f32 %v1199, %v1197
        %v1201 = vmul.f32 %v1199, %v1198
        %v1202 = vadd.f32 %v1194, %v1200
        %v1203 = vadd.f32 %v1195, %v1201
        %s1204 = sld [smem:[#allocation8 + $0x47]]
        %v1205 = vld [vmem:[%s633 + $0x3] sm:$0xff]
        %v1206 = vld [vmem:[%s633 + $0xb] sm:$0xff]
        %v1207 = vstv %s1204
        %v1208 = vmul.f32 %v1207, %v1205
        %v1209 = vmul.f32 %v1207, %v1206
        %v1210 = vadd.f32 %v1202, %v1208
        %v1211 = vadd.f32 %v1203, %v1209
        %s1212 = sld [smem:[#allocation8 + $0x4e]]
        %v1213 = vld [vmem:[%s633 + $0x4] sm:$0xff]
        %v1214 = vld [vmem:[%s633 + $0xc] sm:$0xff]
        %v1215 = vstv %s1212
        %v1216 = vmul.f32 %v1215, %v1213
        %v1217 = vmul.f32 %v1215, %v1214
        %v1218 = vadd.f32 %v1210, %v1216
        %v1219 = vadd.f32 %v1211, %v1217
        %s1220 = sld [smem:[#allocation8 + $0x55]]
        %v1221 = vld [vmem:[%s633 + $0x5] sm:$0xff]
        %v1222 = vld [vmem:[%s633 + $0xd] sm:$0xff]
        %v1223 = vstv %s1220
        %v1224 = vmul.f32 %v1223, %v1221
        %v1225 = vmul.f32 %v1223, %v1222
        %v1226 = vadd.f32 %v1218, %v1224
        %v1227 = vadd.f32 %v1219, %v1225
        %s1228 = sld [smem:[#allocation8 + $0x5c]]
        %v1229 = vld [vmem:[%s633 + $0x6] sm:$0xff]
        %v1230 = vld [vmem:[%s633 + $0xe] sm:$0xff]
        %v1231 = vstv %s1228
        %v1232 = vmul.f32 %v1231, %v1229
        %v1233 = vmul.f32 %v1231, %v1230
        %v1234 = vadd.f32 %v1226, %v1232
        %v1235 = vadd.f32 %v1227, %v1233
        %s1236 = sld [smem:[#allocation8 + $0x33]]
        %v1237 = vld [vmem:[%s652] sm:$0xff]
        %v1238 = vld [vmem:[%s652 + $0x8] sm:$0xff]
        %v1239 = vstv %s1236
        %v1240 = vmul.f32 %v1239, %v1237
        %v1241 = vmul.f32 %v1239, %v1238
        %v1242 = vadd.f32 %v1178, %v1240
        %v1243 = vadd.f32 %v1179, %v1241
        %s1244 = sld [smem:[#allocation8 + $0x3a]]
        %v1245 = vld [vmem:[%s652 + $0x1] sm:$0xff]
        %v1246 = vld [vmem:[%s652 + $0x9] sm:$0xff]
        %v1247 = vstv %s1244
        %v1248 = vmul.f32 %v1247, %v1245
        %v1249 = vmul.f32 %v1247, %v1246
        %v1250 = vadd.f32 %v1242, %v1248
        %v1251 = vadd.f32 %v1243, %v1249
        %s1252 = sld [smem:[#allocation8 + $0x41]]
        %v1253 = vld [vmem:[%s652 + $0x2] sm:$0xff]
        %v1254 = vld [vmem:[%s652 + $0xa] sm:$0xff]
        %v1255 = vstv %s1252
        %v1256 = vmul.f32 %v1255, %v1253
        %v1257 = vmul.f32 %v1255, %v1254
        %v1258 = vadd.f32 %v1250, %v1256
        %v1259 = vadd.f32 %v1251, %v1257
        %s1260 = sld [smem:[#allocation8 + $0x48]]
        %v1261 = vld [vmem:[%s652 + $0x3] sm:$0xff]
        %v1262 = vld [vmem:[%s652 + $0xb] sm:$0xff]
        %v1263 = vstv %s1260
        %v1264 = vmul.f32 %v1263, %v1261
        %v1265 = vmul.f32 %v1263, %v1262
        %v1266 = vadd.f32 %v1258, %v1264
        %v1267 = vadd.f32 %v1259, %v1265
        %s1268 = sld [smem:[#allocation8 + $0x4f]]
        %v1269 = vld [vmem:[%s652 + $0x4] sm:$0xff]
        %v1270 = vld [vmem:[%s652 + $0xc] sm:$0xff]
        %v1271 = vstv %s1268
        %v1272 = vmul.f32 %v1271, %v1269
        %v1273 = vmul.f32 %v1271, %v1270
        %v1274 = vadd.f32 %v1266, %v1272
        %v1275 = vadd.f32 %v1267, %v1273
        %s1276 = sld [smem:[#allocation8 + $0x56]]
        %v1277 = vld [vmem:[%s652 + $0x5] sm:$0xff]
        %v1278 = vld [vmem:[%s652 + $0xd] sm:$0xff]
        %v1279 = vstv %s1276
        %v1280 = vmul.f32 %v1279, %v1277
        %v1281 = vmul.f32 %v1279, %v1278
        %v1282 = vadd.f32 %v1274, %v1280
        %v1283 = vadd.f32 %v1275, %v1281
        %s1284 = sld [smem:[#allocation8 + $0x5d]]
        %v1285 = vld [vmem:[%s652 + $0x6] sm:$0xff]
        %v1286 = vld [vmem:[%s652 + $0xe] sm:$0xff]
        %v1287 = vstv %s1284
        %v1288 = vmul.f32 %v1287, %v1285
        %v1289 = vmul.f32 %v1287, %v1286
        %v1290 = vadd.f32 %v1282, %v1288
        %v1291 = vadd.f32 %v1283, %v1289
        %s1292 = sld [smem:[#allocation8 + $0x34]]
        %v1293 = vld [vmem:[%s671] sm:$0xff]
        %v1294 = vld [vmem:[%s671 + $0x8] sm:$0xff]
        %v1295 = vstv %s1292
        %v1296 = vmul.f32 %v1295, %v1293
        %v1297 = vmul.f32 %v1295, %v1294
        %v1298 = vadd.f32 %v1234, %v1296
        %v1299 = vadd.f32 %v1235, %v1297
        %s1300 = sld [smem:[#allocation8 + $0x3b]]
        %v1301 = vld [vmem:[%s671 + $0x1] sm:$0xff]
        %v1302 = vld [vmem:[%s671 + $0x9] sm:$0xff]
        %v1303 = vstv %s1300
        %v1304 = vmul.f32 %v1303, %v1301
        %v1305 = vmul.f32 %v1303, %v1302
        %v1306 = vadd.f32 %v1298, %v1304
        %v1307 = vadd.f32 %v1299, %v1305
        %s1308 = sld [smem:[#allocation8 + $0x42]]
        %v1309 = vld [vmem:[%s671 + $0x2] sm:$0xff]
        %v1310 = vld [vmem:[%s671 + $0xa] sm:$0xff]
        %v1311 = vstv %s1308
        %v1312 = vmul.f32 %v1311, %v1309
        %v1313 = vmul.f32 %v1311, %v1310
        %v1314 = vadd.f32 %v1306, %v1312
        %v1315 = vadd.f32 %v1307, %v1313
        %s1316 = sld [smem:[#allocation8 + $0x49]]
        %v1317 = vld [vmem:[%s671 + $0x3] sm:$0xff]
        %v1318 = vld [vmem:[%s671 + $0xb] sm:$0xff]
        %v1319 = vstv %s1316
        %v1320 = vmul.f32 %v1319, %v1317
        %v1321 = vmul.f32 %v1319, %v1318
        %v1322 = vadd.f32 %v1314, %v1320
        %v1323 = vadd.f32 %v1315, %v1321
        %s1324 = sld [smem:[#allocation8 + $0x50]]
        %v1325 = vld [vmem:[%s671 + $0x4] sm:$0xff]
        %v1326 = vld [vmem:[%s671 + $0xc] sm:$0xff]
        %v1327 = vstv %s1324
        %v1328 = vmul.f32 %v1327, %v1325
        %v1329 = vmul.f32 %v1327, %v1326
        %v1330 = vadd.f32 %v1322, %v1328
        %v1331 = vadd.f32 %v1323, %v1329
        %s1332 = sld [smem:[#allocation8 + $0x57]]
        %v1333 = vld [vmem:[%s671 + $0x5] sm:$0xff]
        %v1334 = vld [vmem:[%s671 + $0xd] sm:$0xff]
        %v1335 = vstv %s1332
        %v1336 = vmul.f32 %v1335, %v1333
        %v1337 = vmul.f32 %v1335, %v1334
        %v1338 = vadd.f32 %v1330, %v1336
        %v1339 = vadd.f32 %v1331, %v1337
        %s1340 = sld [smem:[#allocation8 + $0x5e]]
        %v1341 = vld [vmem:[%s671 + $0x6] sm:$0xff]
        %v1342 = vld [vmem:[%s671 + $0xe] sm:$0xff]
        %v1343 = vstv %s1340
        %v1344 = vmul.f32 %v1343, %v1341
        %v1345 = vmul.f32 %v1343, %v1342
        %v1346 = vadd.f32 %v1338, %v1344
        %v1347 = vadd.f32 %v1339, %v1345
        %s1348 = sld [smem:[#allocation8 + $0x35]]
        %v1349 = vld [vmem:[%s690] sm:$0xff]
        %v1350 = vld [vmem:[%s690 + $0x8] sm:$0xff]
        %v1351 = vstv %s1348
        %v1352 = vmul.f32 %v1351, %v1349
        %v1353 = vmul.f32 %v1351, %v1350
        %v1354 = vadd.f32 %v1290, %v1352
        %v1355 = vadd.f32 %v1291, %v1353
        %s1356 = sld [smem:[#allocation8 + $0x3c]]
        %v1357 = vld [vmem:[%s690 + $0x1] sm:$0xff]
        %v1358 = vld [vmem:[%s690 + $0x9] sm:$0xff]
        %v1359 = vstv %s1356
        %v1360 = vmul.f32 %v1359, %v1357
        %v1361 = vmul.f32 %v1359, %v1358
        %v1362 = vadd.f32 %v1354, %v1360
        %v1363 = vadd.f32 %v1355, %v1361
        %s1364 = sld [smem:[#allocation8 + $0x43]]
        %v1365 = vld [vmem:[%s690 + $0x2] sm:$0xff]
        %v1366 = vld [vmem:[%s690 + $0xa] sm:$0xff]
        %v1367 = vstv %s1364
        %v1368 = vmul.f32 %v1367, %v1365
        %v1369 = vmul.f32 %v1367, %v1366
        %v1370 = vadd.f32 %v1362, %v1368
        %v1371 = vadd.f32 %v1363, %v1369
        %s1372 = sld [smem:[#allocation8 + $0x4a]]
        %v1373 = vld [vmem:[%s690 + $0x3] sm:$0xff]
        %v1374 = vld [vmem:[%s690 + $0xb] sm:$0xff]
        %v1375 = vstv %s1372
        %v1376 = vmul.f32 %v1375, %v1373
        %v1377 = vmul.f32 %v1375, %v1374
        %v1378 = vadd.f32 %v1370, %v1376
        %v1379 = vadd.f32 %v1371, %v1377
        %s1380 = sld [smem:[#allocation8 + $0x51]]
        %v1381 = vld [vmem:[%s690 + $0x4] sm:$0xff]
        %v1382 = vld [vmem:[%s690 + $0xc] sm:$0xff]
        %v1383 = vstv %s1380
        %v1384 = vmul.f32 %v1383, %v1381
        %v1385 = vmul.f32 %v1383, %v1382
        %v1386 = vadd.f32 %v1378, %v1384
        %v1387 = vadd.f32 %v1379, %v1385
        %s1388 = sld [smem:[#allocation8 + $0x58]]
        %v1389 = vld [vmem:[%s690 + $0x5] sm:$0xff]
        %v1390 = vld [vmem:[%s690 + $0xd] sm:$0xff]
        %v1391 = vstv %s1388
        %v1392 = vmul.f32 %v1391, %v1389
        %v1393 = vmul.f32 %v1391, %v1390
        %v1394 = vadd.f32 %v1386, %v1392
        %v1395 = vadd.f32 %v1387, %v1393
        %s1396 = sld [smem:[#allocation8 + $0x5f]]
        %v1397 = vld [vmem:[%s690 + $0x6] sm:$0xff]
        %v1398 = vld [vmem:[%s690 + $0xe] sm:$0xff]
        %v1399 = vstv %s1396
        %v1400 = vmul.f32 %v1399, %v1397
        %v1401 = vmul.f32 %v1399, %v1398
        %v1402 = vadd.f32 %v1394, %v1400
        %v1403 = vadd.f32 %v1395, %v1401
        %s1404 = sld [smem:[#allocation8 + $0x36]]
        %v1405 = vld [vmem:[%s709] sm:$0xff]
        %v1406 = vld [vmem:[%s709 + $0x8] sm:$0xff]
        %v1407 = vstv %s1404
        %v1408 = vmul.f32 %v1407, %v1405
        %v1409 = vmul.f32 %v1407, %v1406
        %v1410 = vadd.f32 %v1346, %v1408
        %v1411 = vadd.f32 %v1347, %v1409
        %s1412 = sld [smem:[#allocation8 + $0x3d]]
        %v1413 = vld [vmem:[%s709 + $0x1] sm:$0xff]
        %v1414 = vld [vmem:[%s709 + $0x9] sm:$0xff]
        %v1415 = vstv %s1412
        %v1416 = vmul.f32 %v1415, %v1413
        %v1417 = vmul.f32 %v1415, %v1414
        %v1418 = vadd.f32 %v1410, %v1416
        %v1419 = vadd.f32 %v1411, %v1417
        %s1420 = sld [smem:[#allocation8 + $0x44]]
        %v1421 = vld [vmem:[%s709 + $0x2] sm:$0xff]
        %v1422 = vld [vmem:[%s709 + $0xa] sm:$0xff]
        %v1423 = vstv %s1420
        %v1424 = vmul.f32 %v1423, %v1421
        %v1425 = vmul.f32 %v1423, %v1422
        %v1426 = vadd.f32 %v1418, %v1424
        %v1427 = vadd.f32 %v1419, %v1425
        %s1428 = sld [smem:[#allocation8 + $0x4b]]
        %v1429 = vld [vmem:[%s709 + $0x3] sm:$0xff]
        %v1430 = vld [vmem:[%s709 + $0xb] sm:$0xff]
        %v1431 = vstv %s1428
        %v1432 = vmul.f32 %v1431, %v1429
        %v1433 = vmul.f32 %v1431, %v1430
        %v1434 = vadd.f32 %v1426, %v1432
        %v1435 = vadd.f32 %v1427, %v1433
        %s1436 = sld [smem:[#allocation8 + $0x52]]
        %v1437 = vld [vmem:[%s709 + $0x4] sm:$0xff]
        %v1438 = vld [vmem:[%s709 + $0xc] sm:$0xff]
        %v1439 = vstv %s1436
        %v1440 = vmul.f32 %v1439, %v1437
        %v1441 = vmul.f32 %v1439, %v1438
        %v1442 = vadd.f32 %v1434, %v1440
        %v1443 = vadd.f32 %v1435, %v1441
        %s1444 = sld [smem:[#allocation8 + $0x59]]
        %v1445 = vld [vmem:[%s709 + $0x5] sm:$0xff]
        %v1446 = vld [vmem:[%s709 + $0xd] sm:$0xff]
        %v1447 = vstv %s1444
        %v1448 = vmul.f32 %v1447, %v1445
        %v1449 = vmul.f32 %v1447, %v1446
        %v1450 = vadd.f32 %v1442, %v1448
        %v1451 = vadd.f32 %v1443, %v1449
        %s1452 = sld [smem:[#allocation8 + $0x60]]
        %v1453 = vld [vmem:[%s709 + $0x6] sm:$0xff]
        %v1454 = vld [vmem:[%s709 + $0xe] sm:$0xff]
        %v1455 = vstv %s1452
        %v1456 = vmul.f32 %v1455, %v1453
        %v1457 = vmul.f32 %v1455, %v1454
        %v1458 = vadd.f32 %v1450, %v1456
        %v1459 = vadd.f32 %v1451, %v1457
        %s1460 = sld [smem:[#allocation8 + $0x37]]
        %v1461 = vld [vmem:[%s728] sm:$0xff]
        %v1462 = vld [vmem:[%s728 + $0x8] sm:$0xff]
        %v1463 = vstv %s1460
        %v1464 = vmul.f32 %v1463, %v1461
        %v1465 = vmul.f32 %v1463, %v1462
        %v1466 = vadd.f32 %v1402, %v1464
        %v1467 = vadd.f32 %v1403, %v1465
        %s1468 = sld [smem:[#allocation8 + $0x3e]]
        %v1469 = vld [vmem:[%s728 + $0x1] sm:$0xff]
        %v1470 = vld [vmem:[%s728 + $0x9] sm:$0xff]
        %v1471 = vstv %s1468
        %v1472 = vmul.f32 %v1471, %v1469
        %v1473 = vmul.f32 %v1471, %v1470
        %v1474 = vadd.f32 %v1466, %v1472
        %v1475 = vadd.f32 %v1467, %v1473
        %s1476 = sld [smem:[#allocation8 + $0x45]]
        %v1477 = vld [vmem:[%s728 + $0x2] sm:$0xff]
        %v1478 = vld [vmem:[%s728 + $0xa] sm:$0xff]
        %v1479 = vstv %s1476
        %v1480 = vmul.f32 %v1479, %v1477
        %v1481 = vmul.f32 %v1479, %v1478
        %v1482 = vadd.f32 %v1474, %v1480
        %v1483 = vadd.f32 %v1475, %v1481
        %s1484 = sld [smem:[#allocation8 + $0x4c]]
        %v1485 = vld [vmem:[%s728 + $0x3] sm:$0xff]
        %v1486 = vld [vmem:[%s728 + $0xb] sm:$0xff]
        %v1487 = vstv %s1484
        %v1488 = vmul.f32 %v1487, %v1485
        %v1489 = vmul.f32 %v1487, %v1486
        %v1490 = vadd.f32 %v1482, %v1488
        %v1491 = vadd.f32 %v1483, %v1489
        %s1492 = sld [smem:[#allocation8 + $0x53]]
        %v1493 = vld [vmem:[%s728 + $0x4] sm:$0xff]
        %v1494 = vld [vmem:[%s728 + $0xc] sm:$0xff]
        %v1495 = vstv %s1492
        %v1496 = vmul.f32 %v1495, %v1493
        %v1497 = vmul.f32 %v1495, %v1494
        %v1498 = vadd.f32 %v1490, %v1496
        %v1499 = vadd.f32 %v1491, %v1497
        %s1500 = sld [smem:[#allocation8 + $0x5a]]
        %v1501 = vld [vmem:[%s728 + $0x5] sm:$0xff]
        %v1502 = vld [vmem:[%s728 + $0xd] sm:$0xff]
        %v1503 = vstv %s1500
        %v1504 = vmul.f32 %v1503, %v1501
        %v1505 = vmul.f32 %v1503, %v1502
        %v1506 = vadd.f32 %v1498, %v1504
        %v1507 = vadd.f32 %v1499, %v1505
        %s1508 = sld [smem:[#allocation8 + $0x61]]
        %v1509 = vld [vmem:[%s728 + $0x6] sm:$0xff]
        %v1510 = vld [vmem:[%s728 + $0xe] sm:$0xff]
        %v1511 = vstv %s1508
        %v1512 = vmul.f32 %v1511, %v1509
        %v1513 = vmul.f32 %v1511, %v1510
        %v1514 = vadd.f32 %v1506, %v1512
        %v1515 = vadd.f32 %v1507, %v1513
        %v1516 = vadd.f32 %v1122, %v1066
        %v1517 = vadd.f32 %v1123, %v1067
        %v1518 = vadd.f32 %v1514, %v1458
        %v1519 = vadd.f32 %v1515, %v1459
        %v1520 = vadd.f32 %v1516, %v1518
        %v1521 = vadd.f32 %v1517, %v1519
        %s1522 = sld [smem:[#allocation8 + $0x62]]
        %v1523 = vstv %s1522
        %v1524 = vadd.f32 %v1520, %v1523
        %v1525 = vadd.f32 %v1521, %v1523
        %1526 = vst.msk [vmem:[%s175] sm:$0xff] %vm184, %v1524
        %1527 = vst.msk [vmem:[%s175 + $0x8] sm:$0xff] %vm184, %v1525
        %s1528 = sand.u32 %s75, 1
        %s1529 = scalar_lea.sflag [#allocation6], %s1528
        %s1530 = sand.u32 %s75, 1
        %s1531 = smul.addr %s1530, 16
        %s1532 = scalar_lea.vmem [#allocation9], %s1531
        // Predicated region
        $region37: #{tpu_custom_call.1} parent=27 // pred_check
          %p1533 = pneg %p85
        $region38: #{tpu_custom_call.1} parent=27 // pred_check_branch
          %1535 = sbr.rel (%p1533) target = $region40
        $region39: #{tpu_custom_call.1} parent=27 // pred_region
          %s1537 = ssub.s32 256, 256
          %1538 = vsyncadd %s1529, %s1537
          %s1539 = smul.addr %s20, 2
          %s1540 = smul.addr %s1539, 128
          %s1541 = scalar_lea.hbm %s2, %s1540
          %s1542 = sshll.u32 %s1532, 4
          %s1543 = int_to_ptr.vmem [resolvable:$true] %s1542
          %1548 = dma.vmem_to_hbm [thread:$0]  %s1543, 256, %s1541, %s1529, 128, 128, 8
        $region40: #{tpu_custom_call.1} parent=27 // pred_fallthru
          _
      $region28: #{tpu_custom_call.1} parent=5 // pred_fallthru
        _
      %p1549 = scmp.le.s32.totalorder 2, %s15
      // Predicated region
      $region41: #{tpu_custom_call.1} parent=5 // pred_check
        %p1550 = pneg %p1549
      $region42: #{tpu_custom_call.1} parent=5 // pred_check_branch
        %1552 = sbr.rel (%p1550) target = $region44
      $region43: #{tpu_custom_call.1} parent=5 // pred_region
        %s1553 = ssub.s32 %s15, 2
        // Predicated region
        $region45: #{tpu_custom_call.1} parent=43 // pred_check
          %p1554 = pneg %p91
        $region46: #{tpu_custom_call.1} parent=43 // pred_check_branch
          %1556 = sbr.rel (%p1554) target = $region48
        $region47: #{tpu_custom_call.1} parent=43 // pred_region
          %s1557 = sand.u32 %s76, 1
          %s1558 = scalar_lea.sflag [#allocation6], %s1557
          %s1559 = sand.u32 %s76, 1
          %s1560 = smul.addr %s1559, 16
          %s1561 = scalar_lea.vmem [#allocation9], %s1560
          %1562 = dma.done %s1558, 256
        $region48: #{tpu_custom_call.1} parent=43 // pred_fallthru
          _
      $region44: #{tpu_custom_call.1} parent=5 // pred_fallthru
        _
    $region6: #{tpu_custom_call.1} parent=1 // loop_footer
      %s19 = sadd.s32 1, %s15
    $region7: #{tpu_custom_call.1} parent=1 // loop_footer_branch
      %14 = sbr.rel target = $region3
    $region8: #{tpu_custom_call.1} parent=1 // loop_exit
      _
    %1563 = vsyncpa [#allocation5], 1
    %s1564 = scalar_lea.sflag [#allocation5], 1
    %1565 = vsyncpa %s1564, 1
    %1566 = vsyncpa [#allocation6], 1
    %s1567 = scalar_lea.sflag [#allocation6], 1
    %1568 = vsyncpa %s1567, 1
    %1569 = vsyncpa [#allocation7], 1
    %s1570 = scalar_lea.sflag [#allocation7], 1
    %1571 = vsyncpa %s1570, 1

</llo_original>
